<compile_context>
chip_gen: v6e
topology: v6e:2x2x1
jax: 0.10.0
libtpu: 0.0.40
codegen_flags: <defaults>
</compile_context>

<pallas_src>
import numpy as np
import jax
import jax.numpy as jnp
from jax.experimental import pallas as pl
from jax.experimental.pallas import tpu as pltpu


# ---------------------------------------------------------------------------
# Pallas kernel: whole-chunk perturb -> fused MLP -> squared-error partial sum
# ---------------------------------------------------------------------------
def _make_diffusion_loss_kernel(b_tile, c, hw, hidden):
    def kernel(w1_ref, w2_ref, b2_ref,        # SMEM: (c, hidden), (hidden, c), (c,) f32
               x_ref, noise_ref,              # VMEM: (b_tile, c*hw) f32 chunks
               bt_ref,                        # VMEM: (1, b_tile, hidden) f32 (b1 + temb)
               coef_ref,                      # VMEM: (1, b_tile, 3) f32 [sqrt_ac, sqrt_1m_ac, valid]
               out_ref):                      # VMEM out: (8, 128) per-chunk partial sum
        x = x_ref[...]                        # (b_tile, c*hw)
        nz = noise_ref[...]                   # (b_tile, c*hw)
        coef = coef_ref[0]                    # (b_tile, 3)
        sac = coef[:, 0:1]                    # (b_tile, 1) -> lane broadcast
        som = coef[:, 1:2]
        valid = coef[:, 2:3]                  # 0.0 for padded samples
        bt = bt_ref[0]                        # (b_tile, hidden): per-sample bias rows

        # perturb_x for the whole chunk at once: per-sample scalars broadcast along lanes.
        pert = sac * x + som * nz             # (b_tile, c*hw)

        # 128-aligned per-channel lane views (hw = 256 lanes per channel).
        pert_c = [pert[:, ci * hw:(ci + 1) * hw] for ci in range(c)]
        noise_c = [nz[:, ci * hw:(ci + 1) * hw] for ci in range(c)]

        # Output-channel accumulators, initialised with the layer-2 bias.
        est = [jnp.full((b_tile, hw), b2_ref[co], jnp.float32) for co in range(c)]

        # Fused per-pixel channel MLP, fully batched over the chunk.
        # With C = 4 the MXU would use <3% of its contraction/output rows, so both layers run
        # as unrolled scalar(SMEM) x tile FMAs on the VPU; SiLU's sigmoid goes to the EUP.
        # Fusing the two layers per hidden unit avoids materializing a (b_tile, hidden, hw)
        # activation tensor in VMEM.
        for hd in range(hidden):
            h = bt[:, hd:hd + 1]              # per-sample time-embedding bias column
            for ci in range(c):
                h = h + w1_ref[ci, hd] * pert_c[ci]
            s = h * jax.nn.sigmoid(h)         # SiLU
            for co in range(c):
                est[co] = est[co] + w2_ref[hd, co] * s

        # Squared error, masked for padded samples; single reduce + store per chunk.
        sq = jnp.zeros((b_tile, hw), jnp.float32)
        for co in range(c):
            d = est[co] - noise_c[co]
            sq = sq + d * d
        sq = sq * valid

        out_ref[...] = jnp.full((8, 128), jnp.sum(sq), dtype=jnp.float32)

    return kernel


def _pick_batch_tile(n, max_b_tile=256):
    """Choose (b_tile, num_chunks).

    Keeps >= 4 chunks when the batch allows (>= 2 for small n) so the BlockSpec pipeline has
    steps to overlap and the v7x megacore can split the 'parallel' axis, caps the chunk so
    per-chunk VMEM stays small on every generation, and rounds b_tile to a sublane multiple
    (8) whenever padding/tiling is needed.
    """
    if n <= 8:
        return n, 1                                     # tiny batch: one full-extent chunk
    target_chunks = 4 if n >= 32 else 2
    b_tile = min(max_b_tile, -(-n // target_chunks))    # ceil(n / target_chunks)
    b_tile = max(8, -(-b_tile // 8) * 8)                # round up to a multiple of 8
    b_tile = min(b_tile, max_b_tile)
    num_chunks = -(-n // b_tile)
    return b_tile, num_chunks


def _pad_rows(a, n_pad):
    n = a.shape[0]
    if n == n_pad:
        return a
    return jnp.pad(a, [(0, n_pad - n)] + [(0, 0)] * (a.ndim - 1))


def _diffusion_sq_error_sum(x2, noise2, sac, som, bt, w1, w2, b2, *, max_b_tile=256):
    """Sum over all (real, unpadded) elements of (estimated_noise - noise)^2."""
    n, chw = x2.shape
    c, hidden = w1.shape
    hw = chw // c

    b_tile, num_chunks = _pick_batch_tile(n, max_b_tile)
    n_pad = b_tile * num_chunks

    # Per-sample coefficients packed into one small per-chunk VMEM tile (samples on sublanes).
    valid = jnp.ones((n,), jnp.float32)
    coef = jnp.stack([sac, som, valid], axis=-1)                     # (n, 3)

    x2 = _pad_rows(x2, n_pad)
    noise2 = _pad_rows(noise2, n_pad)
    bt_chunks = _pad_rows(bt, n_pad).reshape(num_chunks, b_tile, hidden)
    coef_chunks = _pad_rows(coef, n_pad).reshape(num_chunks, b_tile, 3)

    grid_spec = pltpu.PrefetchScalarGridSpec(
        num_scalar_prefetch=0,
        grid=(num_chunks,),
        in_specs=[
            pl.BlockSpec(memory_space=pltpu.MemorySpace.SMEM),        # w1 (c, hidden)
            pl.BlockSpec(memory_space=pltpu.MemorySpace.SMEM),        # w2 (hidden, c)
            pl.BlockSpec(memory_space=pltpu.MemorySpace.SMEM),        # b2 (c,)
            pl.BlockSpec((b_tile, chw), lambda i: (i, 0)),            # x chunk
            pl.BlockSpec((b_tile, chw), lambda i: (i, 0)),            # noise chunk
            pl.BlockSpec((1, b_tile, hidden), lambda i: (i, 0, 0)),   # b1 + temb chunk
            pl.BlockSpec((1, b_tile, 3), lambda i: (i, 0, 0)),        # [sac, som, valid] chunk
        ],
        out_specs=pl.BlockSpec((8, 128), lambda i: (i, 0)),           # per-chunk partial
    )

    out = pl.pallas_call(
        _make_diffusion_loss_kernel(b_tile, c, hw, hidden),
        out_shape=jax.ShapeDtypeStruct((num_chunks * 8, 128), jnp.float32),
        grid_spec=grid_spec,
        compiler_params=pltpu.CompilerParams(
            dimension_semantics=("parallel",),        # chunks independent -> v7x megacore split
            vmem_limit_bytes=32 * 1024 * 1024),       # explicit: v5e default scoped VMEM is 16 MiB
    )(w1, w2, b2, x2, noise2, bt_chunks, coef_chunks)

    # each chunk broadcast its scalar partial sum over its (8,128) block; read one lane each
    partials = out.reshape(num_chunks, 8, 128)[:, 0, 0]
    return jnp.sum(partials)


# ---------------------------------------------------------------------------
# GaussianDiffusion wrapper (JAX glue: buffers, random t/noise, gather, layout)
# ---------------------------------------------------------------------------
class GaussianDiffusionPallas:
    def __init__(self, img_channels=4, img_size=(16, 16), timesteps=1000, hidden=32):
        self.img_channels = img_channels
        self.img_size = img_size
        self.timesteps = timesteps
        self.hidden = hidden

        # Diffusion schedule buffers (same as the PyTorch module's __init__)
        betas = np.linspace(0.0001, 0.02, timesteps)
        alphas = 1.0 - betas
        alphas_cumprod = np.cumprod(alphas)
        self.sqrt_alphas_cumprod = jnp.asarray(np.sqrt(alphas_cumprod), jnp.float32)
        self.sqrt_one_minus_alphas_cumprod = jnp.asarray(
            np.sqrt(1.0 - alphas_cumprod), jnp.float32)

        # Deterministic synthetic noise-estimator parameters (f32, used as SMEM scalars).
        k = jax.random.PRNGKey(42)
        k1, k2, k3, k4 = jax.random.split(k, 4)
        C, H = img_channels, hidden
        self.w1 = 0.1 * jax.random.normal(k1, (C, H), jnp.float32)    # (C, hidden)
        self.b1 = 0.01 * jax.random.normal(k2, (1, H), jnp.float32)   # (1, hidden)
        self.w2 = 0.1 * jax.random.normal(k3, (H, C), jnp.float32)    # (hidden, C)
        self.b2 = 0.01 * jax.random.normal(k4, (C,), jnp.float32)     # (C,)

    def _time_embedding(self, t):
        half = self.hidden // 2
        freqs = jnp.exp(-jnp.log(10000.0) * jnp.arange(half, dtype=jnp.float32) / half)
        args = t.astype(jnp.float32)[:, None] * freqs[None, :]
        return jnp.concatenate([jnp.sin(args), jnp.cos(args)], axis=-1)  # (N, hidden)

    def forward(self, x_nchw, key):
        N, C, H, W = x_nchw.shape
        if H != self.img_size[0]:
            raise ValueError("image height does not match diffusion parameters")
        if W != self.img_size[1]:
            raise ValueError("image width does not match diffusion parameters")

        k_t, k_n = jax.random.split(key)
        t = jax.random.randint(k_t, (N,), 0, self.timesteps)            # torch.randint analog

        chw = C * H * W
        # lane-dense layout: NCHW -> (N, C*H*W) is a pure reshape (no extra HBM pass)
        x2 = x_nchw.reshape(N, chw).astype(jnp.float32)
        # TODO(synk): noise could be generated in-kernel with pltpu.prng_* to halve HBM traffic,
        # but that changes the RNG stream vs. torch.randn_like, so it stays host-side.
        noise2 = jax.random.normal(k_n, (N, chw), jnp.float32)           # randn_like

        # extract(...) gathers of schedule coefficients + time embedding (tiny JAX glue)
        sac = self.sqrt_alphas_cumprod[t]                                # (N,)
        som = self.sqrt_one_minus_alphas_cumprod[t]                      # (N,)
        bt = self._time_embedding(t) + self.b1                           # (N, hidden)

        sq_sum = _diffusion_sq_error_sum(x2, noise2, sac, som, bt,
                                         self.w1, self.w2, self.b2)
        loss2 = sq_sum / jnp.float32(N * C * H * W)                      # F.mse_loss (mean)

        # LossType(): L1=False, L2=True, SSIM=False
        loss1 = None
        lossSSIM = None  # TODO(synk): SSIM has no clean single-kernel Pallas equivalent and is disabled in LossType
        return (loss1, loss2, lossSSIM)


if __name__ == "__main__":
    key = jax.random.PRNGKey(0)
    k_x, k_fwd = jax.random.split(key)

    N, C, H, W = 2, 4, 16, 16
    x = jax.random.normal(k_x, (N, C, H, W), jnp.float32)                # NCHW like PyTorch

    diffusion = GaussianDiffusionPallas(img_channels=C, img_size=(H, W),
                                        timesteps=1000, hidden=32)
    loss1, loss2, lossSSIM = diffusion.forward(x, k_fwd)
    loss2 = jax.block_until_ready(loss2)
    assert loss1 is None and lossSSIM is None
    assert jnp.isfinite(loss2)
    print("KERNEL_OK")
</pallas_src>

<mosaic_0001>
module attributes {stable_mosaic.version = 11 : i64} {
  func.func @kernel(%arg0: i32, %arg1: memref<4x32xf32, #tpu.memory_space<smem>>, %arg2: memref<32x4xf32, #tpu.memory_space<smem>>, %arg3: memref<4xf32, #tpu.memory_space<smem>>, %arg4: memref<2x1024xf32, #tpu.memory_space<vmem>>, %arg5: memref<2x1024xf32, #tpu.memory_space<vmem>>, %arg6: memref<1x2x32xf32, #tpu.memory_space<vmem>>, %arg7: memref<1x2x3xf32, #tpu.memory_space<vmem>>, %arg8: memref<8x128xf32, #tpu.memory_space<vmem>>) attributes {dimension_semantics = [#tpu.dimension_semantics<parallel>], iteration_bounds = array<i64: 1>, scalar_prefetch = 0 : i64, scratch_operands = 0 : i64, tpu.core_type = #tpu.core_type<tc>, window_params = [{transform_indices = @transform_0, window_bounds = array<i64: 4, 32>}, {transform_indices = @transform_1, window_bounds = array<i64: 32, 4>}, {transform_indices = @transform_2, window_bounds = array<i64: 4>}, {transform_indices = @transform_3, window_bounds = array<i64: 2, 1024>}, {transform_indices = @transform_4, window_bounds = array<i64: 2, 1024>}, {transform_indices = @transform_5, window_bounds = array<i64: 1, 2, 32>}, {transform_indices = @transform_6, window_bounds = array<i64: 1, 2, 3>}, {transform_indices = @transform_7, window_bounds = array<i64: 8, 128>}]} {
    %c0 = arith.constant 0 : index
    %c0_0 = arith.constant 0 : index
    %0 = vector.load %arg4[%c0, %c0_0] : memref<2x1024xf32, #tpu.memory_space<vmem>>, vector<2x1024xf32>
    %c0_1 = arith.constant 0 : index
    %c0_2 = arith.constant 0 : index
    %1 = vector.load %arg5[%c0_1, %c0_2] : memref<2x1024xf32, #tpu.memory_space<vmem>>, vector<2x1024xf32>
    %c0_3 = arith.constant 0 : index
    %c0_4 = arith.constant 0 : index
    %c0_5 = arith.constant 0 : index
    %2 = vector.load %arg7[%c0_3, %c0_4, %c0_5] : memref<1x2x3xf32, #tpu.memory_space<vmem>>, vector<1x2x3xf32>
    %3 = vector.shape_cast %2 : vector<1x2x3xf32> to vector<2x3xf32>
    %4 = vector.extract_strided_slice %3 {offsets = [0, 0], sizes = [2, 1], strides = [1, 1]} : vector<2x3xf32> to vector<2x1xf32>
    %5 = vector.extract_strided_slice %3 {offsets = [0, 1], sizes = [2, 1], strides = [1, 1]} : vector<2x3xf32> to vector<2x1xf32>
    %6 = vector.extract_strided_slice %3 {offsets = [0, 2], sizes = [2, 1], strides = [1, 1]} : vector<2x3xf32> to vector<2x1xf32>
    %c0_6 = arith.constant 0 : index
    %c0_7 = arith.constant 0 : index
    %c0_8 = arith.constant 0 : index
    %7 = vector.load %arg6[%c0_6, %c0_7, %c0_8] : memref<1x2x32xf32, #tpu.memory_space<vmem>>, vector<1x2x32xf32>
    %8 = vector.shape_cast %7 : vector<1x2x32xf32> to vector<2x32xf32>
    %9 = vector.broadcast %4 : vector<2x1xf32> to vector<2x1024xf32>
    %10 = arith.mulf %9, %0 : vector<2x1024xf32>
    %11 = vector.broadcast %5 : vector<2x1xf32> to vector<2x1024xf32>
    %12 = arith.mulf %11, %1 : vector<2x1024xf32>
    %13 = arith.addf %10, %12 : vector<2x1024xf32>
    %14 = vector.extract_strided_slice %13 {offsets = [0, 0], sizes = [2, 256], strides = [1, 1]} : vector<2x1024xf32> to vector<2x256xf32>
    %15 = vector.extract_strided_slice %13 {offsets = [0, 256], sizes = [2, 256], strides = [1, 1]} : vector<2x1024xf32> to vector<2x256xf32>
    %16 = vector.extract_strided_slice %13 {offsets = [0, 512], sizes = [2, 256], strides = [1, 1]} : vector<2x1024xf32> to vector<2x256xf32>
    %17 = vector.extract_strided_slice %13 {offsets = [0, 768], sizes = [2, 256], strides = [1, 1]} : vector<2x1024xf32> to vector<2x256xf32>
    %18 = vector.extract_strided_slice %1 {offsets = [0, 0], sizes = [2, 256], strides = [1, 1]} : vector<2x1024xf32> to vector<2x256xf32>
    %19 = vector.extract_strided_slice %1 {offsets = [0, 256], sizes = [2, 256], strides = [1, 1]} : vector<2x1024xf32> to vector<2x256xf32>
    %20 = vector.extract_strided_slice %1 {offsets = [0, 512], sizes = [2, 256], strides = [1, 1]} : vector<2x1024xf32> to vector<2x256xf32>
    %21 = vector.extract_strided_slice %1 {offsets = [0, 768], sizes = [2, 256], strides = [1, 1]} : vector<2x1024xf32> to vector<2x256xf32>
    %c0_9 = arith.constant 0 : index
    %22 = memref.load %arg3[%c0_9] : memref<4xf32, #tpu.memory_space<smem>>
    %23 = vector.broadcast %22 : f32 to vector<2x256xf32>
    %c1 = arith.constant 1 : index
    %24 = memref.load %arg3[%c1] : memref<4xf32, #tpu.memory_space<smem>>
    %25 = vector.broadcast %24 : f32 to vector<2x256xf32>
    %c2 = arith.constant 2 : index
    %26 = memref.load %arg3[%c2] : memref<4xf32, #tpu.memory_space<smem>>
    %27 = vector.broadcast %26 : f32 to vector<2x256xf32>
    %c3 = arith.constant 3 : index
    %28 = memref.load %arg3[%c3] : memref<4xf32, #tpu.memory_space<smem>>
    %29 = vector.broadcast %28 : f32 to vector<2x256xf32>
    %30 = vector.extract_strided_slice %8 {offsets = [0, 0], sizes = [2, 1], strides = [1, 1]} : vector<2x32xf32> to vector<2x1xf32>
    %c0_10 = arith.constant 0 : index
    %c0_11 = arith.constant 0 : index
    %31 = memref.load %arg1[%c0_10, %c0_11] : memref<4x32xf32, #tpu.memory_space<smem>>
    %32 = vector.broadcast %31 : f32 to vector<2x256xf32>
    %33 = arith.mulf %32, %14 : vector<2x256xf32>
    %34 = vector.broadcast %30 : vector<2x1xf32> to vector<2x256xf32>
    %35 = arith.addf %34, %33 : vector<2x256xf32>
    %c1_12 = arith.constant 1 : index
    %c0_13 = arith.constant 0 : index
    %36 = memref.load %arg1[%c1_12, %c0_13] : memref<4x32xf32, #tpu.memory_space<smem>>
    %37 = vector.broadcast %36 : f32 to vector<2x256xf32>
    %38 = arith.mulf %37, %15 : vector<2x256xf32>
    %39 = arith.addf %35, %38 : vector<2x256xf32>
    %c2_14 = arith.constant 2 : index
    %c0_15 = arith.constant 0 : index
    %40 = memref.load %arg1[%c2_14, %c0_15] : memref<4x32xf32, #tpu.memory_space<smem>>
    %41 = vector.broadcast %40 : f32 to vector<2x256xf32>
    %42 = arith.mulf %41, %16 : vector<2x256xf32>
    %43 = arith.addf %39, %42 : vector<2x256xf32>
    %c3_16 = arith.constant 3 : index
    %c0_17 = arith.constant 0 : index
    %44 = memref.load %arg1[%c3_16, %c0_17] : memref<4x32xf32, #tpu.memory_space<smem>>
    %45 = vector.broadcast %44 : f32 to vector<2x256xf32>
    %46 = arith.mulf %45, %17 : vector<2x256xf32>
    %47 = arith.addf %43, %46 : vector<2x256xf32>
    %48 = arith.negf %47 : vector<2x256xf32>
    %49 = math.exp %48 : vector<2x256xf32>
    %cst = arith.constant 1.000000e+00 : f32
    %50 = vector.broadcast %cst : f32 to vector<2x256xf32>
    %51 = arith.addf %50, %49 : vector<2x256xf32>
    %52 = arith.divf %50, %51 : vector<2x256xf32>
    %53 = arith.mulf %47, %52 : vector<2x256xf32>
    %c0_18 = arith.constant 0 : index
    %c0_19 = arith.constant 0 : index
    %54 = memref.load %arg2[%c0_18, %c0_19] : memref<32x4xf32, #tpu.memory_space<smem>>
    %55 = vector.broadcast %54 : f32 to vector<2x256xf32>
    %56 = arith.mulf %55, %53 : vector<2x256xf32>
    %57 = arith.addf %23, %56 : vector<2x256xf32>
    %c0_20 = arith.constant 0 : index
    %c1_21 = arith.constant 1 : index
    %58 = memref.load %arg2[%c0_20, %c1_21] : memref<32x4xf32, #tpu.memory_space<smem>>
    %59 = vector.broadcast %58 : f32 to vector<2x256xf32>
    %60 = arith.mulf %59, %53 : vector<2x256xf32>
    %61 = arith.addf %25, %60 : vector<2x256xf32>
    %c0_22 = arith.constant 0 : index
    %c2_23 = arith.constant 2 : index
    %62 = memref.load %arg2[%c0_22, %c2_23] : memref<32x4xf32, #tpu.memory_space<smem>>
    %63 = vector.broadcast %62 : f32 to vector<2x256xf32>
    %64 = arith.mulf %63, %53 : vector<2x256xf32>
    %65 = arith.addf %27, %64 : vector<2x256xf32>
    %c0_24 = arith.constant 0 : index
    %c3_25 = arith.constant 3 : index
    %66 = memref.load %arg2[%c0_24, %c3_25] : memref<32x4xf32, #tpu.memory_space<smem>>
    %67 = vector.broadcast %66 : f32 to vector<2x256xf32>
    %68 = arith.mulf %67, %53 : vector<2x256xf32>
    %69 = arith.addf %29, %68 : vector<2x256xf32>
    %70 = vector.extract_strided_slice %8 {offsets = [0, 1], sizes = [2, 1], strides = [1, 1]} : vector<2x32xf32> to vector<2x1xf32>
    %c0_26 = arith.constant 0 : index
    %c1_27 = arith.constant 1 : index
    %71 = memref.load %arg1[%c0_26, %c1_27] : memref<4x32xf32, #tpu.memory_space<smem>>
    %72 = vector.broadcast %71 : f32 to vector<2x256xf32>
    %73 = arith.mulf %72, %14 : vector<2x256xf32>
    %74 = vector.broadcast %70 : vector<2x1xf32> to vector<2x256xf32>
    %75 = arith.addf %74, %73 : vector<2x256xf32>
    %c1_28 = arith.constant 1 : index
    %c1_29 = arith.constant 1 : index
    %76 = memref.load %arg1[%c1_28, %c1_29] : memref<4x32xf32, #tpu.memory_space<smem>>
    %77 = vector.broadcast %76 : f32 to vector<2x256xf32>
    %78 = arith.mulf %77, %15 : vector<2x256xf32>
    %79 = arith.addf %75, %78 : vector<2x256xf32>
    %c2_30 = arith.constant 2 : index
    %c1_31 = arith.constant 1 : index
    %80 = memref.load %arg1[%c2_30, %c1_31] : memref<4x32xf32, #tpu.memory_space<smem>>
    %81 = vector.broadcast %80 : f32 to vector<2x256xf32>
    %82 = arith.mulf %81, %16 : vector<2x256xf32>
    %83 = arith.addf %79, %82 : vector<2x256xf32>
    %c3_32 = arith.constant 3 : index
    %c1_33 = arith.constant 1 : index
    %84 = memref.load %arg1[%c3_32, %c1_33] : memref<4x32xf32, #tpu.memory_space<smem>>
    %85 = vector.broadcast %84 : f32 to vector<2x256xf32>
    %86 = arith.mulf %85, %17 : vector<2x256xf32>
    %87 = arith.addf %83, %86 : vector<2x256xf32>
    %88 = arith.negf %87 : vector<2x256xf32>
    %89 = math.exp %88 : vector<2x256xf32>
    %cst_34 = arith.constant 1.000000e+00 : f32
    %90 = vector.broadcast %cst_34 : f32 to vector<2x256xf32>
    %91 = arith.addf %90, %89 : vector<2x256xf32>
    %92 = arith.divf %90, %91 : vector<2x256xf32>
    %93 = arith.mulf %87, %92 : vector<2x256xf32>
    %c1_35 = arith.constant 1 : index
    %c0_36 = arith.constant 0 : index
    %94 = memref.load %arg2[%c1_35, %c0_36] : memref<32x4xf32, #tpu.memory_space<smem>>
    %95 = vector.broadcast %94 : f32 to vector<2x256xf32>
    %96 = arith.mulf %95, %93 : vector<2x256xf32>
    %97 = arith.addf %57, %96 : vector<2x256xf32>
    %c1_37 = arith.constant 1 : index
    %c1_38 = arith.constant 1 : index
    %98 = memref.load %arg2[%c1_37, %c1_38] : memref<32x4xf32, #tpu.memory_space<smem>>
    %99 = vector.broadcast %98 : f32 to vector<2x256xf32>
    %100 = arith.mulf %99, %93 : vector<2x256xf32>
    %101 = arith.addf %61, %100 : vector<2x256xf32>
    %c1_39 = arith.constant 1 : index
    %c2_40 = arith.constant 2 : index
    %102 = memref.load %arg2[%c1_39, %c2_40] : memref<32x4xf32, #tpu.memory_space<smem>>
    %103 = vector.broadcast %102 : f32 to vector<2x256xf32>
    %104 = arith.mulf %103, %93 : vector<2x256xf32>
    %105 = arith.addf %65, %104 : vector<2x256xf32>
    %c1_41 = arith.constant 1 : index
    %c3_42 = arith.constant 3 : index
    %106 = memref.load %arg2[%c1_41, %c3_42] : memref<32x4xf32, #tpu.memory_space<smem>>
    %107 = vector.broadcast %106 : f32 to vector<2x256xf32>
    %108 = arith.mulf %107, %93 : vector<2x256xf32>
    %109 = arith.addf %69, %108 : vector<2x256xf32>
    %110 = vector.extract_strided_slice %8 {offsets = [0, 2], sizes = [2, 1], strides = [1, 1]} : vector<2x32xf32> to vector<2x1xf32>
    %c0_43 = arith.constant 0 : index
    %c2_44 = arith.constant 2 : index
    %111 = memref.load %arg1[%c0_43, %c2_44] : memref<4x32xf32, #tpu.memory_space<smem>>
    %112 = vector.broadcast %111 : f32 to vector<2x256xf32>
    %113 = arith.mulf %112, %14 : vector<2x256xf32>
    %114 = vector.broadcast %110 : vector<2x1xf32> to vector<2x256xf32>
    %115 = arith.addf %114, %113 : vector<2x256xf32>
    %c1_45 = arith.constant 1 : index
    %c2_46 = arith.constant 2 : index
    %116 = memref.load %arg1[%c1_45, %c2_46] : memref<4x32xf32, #tpu.memory_space<smem>>
    %117 = vector.broadcast %116 : f32 to vector<2x256xf32>
    %118 = arith.mulf %117, %15 : vector<2x256xf32>
    %119 = arith.addf %115, %118 : vector<2x256xf32>
    %c2_47 = arith.constant 2 : index
    %c2_48 = arith.constant 2 : index
    %120 = memref.load %arg1[%c2_47, %c2_48] : memref<4x32xf32, #tpu.memory_space<smem>>
    %121 = vector.broadcast %120 : f32 to vector<2x256xf32>
    %122 = arith.mulf %121, %16 : vector<2x256xf32>
    %123 = arith.addf %119, %122 : vector<2x256xf32>
    %c3_49 = arith.constant 3 : index
    %c2_50 = arith.constant 2 : index
    %124 = memref.load %arg1[%c3_49, %c2_50] : memref<4x32xf32, #tpu.memory_space<smem>>
    %125 = vector.broadcast %124 : f32 to vector<2x256xf32>
    %126 = arith.mulf %125, %17 : vector<2x256xf32>
    %127 = arith.addf %123, %126 : vector<2x256xf32>
    %128 = arith.negf %127 : vector<2x256xf32>
    %129 = math.exp %128 : vector<2x256xf32>
    %cst_51 = arith.constant 1.000000e+00 : f32
    %130 = vector.broadcast %cst_51 : f32 to vector<2x256xf32>
    %131 = arith.addf %130, %129 : vector<2x256xf32>
    %132 = arith.divf %130, %131 : vector<2x256xf32>
    %133 = arith.mulf %127, %132 : vector<2x256xf32>
    %c2_52 = arith.constant 2 : index
    %c0_53 = arith.constant 0 : index
    %134 = memref.load %arg2[%c2_52, %c0_53] : memref<32x4xf32, #tpu.memory_space<smem>>
    %135 = vector.broadcast %134 : f32 to vector<2x256xf32>
    %136 = arith.mulf %135, %133 : vector<2x256xf32>
    %137 = arith.addf %97, %136 : vector<2x256xf32>
    %c2_54 = arith.constant 2 : index
    %c1_55 = arith.constant 1 : index
    %138 = memref.load %arg2[%c2_54, %c1_55] : memref<32x4xf32, #tpu.memory_space<smem>>
    %139 = vector.broadcast %138 : f32 to vector<2x256xf32>
    %140 = arith.mulf %139, %133 : vector<2x256xf32>
    %141 = arith.addf %101, %140 : vector<2x256xf32>
    %c2_56 = arith.constant 2 : index
    %c2_57 = arith.constant 2 : index
    %142 = memref.load %arg2[%c2_56, %c2_57] : memref<32x4xf32, #tpu.memory_space<smem>>
    %143 = vector.broadcast %142 : f32 to vector<2x256xf32>
    %144 = arith.mulf %143, %133 : vector<2x256xf32>
    %145 = arith.addf %105, %144 : vector<2x256xf32>
    %c2_58 = arith.constant 2 : index
    %c3_59 = arith.constant 3 : index
    %146 = memref.load %arg2[%c2_58, %c3_59] : memref<32x4xf32, #tpu.memory_space<smem>>
    %147 = vector.broadcast %146 : f32 to vector<2x256xf32>
    %148 = arith.mulf %147, %133 : vector<2x256xf32>
    %149 = arith.addf %109, %148 : vector<2x256xf32>
    %150 = vector.extract_strided_slice %8 {offsets = [0, 3], sizes = [2, 1], strides = [1, 1]} : vector<2x32xf32> to vector<2x1xf32>
    %c0_60 = arith.constant 0 : index
    %c3_61 = arith.constant 3 : index
    %151 = memref.load %arg1[%c0_60, %c3_61] : memref<4x32xf32, #tpu.memory_space<smem>>
    %152 = vector.broadcast %151 : f32 to vector<2x256xf32>
    %153 = arith.mulf %152, %14 : vector<2x256xf32>
    %154 = vector.broadcast %150 : vector<2x1xf32> to vector<2x256xf32>
    %155 = arith.addf %154, %153 : vector<2x256xf32>
    %c1_62 = arith.constant 1 : index
    %c3_63 = arith.constant 3 : index
    %156 = memref.load %arg1[%c1_62, %c3_63] : memref<4x32xf32, #tpu.memory_space<smem>>
    %157 = vector.broadcast %156 : f32 to vector<2x256xf32>
    %158 = arith.mulf %157, %15 : vector<2x256xf32>
    %159 = arith.addf %155, %158 : vector<2x256xf32>
    %c2_64 = arith.constant 2 : index
    %c3_65 = arith.constant 3 : index
    %160 = memref.load %arg1[%c2_64, %c3_65] : memref<4x32xf32, #tpu.memory_space<smem>>
    %161 = vector.broadcast %160 : f32 to vector<2x256xf32>
    %162 = arith.mulf %161, %16 : vector<2x256xf32>
    %163 = arith.addf %159, %162 : vector<2x256xf32>
    %c3_66 = arith.constant 3 : index
    %c3_67 = arith.constant 3 : index
    %164 = memref.load %arg1[%c3_66, %c3_67] : memref<4x32xf32, #tpu.memory_space<smem>>
    %165 = vector.broadcast %164 : f32 to vector<2x256xf32>
    %166 = arith.mulf %165, %17 : vector<2x256xf32>
    %167 = arith.addf %163, %166 : vector<2x256xf32>
    %168 = arith.negf %167 : vector<2x256xf32>
    %169 = math.exp %168 : vector<2x256xf32>
    %cst_68 = arith.constant 1.000000e+00 : f32
    %170 = vector.broadcast %cst_68 : f32 to vector<2x256xf32>
    %171 = arith.addf %170, %169 : vector<2x256xf32>
    %172 = arith.divf %170, %171 : vector<2x256xf32>
    %173 = arith.mulf %167, %172 : vector<2x256xf32>
    %c3_69 = arith.constant 3 : index
    %c0_70 = arith.constant 0 : index
    %174 = memref.load %arg2[%c3_69, %c0_70] : memref<32x4xf32, #tpu.memory_space<smem>>
    %175 = vector.broadcast %174 : f32 to vector<2x256xf32>
    %176 = arith.mulf %175, %173 : vector<2x256xf32>
    %177 = arith.addf %137, %176 : vector<2x256xf32>
    %c3_71 = arith.constant 3 : index
    %c1_72 = arith.constant 1 : index
    %178 = memref.load %arg2[%c3_71, %c1_72] : memref<32x4xf32, #tpu.memory_space<smem>>
    %179 = vector.broadcast %178 : f32 to vector<2x256xf32>
    %180 = arith.mulf %179, %173 : vector<2x256xf32>
    %181 = arith.addf %141, %180 : vector<2x256xf32>
    %c3_73 = arith.constant 3 : index
    %c2_74 = arith.constant 2 : index
    %182 = memref.load %arg2[%c3_73, %c2_74] : memref<32x4xf32, #tpu.memory_space<smem>>
    %183 = vector.broadcast %182 : f32 to vector<2x256xf32>
    %184 = arith.mulf %183, %173 : vector<2x256xf32>
    %185 = arith.addf %145, %184 : vector<2x256xf32>
    %c3_75 = arith.constant 3 : index
    %c3_76 = arith.constant 3 : index
    %186 = memref.load %arg2[%c3_75, %c3_76] : memref<32x4xf32, #tpu.memory_space<smem>>
    %187 = vector.broadcast %186 : f32 to vector<2x256xf32>
    %188 = arith.mulf %187, %173 : vector<2x256xf32>
    %189 = arith.addf %149, %188 : vector<2x256xf32>
    %190 = vector.extract_strided_slice %8 {offsets = [0, 4], sizes = [2, 1], strides = [1, 1]} : vector<2x32xf32> to vector<2x1xf32>
    %c0_77 = arith.constant 0 : index
    %c4 = arith.constant 4 : index
    %191 = memref.load %arg1[%c0_77, %c4] : memref<4x32xf32, #tpu.memory_space<smem>>
    %192 = vector.broadcast %191 : f32 to vector<2x256xf32>
    %193 = arith.mulf %192, %14 : vector<2x256xf32>
    %194 = vector.broadcast %190 : vector<2x1xf32> to vector<2x256xf32>
    %195 = arith.addf %194, %193 : vector<2x256xf32>
    %c1_78 = arith.constant 1 : index
    %c4_79 = arith.constant 4 : index
    %196 = memref.load %arg1[%c1_78, %c4_79] : memref<4x32xf32, #tpu.memory_space<smem>>
    %197 = vector.broadcast %196 : f32 to vector<2x256xf32>
    %198 = arith.mulf %197, %15 : vector<2x256xf32>
    %199 = arith.addf %195, %198 : vector<2x256xf32>
    %c2_80 = arith.constant 2 : index
    %c4_81 = arith.constant 4 : index
    %200 = memref.load %arg1[%c2_80, %c4_81] : memref<4x32xf32, #tpu.memory_space<smem>>
    %201 = vector.broadcast %200 : f32 to vector<2x256xf32>
    %202 = arith.mulf %201, %16 : vector<2x256xf32>
    %203 = arith.addf %199, %202 : vector<2x256xf32>
    %c3_82 = arith.constant 3 : index
    %c4_83 = arith.constant 4 : index
    %204 = memref.load %arg1[%c3_82, %c4_83] : memref<4x32xf32, #tpu.memory_space<smem>>
    %205 = vector.broadcast %204 : f32 to vector<2x256xf32>
    %206 = arith.mulf %205, %17 : vector<2x256xf32>
    %207 = arith.addf %203, %206 : vector<2x256xf32>
    %208 = arith.negf %207 : vector<2x256xf32>
    %209 = math.exp %208 : vector<2x256xf32>
    %cst_84 = arith.constant 1.000000e+00 : f32
    %210 = vector.broadcast %cst_84 : f32 to vector<2x256xf32>
    %211 = arith.addf %210, %209 : vector<2x256xf32>
    %212 = arith.divf %210, %211 : vector<2x256xf32>
    %213 = arith.mulf %207, %212 : vector<2x256xf32>
    %c4_85 = arith.constant 4 : index
    %c0_86 = arith.constant 0 : index
    %214 = memref.load %arg2[%c4_85, %c0_86] : memref<32x4xf32, #tpu.memory_space<smem>>
    %215 = vector.broadcast %214 : f32 to vector<2x256xf32>
    %216 = arith.mulf %215, %213 : vector<2x256xf32>
    %217 = arith.addf %177, %216 : vector<2x256xf32>
    %c4_87 = arith.constant 4 : index
    %c1_88 = arith.constant 1 : index
    %218 = memref.load %arg2[%c4_87, %c1_88] : memref<32x4xf32, #tpu.memory_space<smem>>
    %219 = vector.broadcast %218 : f32 to vector<2x256xf32>
    %220 = arith.mulf %219, %213 : vector<2x256xf32>
    %221 = arith.addf %181, %220 : vector<2x256xf32>
    %c4_89 = arith.constant 4 : index
    %c2_90 = arith.constant 2 : index
    %222 = memref.load %arg2[%c4_89, %c2_90] : memref<32x4xf32, #tpu.memory_space<smem>>
    %223 = vector.broadcast %222 : f32 to vector<2x256xf32>
    %224 = arith.mulf %223, %213 : vector<2x256xf32>
    %225 = arith.addf %185, %224 : vector<2x256xf32>
    %c4_91 = arith.constant 4 : index
    %c3_92 = arith.constant 3 : index
    %226 = memref.load %arg2[%c4_91, %c3_92] : memref<32x4xf32, #tpu.memory_space<smem>>
    %227 = vector.broadcast %226 : f32 to vector<2x256xf32>
    %228 = arith.mulf %227, %213 : vector<2x256xf32>
    %229 = arith.addf %189, %228 : vector<2x256xf32>
    %230 = vector.extract_strided_slice %8 {offsets = [0, 5], sizes = [2, 1], strides = [1, 1]} : vector<2x32xf32> to vector<2x1xf32>
    %c0_93 = arith.constant 0 : index
    %c5 = arith.constant 5 : index
    %231 = memref.load %arg1[%c0_93, %c5] : memref<4x32xf32, #tpu.memory_space<smem>>
    %232 = vector.broadcast %231 : f32 to vector<2x256xf32>
    %233 = arith.mulf %232, %14 : vector<2x256xf32>
    %234 = vector.broadcast %230 : vector<2x1xf32> to vector<2x256xf32>
    %235 = arith.addf %234, %233 : vector<2x256xf32>
    %c1_94 = arith.constant 1 : index
    %c5_95 = arith.constant 5 : index
    %236 = memref.load %arg1[%c1_94, %c5_95] : memref<4x32xf32, #tpu.memory_space<smem>>
    %237 = vector.broadcast %236 : f32 to vector<2x256xf32>
    %238 = arith.mulf %237, %15 : vector<2x256xf32>
    %239 = arith.addf %235, %238 : vector<2x256xf32>
    %c2_96 = arith.constant 2 : index
    %c5_97 = arith.constant 5 : index
    %240 = memref.load %arg1[%c2_96, %c5_97] : memref<4x32xf32, #tpu.memory_space<smem>>
    %241 = vector.broadcast %240 : f32 to vector<2x256xf32>
    %242 = arith.mulf %241, %16 : vector<2x256xf32>
    %243 = arith.addf %239, %242 : vector<2x256xf32>
    %c3_98 = arith.constant 3 : index
    %c5_99 = arith.constant 5 : index
    %244 = memref.load %arg1[%c3_98, %c5_99] : memref<4x32xf32, #tpu.memory_space<smem>>
    %245 = vector.broadcast %244 : f32 to vector<2x256xf32>
    %246 = arith.mulf %245, %17 : vector<2x256xf32>
    %247 = arith.addf %243, %246 : vector<2x256xf32>
    %248 = arith.negf %247 : vector<2x256xf32>
    %249 = math.exp %248 : vector<2x256xf32>
    %cst_100 = arith.constant 1.000000e+00 : f32
    %250 = vector.broadcast %cst_100 : f32 to vector<2x256xf32>
    %251 = arith.addf %250, %249 : vector<2x256xf32>
    %252 = arith.divf %250, %251 : vector<2x256xf32>
    %253 = arith.mulf %247, %252 : vector<2x256xf32>
    %c5_101 = arith.constant 5 : index
    %c0_102 = arith.constant 0 : index
    %254 = memref.load %arg2[%c5_101, %c0_102] : memref<32x4xf32, #tpu.memory_space<smem>>
    %255 = vector.broadcast %254 : f32 to vector<2x256xf32>
    %256 = arith.mulf %255, %253 : vector<2x256xf32>
    %257 = arith.addf %217, %256 : vector<2x256xf32>
    %c5_103 = arith.constant 5 : index
    %c1_104 = arith.constant 1 : index
    %258 = memref.load %arg2[%c5_103, %c1_104] : memref<32x4xf32, #tpu.memory_space<smem>>
    %259 = vector.broadcast %258 : f32 to vector<2x256xf32>
    %260 = arith.mulf %259, %253 : vector<2x256xf32>
    %261 = arith.addf %221, %260 : vector<2x256xf32>
    %c5_105 = arith.constant 5 : index
    %c2_106 = arith.constant 2 : index
    %262 = memref.load %arg2[%c5_105, %c2_106] : memref<32x4xf32, #tpu.memory_space<smem>>
    %263 = vector.broadcast %262 : f32 to vector<2x256xf32>
    %264 = arith.mulf %263, %253 : vector<2x256xf32>
    %265 = arith.addf %225, %264 : vector<2x256xf32>
    %c5_107 = arith.constant 5 : index
    %c3_108 = arith.constant 3 : index
    %266 = memref.load %arg2[%c5_107, %c3_108] : memref<32x4xf32, #tpu.memory_space<smem>>
    %267 = vector.broadcast %266 : f32 to vector<2x256xf32>
    %268 = arith.mulf %267, %253 : vector<2x256xf32>
    %269 = arith.addf %229, %268 : vector<2x256xf32>
    %270 = vector.extract_strided_slice %8 {offsets = [0, 6], sizes = [2, 1], strides = [1, 1]} : vector<2x32xf32> to vector<2x1xf32>
    %c0_109 = arith.constant 0 : index
    %c6 = arith.constant 6 : index
    %271 = memref.load %arg1[%c0_109, %c6] : memref<4x32xf32, #tpu.memory_space<smem>>
    %272 = vector.broadcast %271 : f32 to vector<2x256xf32>
    %273 = arith.mulf %272, %14 : vector<2x256xf32>
    %274 = vector.broadcast %270 : vector<2x1xf32> to vector<2x256xf32>
    %275 = arith.addf %274, %273 : vector<2x256xf32>
    %c1_110 = arith.constant 1 : index
    %c6_111 = arith.constant 6 : index
    %276 = memref.load %arg1[%c1_110, %c6_111] : memref<4x32xf32, #tpu.memory_space<smem>>
    %277 = vector.broadcast %276 : f32 to vector<2x256xf32>
    %278 = arith.mulf %277, %15 : vector<2x256xf32>
    %279 = arith.addf %275, %278 : vector<2x256xf32>
    %c2_112 = arith.constant 2 : index
    %c6_113 = arith.constant 6 : index
    %280 = memref.load %arg1[%c2_112, %c6_113] : memref<4x32xf32, #tpu.memory_space<smem>>
    %281 = vector.broadcast %280 : f32 to vector<2x256xf32>
    %282 = arith.mulf %281, %16 : vector<2x256xf32>
    %283 = arith.addf %279, %282 : vector<2x256xf32>
    %c3_114 = arith.constant 3 : index
    %c6_115 = arith.constant 6 : index
    %284 = memref.load %arg1[%c3_114, %c6_115] : memref<4x32xf32, #tpu.memory_space<smem>>
    %285 = vector.broadcast %284 : f32 to vector<2x256xf32>
    %286 = arith.mulf %285, %17 : vector<2x256xf32>
    %287 = arith.addf %283, %286 : vector<2x256xf32>
    %288 = arith.negf %287 : vector<2x256xf32>
    %289 = math.exp %288 : vector<2x256xf32>
    %cst_116 = arith.constant 1.000000e+00 : f32
    %290 = vector.broadcast %cst_116 : f32 to vector<2x256xf32>
    %291 = arith.addf %290, %289 : vector<2x256xf32>
    %292 = arith.divf %290, %291 : vector<2x256xf32>
    %293 = arith.mulf %287, %292 : vector<2x256xf32>
    %c6_117 = arith.constant 6 : index
    %c0_118 = arith.constant 0 : index
    %294 = memref.load %arg2[%c6_117, %c0_118] : memref<32x4xf32, #tpu.memory_space<smem>>
    %295 = vector.broadcast %294 : f32 to vector<2x256xf32>
    %296 = arith.mulf %295, %293 : vector<2x256xf32>
    %297 = arith.addf %257, %296 : vector<2x256xf32>
    %c6_119 = arith.constant 6 : index
    %c1_120 = arith.constant 1 : index
    %298 = memref.load %arg2[%c6_119, %c1_120] : memref<32x4xf32, #tpu.memory_space<smem>>
    %299 = vector.broadcast %298 : f32 to vector<2x256xf32>
    %300 = arith.mulf %299, %293 : vector<2x256xf32>
    %301 = arith.addf %261, %300 : vector<2x256xf32>
    %c6_121 = arith.constant 6 : index
    %c2_122 = arith.constant 2 : index
    %302 = memref.load %arg2[%c6_121, %c2_122] : memref<32x4xf32, #tpu.memory_space<smem>>
    %303 = vector.broadcast %302 : f32 to vector<2x256xf32>
    %304 = arith.mulf %303, %293 : vector<2x256xf32>
    %305 = arith.addf %265, %304 : vector<2x256xf32>
    %c6_123 = arith.constant 6 : index
    %c3_124 = arith.constant 3 : index
    %306 = memref.load %arg2[%c6_123, %c3_124] : memref<32x4xf32, #tpu.memory_space<smem>>
    %307 = vector.broadcast %306 : f32 to vector<2x256xf32>
    %308 = arith.mulf %307, %293 : vector<2x256xf32>
    %309 = arith.addf %269, %308 : vector<2x256xf32>
    %310 = vector.extract_strided_slice %8 {offsets = [0, 7], sizes = [2, 1], strides = [1, 1]} : vector<2x32xf32> to vector<2x1xf32>
    %c0_125 = arith.constant 0 : index
    %c7 = arith.constant 7 : index
    %311 = memref.load %arg1[%c0_125, %c7] : memref<4x32xf32, #tpu.memory_space<smem>>
    %312 = vector.broadcast %311 : f32 to vector<2x256xf32>
    %313 = arith.mulf %312, %14 : vector<2x256xf32>
    %314 = vector.broadcast %310 : vector<2x1xf32> to vector<2x256xf32>
    %315 = arith.addf %314, %313 : vector<2x256xf32>
    %c1_126 = arith.constant 1 : index
    %c7_127 = arith.constant 7 : index
    %316 = memref.load %arg1[%c1_126, %c7_127] : memref<4x32xf32, #tpu.memory_space<smem>>
    %317 = vector.broadcast %316 : f32 to vector<2x256xf32>
    %318 = arith.mulf %317, %15 : vector<2x256xf32>
    %319 = arith.addf %315, %318 : vector<2x256xf32>
    %c2_128 = arith.constant 2 : index
    %c7_129 = arith.constant 7 : index
    %320 = memref.load %arg1[%c2_128, %c7_129] : memref<4x32xf32, #tpu.memory_space<smem>>
    %321 = vector.broadcast %320 : f32 to vector<2x256xf32>
    %322 = arith.mulf %321, %16 : vector<2x256xf32>
    %323 = arith.addf %319, %322 : vector<2x256xf32>
    %c3_130 = arith.constant 3 : index
    %c7_131 = arith.constant 7 : index
    %324 = memref.load %arg1[%c3_130, %c7_131] : memref<4x32xf32, #tpu.memory_space<smem>>
    %325 = vector.broadcast %324 : f32 to vector<2x256xf32>
    %326 = arith.mulf %325, %17 : vector<2x256xf32>
    %327 = arith.addf %323, %326 : vector<2x256xf32>
    %328 = arith.negf %327 : vector<2x256xf32>
    %329 = math.exp %328 : vector<2x256xf32>
    %cst_132 = arith.constant 1.000000e+00 : f32
    %330 = vector.broadcast %cst_132 : f32 to vector<2x256xf32>
    %331 = arith.addf %330, %329 : vector<2x256xf32>
    %332 = arith.divf %330, %331 : vector<2x256xf32>
    %333 = arith.mulf %327, %332 : vector<2x256xf32>
    %c7_133 = arith.constant 7 : index
    %c0_134 = arith.constant 0 : index
    %334 = memref.load %arg2[%c7_133, %c0_134] : memref<32x4xf32, #tpu.memory_space<smem>>
    %335 = vector.broadcast %334 : f32 to vector<2x256xf32>
    %336 = arith.mulf %335, %333 : vector<2x256xf32>
    %337 = arith.addf %297, %336 : vector<2x256xf32>
    %c7_135 = arith.constant 7 : index
    %c1_136 = arith.constant 1 : index
    %338 = memref.load %arg2[%c7_135, %c1_136] : memref<32x4xf32, #tpu.memory_space<smem>>
    %339 = vector.broadcast %338 : f32 to vector<2x256xf32>
    %340 = arith.mulf %339, %333 : vector<2x256xf32>
    %341 = arith.addf %301, %340 : vector<2x256xf32>
    %c7_137 = arith.constant 7 : index
    %c2_138 = arith.constant 2 : index
    %342 = memref.load %arg2[%c7_137, %c2_138] : memref<32x4xf32, #tpu.memory_space<smem>>
    %343 = vector.broadcast %342 : f32 to vector<2x256xf32>
    %344 = arith.mulf %343, %333 : vector<2x256xf32>
    %345 = arith.addf %305, %344 : vector<2x256xf32>
    %c7_139 = arith.constant 7 : index
    %c3_140 = arith.constant 3 : index
    %346 = memref.load %arg2[%c7_139, %c3_140] : memref<32x4xf32, #tpu.memory_space<smem>>
    %347 = vector.broadcast %346 : f32 to vector<2x256xf32>
    %348 = arith.mulf %347, %333 : vector<2x256xf32>
    %349 = arith.addf %309, %348 : vector<2x256xf32>
    %350 = vector.extract_strided_slice %8 {offsets = [0, 8], sizes = [2, 1], strides = [1, 1]} : vector<2x32xf32> to vector<2x1xf32>
    %c0_141 = arith.constant 0 : index
    %c8 = arith.constant 8 : index
    %351 = memref.load %arg1[%c0_141, %c8] : memref<4x32xf32, #tpu.memory_space<smem>>
    %352 = vector.broadcast %351 : f32 to vector<2x256xf32>
    %353 = arith.mulf %352, %14 : vector<2x256xf32>
    %354 = vector.broadcast %350 : vector<2x1xf32> to vector<2x256xf32>
    %355 = arith.addf %354, %353 : vector<2x256xf32>
    %c1_142 = arith.constant 1 : index
    %c8_143 = arith.constant 8 : index
    %356 = memref.load %arg1[%c1_142, %c8_143] : memref<4x32xf32, #tpu.memory_space<smem>>
    %357 = vector.broadcast %356 : f32 to vector<2x256xf32>
    %358 = arith.mulf %357, %15 : vector<2x256xf32>
    %359 = arith.addf %355, %358 : vector<2x256xf32>
    %c2_144 = arith.constant 2 : index
    %c8_145 = arith.constant 8 : index
    %360 = memref.load %arg1[%c2_144, %c8_145] : memref<4x32xf32, #tpu.memory_space<smem>>
    %361 = vector.broadcast %360 : f32 to vector<2x256xf32>
    %362 = arith.mulf %361, %16 : vector<2x256xf32>
    %363 = arith.addf %359, %362 : vector<2x256xf32>
    %c3_146 = arith.constant 3 : index
    %c8_147 = arith.constant 8 : index
    %364 = memref.load %arg1[%c3_146, %c8_147] : memref<4x32xf32, #tpu.memory_space<smem>>
    %365 = vector.broadcast %364 : f32 to vector<2x256xf32>
    %366 = arith.mulf %365, %17 : vector<2x256xf32>
    %367 = arith.addf %363, %366 : vector<2x256xf32>
    %368 = arith.negf %367 : vector<2x256xf32>
    %369 = math.exp %368 : vector<2x256xf32>
    %cst_148 = arith.constant 1.000000e+00 : f32
    %370 = vector.broadcast %cst_148 : f32 to vector<2x256xf32>
    %371 = arith.addf %370, %369 : vector<2x256xf32>
    %372 = arith.divf %370, %371 : vector<2x256xf32>
    %373 = arith.mulf %367, %372 : vector<2x256xf32>
    %c8_149 = arith.constant 8 : index
    %c0_150 = arith.constant 0 : index
    %374 = memref.load %arg2[%c8_149, %c0_150] : memref<32x4xf32, #tpu.memory_space<smem>>
    %375 = vector.broadcast %374 : f32 to vector<2x256xf32>
    %376 = arith.mulf %375, %373 : vector<2x256xf32>
    %377 = arith.addf %337, %376 : vector<2x256xf32>
    %c8_151 = arith.constant 8 : index
    %c1_152 = arith.constant 1 : index
    %378 = memref.load %arg2[%c8_151, %c1_152] : memref<32x4xf32, #tpu.memory_space<smem>>
    %379 = vector.broadcast %378 : f32 to vector<2x256xf32>
    %380 = arith.mulf %379, %373 : vector<2x256xf32>
    %381 = arith.addf %341, %380 : vector<2x256xf32>
    %c8_153 = arith.constant 8 : index
    %c2_154 = arith.constant 2 : index
    %382 = memref.load %arg2[%c8_153, %c2_154] : memref<32x4xf32, #tpu.memory_space<smem>>
    %383 = vector.broadcast %382 : f32 to vector<2x256xf32>
    %384 = arith.mulf %383, %373 : vector<2x256xf32>
    %385 = arith.addf %345, %384 : vector<2x256xf32>
    %c8_155 = arith.constant 8 : index
    %c3_156 = arith.constant 3 : index
    %386 = memref.load %arg2[%c8_155, %c3_156] : memref<32x4xf32, #tpu.memory_space<smem>>
    %387 = vector.broadcast %386 : f32 to vector<2x256xf32>
    %388 = arith.mulf %387, %373 : vector<2x256xf32>
    %389 = arith.addf %349, %388 : vector<2x256xf32>
    %390 = vector.extract_strided_slice %8 {offsets = [0, 9], sizes = [2, 1], strides = [1, 1]} : vector<2x32xf32> to vector<2x1xf32>
    %c0_157 = arith.constant 0 : index
    %c9 = arith.constant 9 : index
    %391 = memref.load %arg1[%c0_157, %c9] : memref<4x32xf32, #tpu.memory_space<smem>>
    %392 = vector.broadcast %391 : f32 to vector<2x256xf32>
    %393 = arith.mulf %392, %14 : vector<2x256xf32>
    %394 = vector.broadcast %390 : vector<2x1xf32> to vector<2x256xf32>
    %395 = arith.addf %394, %393 : vector<2x256xf32>
    %c1_158 = arith.constant 1 : index
    %c9_159 = arith.constant 9 : index
    %396 = memref.load %arg1[%c1_158, %c9_159] : memref<4x32xf32, #tpu.memory_space<smem>>
    %397 = vector.broadcast %396 : f32 to vector<2x256xf32>
    %398 = arith.mulf %397, %15 : vector<2x256xf32>
    %399 = arith.addf %395, %398 : vector<2x256xf32>
    %c2_160 = arith.constant 2 : index
    %c9_161 = arith.constant 9 : index
    %400 = memref.load %arg1[%c2_160, %c9_161] : memref<4x32xf32, #tpu.memory_space<smem>>
    %401 = vector.broadcast %400 : f32 to vector<2x256xf32>
    %402 = arith.mulf %401, %16 : vector<2x256xf32>
    %403 = arith.addf %399, %402 : vector<2x256xf32>
    %c3_162 = arith.constant 3 : index
    %c9_163 = arith.constant 9 : index
    %404 = memref.load %arg1[%c3_162, %c9_163] : memref<4x32xf32, #tpu.memory_space<smem>>
    %405 = vector.broadcast %404 : f32 to vector<2x256xf32>
    %406 = arith.mulf %405, %17 : vector<2x256xf32>
    %407 = arith.addf %403, %406 : vector<2x256xf32>
    %408 = arith.negf %407 : vector<2x256xf32>
    %409 = math.exp %408 : vector<2x256xf32>
    %cst_164 = arith.constant 1.000000e+00 : f32
    %410 = vector.broadcast %cst_164 : f32 to vector<2x256xf32>
    %411 = arith.addf %410, %409 : vector<2x256xf32>
    %412 = arith.divf %410, %411 : vector<2x256xf32>
    %413 = arith.mulf %407, %412 : vector<2x256xf32>
    %c9_165 = arith.constant 9 : index
    %c0_166 = arith.constant 0 : index
    %414 = memref.load %arg2[%c9_165, %c0_166] : memref<32x4xf32, #tpu.memory_space<smem>>
    %415 = vector.broadcast %414 : f32 to vector<2x256xf32>
    %416 = arith.mulf %415, %413 : vector<2x256xf32>
    %417 = arith.addf %377, %416 : vector<2x256xf32>
    %c9_167 = arith.constant 9 : index
    %c1_168 = arith.constant 1 : index
    %418 = memref.load %arg2[%c9_167, %c1_168] : memref<32x4xf32, #tpu.memory_space<smem>>
    %419 = vector.broadcast %418 : f32 to vector<2x256xf32>
    %420 = arith.mulf %419, %413 : vector<2x256xf32>
    %421 = arith.addf %381, %420 : vector<2x256xf32>
    %c9_169 = arith.constant 9 : index
    %c2_170 = arith.constant 2 : index
    %422 = memref.load %arg2[%c9_169, %c2_170] : memref<32x4xf32, #tpu.memory_space<smem>>
    %423 = vector.broadcast %422 : f32 to vector<2x256xf32>
    %424 = arith.mulf %423, %413 : vector<2x256xf32>
    %425 = arith.addf %385, %424 : vector<2x256xf32>
    %c9_171 = arith.constant 9 : index
    %c3_172 = arith.constant 3 : index
    %426 = memref.load %arg2[%c9_171, %c3_172] : memref<32x4xf32, #tpu.memory_space<smem>>
    %427 = vector.broadcast %426 : f32 to vector<2x256xf32>
    %428 = arith.mulf %427, %413 : vector<2x256xf32>
    %429 = arith.addf %389, %428 : vector<2x256xf32>
    %430 = vector.extract_strided_slice %8 {offsets = [0, 10], sizes = [2, 1], strides = [1, 1]} : vector<2x32xf32> to vector<2x1xf32>
    %c0_173 = arith.constant 0 : index
    %c10 = arith.constant 10 : index
    %431 = memref.load %arg1[%c0_173, %c10] : memref<4x32xf32, #tpu.memory_space<smem>>
    %432 = vector.broadcast %431 : f32 to vector<2x256xf32>
    %433 = arith.mulf %432, %14 : vector<2x256xf32>
    %434 = vector.broadcast %430 : vector<2x1xf32> to vector<2x256xf32>
    %435 = arith.addf %434, %433 : vector<2x256xf32>
    %c1_174 = arith.constant 1 : index
    %c10_175 = arith.constant 10 : index
    %436 = memref.load %arg1[%c1_174, %c10_175] : memref<4x32xf32, #tpu.memory_space<smem>>
    %437 = vector.broadcast %436 : f32 to vector<2x256xf32>
    %438 = arith.mulf %437, %15 : vector<2x256xf32>
    %439 = arith.addf %435, %438 : vector<2x256xf32>
    %c2_176 = arith.constant 2 : index
    %c10_177 = arith.constant 10 : index
    %440 = memref.load %arg1[%c2_176, %c10_177] : memref<4x32xf32, #tpu.memory_space<smem>>
    %441 = vector.broadcast %440 : f32 to vector<2x256xf32>
    %442 = arith.mulf %441, %16 : vector<2x256xf32>
    %443 = arith.addf %439, %442 : vector<2x256xf32>
    %c3_178 = arith.constant 3 : index
    %c10_179 = arith.constant 10 : index
    %444 = memref.load %arg1[%c3_178, %c10_179] : memref<4x32xf32, #tpu.memory_space<smem>>
    %445 = vector.broadcast %444 : f32 to vector<2x256xf32>
    %446 = arith.mulf %445, %17 : vector<2x256xf32>
    %447 = arith.addf %443, %446 : vector<2x256xf32>
    %448 = arith.negf %447 : vector<2x256xf32>
    %449 = math.exp %448 : vector<2x256xf32>
    %cst_180 = arith.constant 1.000000e+00 : f32
    %450 = vector.broadcast %cst_180 : f32 to vector<2x256xf32>
    %451 = arith.addf %450, %449 : vector<2x256xf32>
    %452 = arith.divf %450, %451 : vector<2x256xf32>
    %453 = arith.mulf %447, %452 : vector<2x256xf32>
    %c10_181 = arith.constant 10 : index
    %c0_182 = arith.constant 0 : index
    %454 = memref.load %arg2[%c10_181, %c0_182] : memref<32x4xf32, #tpu.memory_space<smem>>
    %455 = vector.broadcast %454 : f32 to vector<2x256xf32>
    %456 = arith.mulf %455, %453 : vector<2x256xf32>
    %457 = arith.addf %417, %456 : vector<2x256xf32>
    %c10_183 = arith.constant 10 : index
    %c1_184 = arith.constant 1 : index
    %458 = memref.load %arg2[%c10_183, %c1_184] : memref<32x4xf32, #tpu.memory_space<smem>>
    %459 = vector.broadcast %458 : f32 to vector<2x256xf32>
    %460 = arith.mulf %459, %453 : vector<2x256xf32>
    %461 = arith.addf %421, %460 : vector<2x256xf32>
    %c10_185 = arith.constant 10 : index
    %c2_186 = arith.constant 2 : index
    %462 = memref.load %arg2[%c10_185, %c2_186] : memref<32x4xf32, #tpu.memory_space<smem>>
    %463 = vector.broadcast %462 : f32 to vector<2x256xf32>
    %464 = arith.mulf %463, %453 : vector<2x256xf32>
    %465 = arith.addf %425, %464 : vector<2x256xf32>
    %c10_187 = arith.constant 10 : index
    %c3_188 = arith.constant 3 : index
    %466 = memref.load %arg2[%c10_187, %c3_188] : memref<32x4xf32, #tpu.memory_space<smem>>
    %467 = vector.broadcast %466 : f32 to vector<2x256xf32>
    %468 = arith.mulf %467, %453 : vector<2x256xf32>
    %469 = arith.addf %429, %468 : vector<2x256xf32>
    %470 = vector.extract_strided_slice %8 {offsets = [0, 11], sizes = [2, 1], strides = [1, 1]} : vector<2x32xf32> to vector<2x1xf32>
    %c0_189 = arith.constant 0 : index
    %c11 = arith.constant 11 : index
    %471 = memref.load %arg1[%c0_189, %c11] : memref<4x32xf32, #tpu.memory_space<smem>>
    %472 = vector.broadcast %471 : f32 to vector<2x256xf32>
    %473 = arith.mulf %472, %14 : vector<2x256xf32>
    %474 = vector.broadcast %470 : vector<2x1xf32> to vector<2x256xf32>
    %475 = arith.addf %474, %473 : vector<2x256xf32>
    %c1_190 = arith.constant 1 : index
    %c11_191 = arith.constant 11 : index
    %476 = memref.load %arg1[%c1_190, %c11_191] : memref<4x32xf32, #tpu.memory_space<smem>>
    %477 = vector.broadcast %476 : f32 to vector<2x256xf32>
    %478 = arith.mulf %477, %15 : vector<2x256xf32>
    %479 = arith.addf %475, %478 : vector<2x256xf32>
    %c2_192 = arith.constant 2 : index
    %c11_193 = arith.constant 11 : index
    %480 = memref.load %arg1[%c2_192, %c11_193] : memref<4x32xf32, #tpu.memory_space<smem>>
    %481 = vector.broadcast %480 : f32 to vector<2x256xf32>
    %482 = arith.mulf %481, %16 : vector<2x256xf32>
    %483 = arith.addf %479, %482 : vector<2x256xf32>
    %c3_194 = arith.constant 3 : index
    %c11_195 = arith.constant 11 : index
    %484 = memref.load %arg1[%c3_194, %c11_195] : memref<4x32xf32, #tpu.memory_space<smem>>
    %485 = vector.broadcast %484 : f32 to vector<2x256xf32>
    %486 = arith.mulf %485, %17 : vector<2x256xf32>
    %487 = arith.addf %483, %486 : vector<2x256xf32>
    %488 = arith.negf %487 : vector<2x256xf32>
    %489 = math.exp %488 : vector<2x256xf32>
    %cst_196 = arith.constant 1.000000e+00 : f32
    %490 = vector.broadcast %cst_196 : f32 to vector<2x256xf32>
    %491 = arith.addf %490, %489 : vector<2x256xf32>
    %492 = arith.divf %490, %491 : vector<2x256xf32>
    %493 = arith.mulf %487, %492 : vector<2x256xf32>
    %c11_197 = arith.constant 11 : index
    %c0_198 = arith.constant 0 : index
    %494 = memref.load %arg2[%c11_197, %c0_198] : memref<32x4xf32, #tpu.memory_space<smem>>
    %495 = vector.broadcast %494 : f32 to vector<2x256xf32>
    %496 = arith.mulf %495, %493 : vector<2x256xf32>
    %497 = arith.addf %457, %496 : vector<2x256xf32>
    %c11_199 = arith.constant 11 : index
    %c1_200 = arith.constant 1 : index
    %498 = memref.load %arg2[%c11_199, %c1_200] : memref<32x4xf32, #tpu.memory_space<smem>>
    %499 = vector.broadcast %498 : f32 to vector<2x256xf32>
    %500 = arith.mulf %499, %493 : vector<2x256xf32>
    %501 = arith.addf %461, %500 : vector<2x256xf32>
    %c11_201 = arith.constant 11 : index
    %c2_202 = arith.constant 2 : index
    %502 = memref.load %arg2[%c11_201, %c2_202] : memref<32x4xf32, #tpu.memory_space<smem>>
    %503 = vector.broadcast %502 : f32 to vector<2x256xf32>
    %504 = arith.mulf %503, %493 : vector<2x256xf32>
    %505 = arith.addf %465, %504 : vector<2x256xf32>
    %c11_203 = arith.constant 11 : index
    %c3_204 = arith.constant 3 : index
    %506 = memref.load %arg2[%c11_203, %c3_204] : memref<32x4xf32, #tpu.memory_space<smem>>
    %507 = vector.broadcast %506 : f32 to vector<2x256xf32>
    %508 = arith.mulf %507, %493 : vector<2x256xf32>
    %509 = arith.addf %469, %508 : vector<2x256xf32>
    %510 = vector.extract_strided_slice %8 {offsets = [0, 12], sizes = [2, 1], strides = [1, 1]} : vector<2x32xf32> to vector<2x1xf32>
    %c0_205 = arith.constant 0 : index
    %c12 = arith.constant 12 : index
    %511 = memref.load %arg1[%c0_205, %c12] : memref<4x32xf32, #tpu.memory_space<smem>>
    %512 = vector.broadcast %511 : f32 to vector<2x256xf32>
    %513 = arith.mulf %512, %14 : vector<2x256xf32>
    %514 = vector.broadcast %510 : vector<2x1xf32> to vector<2x256xf32>
    %515 = arith.addf %514, %513 : vector<2x256xf32>
    %c1_206 = arith.constant 1 : index
    %c12_207 = arith.constant 12 : index
    %516 = memref.load %arg1[%c1_206, %c12_207] : memref<4x32xf32, #tpu.memory_space<smem>>
    %517 = vector.broadcast %516 : f32 to vector<2x256xf32>
    %518 = arith.mulf %517, %15 : vector<2x256xf32>
    %519 = arith.addf %515, %518 : vector<2x256xf32>
    %c2_208 = arith.constant 2 : index
    %c12_209 = arith.constant 12 : index
    %520 = memref.load %arg1[%c2_208, %c12_209] : memref<4x32xf32, #tpu.memory_space<smem>>
    %521 = vector.broadcast %520 : f32 to vector<2x256xf32>
    %522 = arith.mulf %521, %16 : vector<2x256xf32>
    %523 = arith.addf %519, %522 : vector<2x256xf32>
    %c3_210 = arith.constant 3 : index
    %c12_211 = arith.constant 12 : index
    %524 = memref.load %arg1[%c3_210, %c12_211] : memref<4x32xf32, #tpu.memory_space<smem>>
    %525 = vector.broadcast %524 : f32 to vector<2x256xf32>
    %526 = arith.mulf %525, %17 : vector<2x256xf32>
    %527 = arith.addf %523, %526 : vector<2x256xf32>
    %528 = arith.negf %527 : vector<2x256xf32>
    %529 = math.exp %528 : vector<2x256xf32>
    %cst_212 = arith.constant 1.000000e+00 : f32
    %530 = vector.broadcast %cst_212 : f32 to vector<2x256xf32>
    %531 = arith.addf %530, %529 : vector<2x256xf32>
    %532 = arith.divf %530, %531 : vector<2x256xf32>
    %533 = arith.mulf %527, %532 : vector<2x256xf32>
    %c12_213 = arith.constant 12 : index
    %c0_214 = arith.constant 0 : index
    %534 = memref.load %arg2[%c12_213, %c0_214] : memref<32x4xf32, #tpu.memory_space<smem>>
    %535 = vector.broadcast %534 : f32 to vector<2x256xf32>
    %536 = arith.mulf %535, %533 : vector<2x256xf32>
    %537 = arith.addf %497, %536 : vector<2x256xf32>
    %c12_215 = arith.constant 12 : index
    %c1_216 = arith.constant 1 : index
    %538 = memref.load %arg2[%c12_215, %c1_216] : memref<32x4xf32, #tpu.memory_space<smem>>
    %539 = vector.broadcast %538 : f32 to vector<2x256xf32>
    %540 = arith.mulf %539, %533 : vector<2x256xf32>
    %541 = arith.addf %501, %540 : vector<2x256xf32>
    %c12_217 = arith.constant 12 : index
    %c2_218 = arith.constant 2 : index
    %542 = memref.load %arg2[%c12_217, %c2_218] : memref<32x4xf32, #tpu.memory_space<smem>>
    %543 = vector.broadcast %542 : f32 to vector<2x256xf32>
    %544 = arith.mulf %543, %533 : vector<2x256xf32>
    %545 = arith.addf %505, %544 : vector<2x256xf32>
    %c12_219 = arith.constant 12 : index
    %c3_220 = arith.constant 3 : index
    %546 = memref.load %arg2[%c12_219, %c3_220] : memref<32x4xf32, #tpu.memory_space<smem>>
    %547 = vector.broadcast %546 : f32 to vector<2x256xf32>
    %548 = arith.mulf %547, %533 : vector<2x256xf32>
    %549 = arith.addf %509, %548 : vector<2x256xf32>
    %550 = vector.extract_strided_slice %8 {offsets = [0, 13], sizes = [2, 1], strides = [1, 1]} : vector<2x32xf32> to vector<2x1xf32>
    %c0_221 = arith.constant 0 : index
    %c13 = arith.constant 13 : index
    %551 = memref.load %arg1[%c0_221, %c13] : memref<4x32xf32, #tpu.memory_space<smem>>
    %552 = vector.broadcast %551 : f32 to vector<2x256xf32>
    %553 = arith.mulf %552, %14 : vector<2x256xf32>
    %554 = vector.broadcast %550 : vector<2x1xf32> to vector<2x256xf32>
    %555 = arith.addf %554, %553 : vector<2x256xf32>
    %c1_222 = arith.constant 1 : index
    %c13_223 = arith.constant 13 : index
    %556 = memref.load %arg1[%c1_222, %c13_223] : memref<4x32xf32, #tpu.memory_space<smem>>
    %557 = vector.broadcast %556 : f32 to vector<2x256xf32>
    %558 = arith.mulf %557, %15 : vector<2x256xf32>
    %559 = arith.addf %555, %558 : vector<2x256xf32>
    %c2_224 = arith.constant 2 : index
    %c13_225 = arith.constant 13 : index
    %560 = memref.load %arg1[%c2_224, %c13_225] : memref<4x32xf32, #tpu.memory_space<smem>>
    %561 = vector.broadcast %560 : f32 to vector<2x256xf32>
    %562 = arith.mulf %561, %16 : vector<2x256xf32>
    %563 = arith.addf %559, %562 : vector<2x256xf32>
    %c3_226 = arith.constant 3 : index
    %c13_227 = arith.constant 13 : index
    %564 = memref.load %arg1[%c3_226, %c13_227] : memref<4x32xf32, #tpu.memory_space<smem>>
    %565 = vector.broadcast %564 : f32 to vector<2x256xf32>
    %566 = arith.mulf %565, %17 : vector<2x256xf32>
    %567 = arith.addf %563, %566 : vector<2x256xf32>
    %568 = arith.negf %567 : vector<2x256xf32>
    %569 = math.exp %568 : vector<2x256xf32>
    %cst_228 = arith.constant 1.000000e+00 : f32
    %570 = vector.broadcast %cst_228 : f32 to vector<2x256xf32>
    %571 = arith.addf %570, %569 : vector<2x256xf32>
    %572 = arith.divf %570, %571 : vector<2x256xf32>
    %573 = arith.mulf %567, %572 : vector<2x256xf32>
    %c13_229 = arith.constant 13 : index
    %c0_230 = arith.constant 0 : index
    %574 = memref.load %arg2[%c13_229, %c0_230] : memref<32x4xf32, #tpu.memory_space<smem>>
    %575 = vector.broadcast %574 : f32 to vector<2x256xf32>
    %576 = arith.mulf %575, %573 : vector<2x256xf32>
    %577 = arith.addf %537, %576 : vector<2x256xf32>
    %c13_231 = arith.constant 13 : index
    %c1_232 = arith.constant 1 : index
    %578 = memref.load %arg2[%c13_231, %c1_232] : memref<32x4xf32, #tpu.memory_space<smem>>
    %579 = vector.broadcast %578 : f32 to vector<2x256xf32>
    %580 = arith.mulf %579, %573 : vector<2x256xf32>
    %581 = arith.addf %541, %580 : vector<2x256xf32>
    %c13_233 = arith.constant 13 : index
    %c2_234 = arith.constant 2 : index
    %582 = memref.load %arg2[%c13_233, %c2_234] : memref<32x4xf32, #tpu.memory_space<smem>>
    %583 = vector.broadcast %582 : f32 to vector<2x256xf32>
    %584 = arith.mulf %583, %573 : vector<2x256xf32>
    %585 = arith.addf %545, %584 : vector<2x256xf32>
    %c13_235 = arith.constant 13 : index
    %c3_236 = arith.constant 3 : index
    %586 = memref.load %arg2[%c13_235, %c3_236] : memref<32x4xf32, #tpu.memory_space<smem>>
    %587 = vector.broadcast %586 : f32 to vector<2x256xf32>
    %588 = arith.mulf %587, %573 : vector<2x256xf32>
    %589 = arith.addf %549, %588 : vector<2x256xf32>
    %590 = vector.extract_strided_slice %8 {offsets = [0, 14], sizes = [2, 1], strides = [1, 1]} : vector<2x32xf32> to vector<2x1xf32>
    %c0_237 = arith.constant 0 : index
    %c14 = arith.constant 14 : index
    %591 = memref.load %arg1[%c0_237, %c14] : memref<4x32xf32, #tpu.memory_space<smem>>
    %592 = vector.broadcast %591 : f32 to vector<2x256xf32>
    %593 = arith.mulf %592, %14 : vector<2x256xf32>
    %594 = vector.broadcast %590 : vector<2x1xf32> to vector<2x256xf32>
    %595 = arith.addf %594, %593 : vector<2x256xf32>
    %c1_238 = arith.constant 1 : index
    %c14_239 = arith.constant 14 : index
    %596 = memref.load %arg1[%c1_238, %c14_239] : memref<4x32xf32, #tpu.memory_space<smem>>
    %597 = vector.broadcast %596 : f32 to vector<2x256xf32>
    %598 = arith.mulf %597, %15 : vector<2x256xf32>
    %599 = arith.addf %595, %598 : vector<2x256xf32>
    %c2_240 = arith.constant 2 : index
    %c14_241 = arith.constant 14 : index
    %600 = memref.load %arg1[%c2_240, %c14_241] : memref<4x32xf32, #tpu.memory_space<smem>>
    %601 = vector.broadcast %600 : f32 to vector<2x256xf32>
    %602 = arith.mulf %601, %16 : vector<2x256xf32>
    %603 = arith.addf %599, %602 : vector<2x256xf32>
    %c3_242 = arith.constant 3 : index
    %c14_243 = arith.constant 14 : index
    %604 = memref.load %arg1[%c3_242, %c14_243] : memref<4x32xf32, #tpu.memory_space<smem>>
    %605 = vector.broadcast %604 : f32 to vector<2x256xf32>
    %606 = arith.mulf %605, %17 : vector<2x256xf32>
    %607 = arith.addf %603, %606 : vector<2x256xf32>
    %608 = arith.negf %607 : vector<2x256xf32>
    %609 = math.exp %608 : vector<2x256xf32>
    %cst_244 = arith.constant 1.000000e+00 : f32
    %610 = vector.broadcast %cst_244 : f32 to vector<2x256xf32>
    %611 = arith.addf %610, %609 : vector<2x256xf32>
    %612 = arith.divf %610, %611 : vector<2x256xf32>
    %613 = arith.mulf %607, %612 : vector<2x256xf32>
    %c14_245 = arith.constant 14 : index
    %c0_246 = arith.constant 0 : index
    %614 = memref.load %arg2[%c14_245, %c0_246] : memref<32x4xf32, #tpu.memory_space<smem>>
    %615 = vector.broadcast %614 : f32 to vector<2x256xf32>
    %616 = arith.mulf %615, %613 : vector<2x256xf32>
    %617 = arith.addf %577, %616 : vector<2x256xf32>
    %c14_247 = arith.constant 14 : index
    %c1_248 = arith.constant 1 : index
    %618 = memref.load %arg2[%c14_247, %c1_248] : memref<32x4xf32, #tpu.memory_space<smem>>
    %619 = vector.broadcast %618 : f32 to vector<2x256xf32>
    %620 = arith.mulf %619, %613 : vector<2x256xf32>
    %621 = arith.addf %581, %620 : vector<2x256xf32>
    %c14_249 = arith.constant 14 : index
    %c2_250 = arith.constant 2 : index
    %622 = memref.load %arg2[%c14_249, %c2_250] : memref<32x4xf32, #tpu.memory_space<smem>>
    %623 = vector.broadcast %622 : f32 to vector<2x256xf32>
    %624 = arith.mulf %623, %613 : vector<2x256xf32>
    %625 = arith.addf %585, %624 : vector<2x256xf32>
    %c14_251 = arith.constant 14 : index
    %c3_252 = arith.constant 3 : index
    %626 = memref.load %arg2[%c14_251, %c3_252] : memref<32x4xf32, #tpu.memory_space<smem>>
    %627 = vector.broadcast %626 : f32 to vector<2x256xf32>
    %628 = arith.mulf %627, %613 : vector<2x256xf32>
    %629 = arith.addf %589, %628 : vector<2x256xf32>
    %630 = vector.extract_strided_slice %8 {offsets = [0, 15], sizes = [2, 1], strides = [1, 1]} : vector<2x32xf32> to vector<2x1xf32>
    %c0_253 = arith.constant 0 : index
    %c15 = arith.constant 15 : index
    %631 = memref.load %arg1[%c0_253, %c15] : memref<4x32xf32, #tpu.memory_space<smem>>
    %632 = vector.broadcast %631 : f32 to vector<2x256xf32>
    %633 = arith.mulf %632, %14 : vector<2x256xf32>
    %634 = vector.broadcast %630 : vector<2x1xf32> to vector<2x256xf32>
    %635 = arith.addf %634, %633 : vector<2x256xf32>
    %c1_254 = arith.constant 1 : index
    %c15_255 = arith.constant 15 : index
    %636 = memref.load %arg1[%c1_254, %c15_255] : memref<4x32xf32, #tpu.memory_space<smem>>
    %637 = vector.broadcast %636 : f32 to vector<2x256xf32>
    %638 = arith.mulf %637, %15 : vector<2x256xf32>
    %639 = arith.addf %635, %638 : vector<2x256xf32>
    %c2_256 = arith.constant 2 : index
    %c15_257 = arith.constant 15 : index
    %640 = memref.load %arg1[%c2_256, %c15_257] : memref<4x32xf32, #tpu.memory_space<smem>>
    %641 = vector.broadcast %640 : f32 to vector<2x256xf32>
    %642 = arith.mulf %641, %16 : vector<2x256xf32>
    %643 = arith.addf %639, %642 : vector<2x256xf32>
    %c3_258 = arith.constant 3 : index
    %c15_259 = arith.constant 15 : index
    %644 = memref.load %arg1[%c3_258, %c15_259] : memref<4x32xf32, #tpu.memory_space<smem>>
    %645 = vector.broadcast %644 : f32 to vector<2x256xf32>
    %646 = arith.mulf %645, %17 : vector<2x256xf32>
    %647 = arith.addf %643, %646 : vector<2x256xf32>
    %648 = arith.negf %647 : vector<2x256xf32>
    %649 = math.exp %648 : vector<2x256xf32>
    %cst_260 = arith.constant 1.000000e+00 : f32
    %650 = vector.broadcast %cst_260 : f32 to vector<2x256xf32>
    %651 = arith.addf %650, %649 : vector<2x256xf32>
    %652 = arith.divf %650, %651 : vector<2x256xf32>
    %653 = arith.mulf %647, %652 : vector<2x256xf32>
    %c15_261 = arith.constant 15 : index
    %c0_262 = arith.constant 0 : index
    %654 = memref.load %arg2[%c15_261, %c0_262] : memref<32x4xf32, #tpu.memory_space<smem>>
    %655 = vector.broadcast %654 : f32 to vector<2x256xf32>
    %656 = arith.mulf %655, %653 : vector<2x256xf32>
    %657 = arith.addf %617, %656 : vector<2x256xf32>
    %c15_263 = arith.constant 15 : index
    %c1_264 = arith.constant 1 : index
    %658 = memref.load %arg2[%c15_263, %c1_264] : memref<32x4xf32, #tpu.memory_space<smem>>
    %659 = vector.broadcast %658 : f32 to vector<2x256xf32>
    %660 = arith.mulf %659, %653 : vector<2x256xf32>
    %661 = arith.addf %621, %660 : vector<2x256xf32>
    %c15_265 = arith.constant 15 : index
    %c2_266 = arith.constant 2 : index
    %662 = memref.load %arg2[%c15_265, %c2_266] : memref<32x4xf32, #tpu.memory_space<smem>>
    %663 = vector.broadcast %662 : f32 to vector<2x256xf32>
    %664 = arith.mulf %663, %653 : vector<2x256xf32>
    %665 = arith.addf %625, %664 : vector<2x256xf32>
    %c15_267 = arith.constant 15 : index
    %c3_268 = arith.constant 3 : index
    %666 = memref.load %arg2[%c15_267, %c3_268] : memref<32x4xf32, #tpu.memory_space<smem>>
    %667 = vector.broadcast %666 : f32 to vector<2x256xf32>
    %668 = arith.mulf %667, %653 : vector<2x256xf32>
    %669 = arith.addf %629, %668 : vector<2x256xf32>
    %670 = vector.extract_strided_slice %8 {offsets = [0, 16], sizes = [2, 1], strides = [1, 1]} : vector<2x32xf32> to vector<2x1xf32>
    %c0_269 = arith.constant 0 : index
    %c16 = arith.constant 16 : index
    %671 = memref.load %arg1[%c0_269, %c16] : memref<4x32xf32, #tpu.memory_space<smem>>
    %672 = vector.broadcast %671 : f32 to vector<2x256xf32>
    %673 = arith.mulf %672, %14 : vector<2x256xf32>
    %674 = vector.broadcast %670 : vector<2x1xf32> to vector<2x256xf32>
    %675 = arith.addf %674, %673 : vector<2x256xf32>
    %c1_270 = arith.constant 1 : index
    %c16_271 = arith.constant 16 : index
    %676 = memref.load %arg1[%c1_270, %c16_271] : memref<4x32xf32, #tpu.memory_space<smem>>
    %677 = vector.broadcast %676 : f32 to vector<2x256xf32>
    %678 = arith.mulf %677, %15 : vector<2x256xf32>
    %679 = arith.addf %675, %678 : vector<2x256xf32>
    %c2_272 = arith.constant 2 : index
    %c16_273 = arith.constant 16 : index
    %680 = memref.load %arg1[%c2_272, %c16_273] : memref<4x32xf32, #tpu.memory_space<smem>>
    %681 = vector.broadcast %680 : f32 to vector<2x256xf32>
    %682 = arith.mulf %681, %16 : vector<2x256xf32>
    %683 = arith.addf %679, %682 : vector<2x256xf32>
    %c3_274 = arith.constant 3 : index
    %c16_275 = arith.constant 16 : index
    %684 = memref.load %arg1[%c3_274, %c16_275] : memref<4x32xf32, #tpu.memory_space<smem>>
    %685 = vector.broadcast %684 : f32 to vector<2x256xf32>
    %686 = arith.mulf %685, %17 : vector<2x256xf32>
    %687 = arith.addf %683, %686 : vector<2x256xf32>
    %688 = arith.negf %687 : vector<2x256xf32>
    %689 = math.exp %688 : vector<2x256xf32>
    %cst_276 = arith.constant 1.000000e+00 : f32
    %690 = vector.broadcast %cst_276 : f32 to vector<2x256xf32>
    %691 = arith.addf %690, %689 : vector<2x256xf32>
    %692 = arith.divf %690, %691 : vector<2x256xf32>
    %693 = arith.mulf %687, %692 : vector<2x256xf32>
    %c16_277 = arith.constant 16 : index
    %c0_278 = arith.constant 0 : index
    %694 = memref.load %arg2[%c16_277, %c0_278] : memref<32x4xf32, #tpu.memory_space<smem>>
    %695 = vector.broadcast %694 : f32 to vector<2x256xf32>
    %696 = arith.mulf %695, %693 : vector<2x256xf32>
    %697 = arith.addf %657, %696 : vector<2x256xf32>
    %c16_279 = arith.constant 16 : index
    %c1_280 = arith.constant 1 : index
    %698 = memref.load %arg2[%c16_279, %c1_280] : memref<32x4xf32, #tpu.memory_space<smem>>
    %699 = vector.broadcast %698 : f32 to vector<2x256xf32>
    %700 = arith.mulf %699, %693 : vector<2x256xf32>
    %701 = arith.addf %661, %700 : vector<2x256xf32>
    %c16_281 = arith.constant 16 : index
    %c2_282 = arith.constant 2 : index
    %702 = memref.load %arg2[%c16_281, %c2_282] : memref<32x4xf32, #tpu.memory_space<smem>>
    %703 = vector.broadcast %702 : f32 to vector<2x256xf32>
    %704 = arith.mulf %703, %693 : vector<2x256xf32>
    %705 = arith.addf %665, %704 : vector<2x256xf32>
    %c16_283 = arith.constant 16 : index
    %c3_284 = arith.constant 3 : index
    %706 = memref.load %arg2[%c16_283, %c3_284] : memref<32x4xf32, #tpu.memory_space<smem>>
    %707 = vector.broadcast %706 : f32 to vector<2x256xf32>
    %708 = arith.mulf %707, %693 : vector<2x256xf32>
    %709 = arith.addf %669, %708 : vector<2x256xf32>
    %710 = vector.extract_strided_slice %8 {offsets = [0, 17], sizes = [2, 1], strides = [1, 1]} : vector<2x32xf32> to vector<2x1xf32>
    %c0_285 = arith.constant 0 : index
    %c17 = arith.constant 17 : index
    %711 = memref.load %arg1[%c0_285, %c17] : memref<4x32xf32, #tpu.memory_space<smem>>
    %712 = vector.broadcast %711 : f32 to vector<2x256xf32>
    %713 = arith.mulf %712, %14 : vector<2x256xf32>
    %714 = vector.broadcast %710 : vector<2x1xf32> to vector<2x256xf32>
    %715 = arith.addf %714, %713 : vector<2x256xf32>
    %c1_286 = arith.constant 1 : index
    %c17_287 = arith.constant 17 : index
    %716 = memref.load %arg1[%c1_286, %c17_287] : memref<4x32xf32, #tpu.memory_space<smem>>
    %717 = vector.broadcast %716 : f32 to vector<2x256xf32>
    %718 = arith.mulf %717, %15 : vector<2x256xf32>
    %719 = arith.addf %715, %718 : vector<2x256xf32>
    %c2_288 = arith.constant 2 : index
    %c17_289 = arith.constant 17 : index
    %720 = memref.load %arg1[%c2_288, %c17_289] : memref<4x32xf32, #tpu.memory_space<smem>>
    %721 = vector.broadcast %720 : f32 to vector<2x256xf32>
    %722 = arith.mulf %721, %16 : vector<2x256xf32>
    %723 = arith.addf %719, %722 : vector<2x256xf32>
    %c3_290 = arith.constant 3 : index
    %c17_291 = arith.constant 17 : index
    %724 = memref.load %arg1[%c3_290, %c17_291] : memref<4x32xf32, #tpu.memory_space<smem>>
    %725 = vector.broadcast %724 : f32 to vector<2x256xf32>
    %726 = arith.mulf %725, %17 : vector<2x256xf32>
    %727 = arith.addf %723, %726 : vector<2x256xf32>
    %728 = arith.negf %727 : vector<2x256xf32>
    %729 = math.exp %728 : vector<2x256xf32>
    %cst_292 = arith.constant 1.000000e+00 : f32
    %730 = vector.broadcast %cst_292 : f32 to vector<2x256xf32>
    %731 = arith.addf %730, %729 : vector<2x256xf32>
    %732 = arith.divf %730, %731 : vector<2x256xf32>
    %733 = arith.mulf %727, %732 : vector<2x256xf32>
    %c17_293 = arith.constant 17 : index
    %c0_294 = arith.constant 0 : index
    %734 = memref.load %arg2[%c17_293, %c0_294] : memref<32x4xf32, #tpu.memory_space<smem>>
    %735 = vector.broadcast %734 : f32 to vector<2x256xf32>
    %736 = arith.mulf %735, %733 : vector<2x256xf32>
    %737 = arith.addf %697, %736 : vector<2x256xf32>
    %c17_295 = arith.constant 17 : index
    %c1_296 = arith.constant 1 : index
    %738 = memref.load %arg2[%c17_295, %c1_296] : memref<32x4xf32, #tpu.memory_space<smem>>
    %739 = vector.broadcast %738 : f32 to vector<2x256xf32>
    %740 = arith.mulf %739, %733 : vector<2x256xf32>
    %741 = arith.addf %701, %740 : vector<2x256xf32>
    %c17_297 = arith.constant 17 : index
    %c2_298 = arith.constant 2 : index
    %742 = memref.load %arg2[%c17_297, %c2_298] : memref<32x4xf32, #tpu.memory_space<smem>>
    %743 = vector.broadcast %742 : f32 to vector<2x256xf32>
    %744 = arith.mulf %743, %733 : vector<2x256xf32>
    %745 = arith.addf %705, %744 : vector<2x256xf32>
    %c17_299 = arith.constant 17 : index
    %c3_300 = arith.constant 3 : index
    %746 = memref.load %arg2[%c17_299, %c3_300] : memref<32x4xf32, #tpu.memory_space<smem>>
    %747 = vector.broadcast %746 : f32 to vector<2x256xf32>
    %748 = arith.mulf %747, %733 : vector<2x256xf32>
    %749 = arith.addf %709, %748 : vector<2x256xf32>
    %750 = vector.extract_strided_slice %8 {offsets = [0, 18], sizes = [2, 1], strides = [1, 1]} : vector<2x32xf32> to vector<2x1xf32>
    %c0_301 = arith.constant 0 : index
    %c18 = arith.constant 18 : index
    %751 = memref.load %arg1[%c0_301, %c18] : memref<4x32xf32, #tpu.memory_space<smem>>
    %752 = vector.broadcast %751 : f32 to vector<2x256xf32>
    %753 = arith.mulf %752, %14 : vector<2x256xf32>
    %754 = vector.broadcast %750 : vector<2x1xf32> to vector<2x256xf32>
    %755 = arith.addf %754, %753 : vector<2x256xf32>
    %c1_302 = arith.constant 1 : index
    %c18_303 = arith.constant 18 : index
    %756 = memref.load %arg1[%c1_302, %c18_303] : memref<4x32xf32, #tpu.memory_space<smem>>
    %757 = vector.broadcast %756 : f32 to vector<2x256xf32>
    %758 = arith.mulf %757, %15 : vector<2x256xf32>
    %759 = arith.addf %755, %758 : vector<2x256xf32>
    %c2_304 = arith.constant 2 : index
    %c18_305 = arith.constant 18 : index
    %760 = memref.load %arg1[%c2_304, %c18_305] : memref<4x32xf32, #tpu.memory_space<smem>>
    %761 = vector.broadcast %760 : f32 to vector<2x256xf32>
    %762 = arith.mulf %761, %16 : vector<2x256xf32>
    %763 = arith.addf %759, %762 : vector<2x256xf32>
    %c3_306 = arith.constant 3 : index
    %c18_307 = arith.constant 18 : index
    %764 = memref.load %arg1[%c3_306, %c18_307] : memref<4x32xf32, #tpu.memory_space<smem>>
    %765 = vector.broadcast %764 : f32 to vector<2x256xf32>
    %766 = arith.mulf %765, %17 : vector<2x256xf32>
    %767 = arith.addf %763, %766 : vector<2x256xf32>
    %768 = arith.negf %767 : vector<2x256xf32>
    %769 = math.exp %768 : vector<2x256xf32>
    %cst_308 = arith.constant 1.000000e+00 : f32
    %770 = vector.broadcast %cst_308 : f32 to vector<2x256xf32>
    %771 = arith.addf %770, %769 : vector<2x256xf32>
    %772 = arith.divf %770, %771 : vector<2x256xf32>
    %773 = arith.mulf %767, %772 : vector<2x256xf32>
    %c18_309 = arith.constant 18 : index
    %c0_310 = arith.constant 0 : index
    %774 = memref.load %arg2[%c18_309, %c0_310] : memref<32x4xf32, #tpu.memory_space<smem>>
    %775 = vector.broadcast %774 : f32 to vector<2x256xf32>
    %776 = arith.mulf %775, %773 : vector<2x256xf32>
    %777 = arith.addf %737, %776 : vector<2x256xf32>
    %c18_311 = arith.constant 18 : index
    %c1_312 = arith.constant 1 : index
    %778 = memref.load %arg2[%c18_311, %c1_312] : memref<32x4xf32, #tpu.memory_space<smem>>
    %779 = vector.broadcast %778 : f32 to vector<2x256xf32>
    %780 = arith.mulf %779, %773 : vector<2x256xf32>
    %781 = arith.addf %741, %780 : vector<2x256xf32>
    %c18_313 = arith.constant 18 : index
    %c2_314 = arith.constant 2 : index
    %782 = memref.load %arg2[%c18_313, %c2_314] : memref<32x4xf32, #tpu.memory_space<smem>>
    %783 = vector.broadcast %782 : f32 to vector<2x256xf32>
    %784 = arith.mulf %783, %773 : vector<2x256xf32>
    %785 = arith.addf %745, %784 : vector<2x256xf32>
    %c18_315 = arith.constant 18 : index
    %c3_316 = arith.constant 3 : index
    %786 = memref.load %arg2[%c18_315, %c3_316] : memref<32x4xf32, #tpu.memory_space<smem>>
    %787 = vector.broadcast %786 : f32 to vector<2x256xf32>
    %788 = arith.mulf %787, %773 : vector<2x256xf32>
    %789 = arith.addf %749, %788 : vector<2x256xf32>
    %790 = vector.extract_strided_slice %8 {offsets = [0, 19], sizes = [2, 1], strides = [1, 1]} : vector<2x32xf32> to vector<2x1xf32>
    %c0_317 = arith.constant 0 : index
    %c19 = arith.constant 19 : index
    %791 = memref.load %arg1[%c0_317, %c19] : memref<4x32xf32, #tpu.memory_space<smem>>
    %792 = vector.broadcast %791 : f32 to vector<2x256xf32>
    %793 = arith.mulf %792, %14 : vector<2x256xf32>
    %794 = vector.broadcast %790 : vector<2x1xf32> to vector<2x256xf32>
    %795 = arith.addf %794, %793 : vector<2x256xf32>
    %c1_318 = arith.constant 1 : index
    %c19_319 = arith.constant 19 : index
    %796 = memref.load %arg1[%c1_318, %c19_319] : memref<4x32xf32, #tpu.memory_space<smem>>
    %797 = vector.broadcast %796 : f32 to vector<2x256xf32>
    %798 = arith.mulf %797, %15 : vector<2x256xf32>
    %799 = arith.addf %795, %798 : vector<2x256xf32>
    %c2_320 = arith.constant 2 : index
    %c19_321 = arith.constant 19 : index
    %800 = memref.load %arg1[%c2_320, %c19_321] : memref<4x32xf32, #tpu.memory_space<smem>>
    %801 = vector.broadcast %800 : f32 to vector<2x256xf32>
    %802 = arith.mulf %801, %16 : vector<2x256xf32>
    %803 = arith.addf %799, %802 : vector<2x256xf32>
    %c3_322 = arith.constant 3 : index
    %c19_323 = arith.constant 19 : index
    %804 = memref.load %arg1[%c3_322, %c19_323] : memref<4x32xf32, #tpu.memory_space<smem>>
    %805 = vector.broadcast %804 : f32 to vector<2x256xf32>
    %806 = arith.mulf %805, %17 : vector<2x256xf32>
    %807 = arith.addf %803, %806 : vector<2x256xf32>
    %808 = arith.negf %807 : vector<2x256xf32>
    %809 = math.exp %808 : vector<2x256xf32>
    %cst_324 = arith.constant 1.000000e+00 : f32
    %810 = vector.broadcast %cst_324 : f32 to vector<2x256xf32>
    %811 = arith.addf %810, %809 : vector<2x256xf32>
    %812 = arith.divf %810, %811 : vector<2x256xf32>
    %813 = arith.mulf %807, %812 : vector<2x256xf32>
    %c19_325 = arith.constant 19 : index
    %c0_326 = arith.constant 0 : index
    %814 = memref.load %arg2[%c19_325, %c0_326] : memref<32x4xf32, #tpu.memory_space<smem>>
    %815 = vector.broadcast %814 : f32 to vector<2x256xf32>
    %816 = arith.mulf %815, %813 : vector<2x256xf32>
    %817 = arith.addf %777, %816 : vector<2x256xf32>
    %c19_327 = arith.constant 19 : index
    %c1_328 = arith.constant 1 : index
    %818 = memref.load %arg2[%c19_327, %c1_328] : memref<32x4xf32, #tpu.memory_space<smem>>
    %819 = vector.broadcast %818 : f32 to vector<2x256xf32>
    %820 = arith.mulf %819, %813 : vector<2x256xf32>
    %821 = arith.addf %781, %820 : vector<2x256xf32>
    %c19_329 = arith.constant 19 : index
    %c2_330 = arith.constant 2 : index
    %822 = memref.load %arg2[%c19_329, %c2_330] : memref<32x4xf32, #tpu.memory_space<smem>>
    %823 = vector.broadcast %822 : f32 to vector<2x256xf32>
    %824 = arith.mulf %823, %813 : vector<2x256xf32>
    %825 = arith.addf %785, %824 : vector<2x256xf32>
    %c19_331 = arith.constant 19 : index
    %c3_332 = arith.constant 3 : index
    %826 = memref.load %arg2[%c19_331, %c3_332] : memref<32x4xf32, #tpu.memory_space<smem>>
    %827 = vector.broadcast %826 : f32 to vector<2x256xf32>
    %828 = arith.mulf %827, %813 : vector<2x256xf32>
    %829 = arith.addf %789, %828 : vector<2x256xf32>
    %830 = vector.extract_strided_slice %8 {offsets = [0, 20], sizes = [2, 1], strides = [1, 1]} : vector<2x32xf32> to vector<2x1xf32>
    %c0_333 = arith.constant 0 : index
    %c20 = arith.constant 20 : index
    %831 = memref.load %arg1[%c0_333, %c20] : memref<4x32xf32, #tpu.memory_space<smem>>
    %832 = vector.broadcast %831 : f32 to vector<2x256xf32>
    %833 = arith.mulf %832, %14 : vector<2x256xf32>
    %834 = vector.broadcast %830 : vector<2x1xf32> to vector<2x256xf32>
    %835 = arith.addf %834, %833 : vector<2x256xf32>
    %c1_334 = arith.constant 1 : index
    %c20_335 = arith.constant 20 : index
    %836 = memref.load %arg1[%c1_334, %c20_335] : memref<4x32xf32, #tpu.memory_space<smem>>
    %837 = vector.broadcast %836 : f32 to vector<2x256xf32>
    %838 = arith.mulf %837, %15 : vector<2x256xf32>
    %839 = arith.addf %835, %838 : vector<2x256xf32>
    %c2_336 = arith.constant 2 : index
    %c20_337 = arith.constant 20 : index
    %840 = memref.load %arg1[%c2_336, %c20_337] : memref<4x32xf32, #tpu.memory_space<smem>>
    %841 = vector.broadcast %840 : f32 to vector<2x256xf32>
    %842 = arith.mulf %841, %16 : vector<2x256xf32>
    %843 = arith.addf %839, %842 : vector<2x256xf32>
    %c3_338 = arith.constant 3 : index
    %c20_339 = arith.constant 20 : index
    %844 = memref.load %arg1[%c3_338, %c20_339] : memref<4x32xf32, #tpu.memory_space<smem>>
    %845 = vector.broadcast %844 : f32 to vector<2x256xf32>
    %846 = arith.mulf %845, %17 : vector<2x256xf32>
    %847 = arith.addf %843, %846 : vector<2x256xf32>
    %848 = arith.negf %847 : vector<2x256xf32>
    %849 = math.exp %848 : vector<2x256xf32>
    %cst_340 = arith.constant 1.000000e+00 : f32
    %850 = vector.broadcast %cst_340 : f32 to vector<2x256xf32>
    %851 = arith.addf %850, %849 : vector<2x256xf32>
    %852 = arith.divf %850, %851 : vector<2x256xf32>
    %853 = arith.mulf %847, %852 : vector<2x256xf32>
    %c20_341 = arith.constant 20 : index
    %c0_342 = arith.constant 0 : index
    %854 = memref.load %arg2[%c20_341, %c0_342] : memref<32x4xf32, #tpu.memory_space<smem>>
    %855 = vector.broadcast %854 : f32 to vector<2x256xf32>
    %856 = arith.mulf %855, %853 : vector<2x256xf32>
    %857 = arith.addf %817, %856 : vector<2x256xf32>
    %c20_343 = arith.constant 20 : index
    %c1_344 = arith.constant 1 : index
    %858 = memref.load %arg2[%c20_343, %c1_344] : memref<32x4xf32, #tpu.memory_space<smem>>
    %859 = vector.broadcast %858 : f32 to vector<2x256xf32>
    %860 = arith.mulf %859, %853 : vector<2x256xf32>
    %861 = arith.addf %821, %860 : vector<2x256xf32>
    %c20_345 = arith.constant 20 : index
    %c2_346 = arith.constant 2 : index
    %862 = memref.load %arg2[%c20_345, %c2_346] : memref<32x4xf32, #tpu.memory_space<smem>>
    %863 = vector.broadcast %862 : f32 to vector<2x256xf32>
    %864 = arith.mulf %863, %853 : vector<2x256xf32>
    %865 = arith.addf %825, %864 : vector<2x256xf32>
    %c20_347 = arith.constant 20 : index
    %c3_348 = arith.constant 3 : index
    %866 = memref.load %arg2[%c20_347, %c3_348] : memref<32x4xf32, #tpu.memory_space<smem>>
    %867 = vector.broadcast %866 : f32 to vector<2x256xf32>
    %868 = arith.mulf %867, %853 : vector<2x256xf32>
    %869 = arith.addf %829, %868 : vector<2x256xf32>
    %870 = vector.extract_strided_slice %8 {offsets = [0, 21], sizes = [2, 1], strides = [1, 1]} : vector<2x32xf32> to vector<2x1xf32>
    %c0_349 = arith.constant 0 : index
    %c21 = arith.constant 21 : index
    %871 = memref.load %arg1[%c0_349, %c21] : memref<4x32xf32, #tpu.memory_space<smem>>
    %872 = vector.broadcast %871 : f32 to vector<2x256xf32>
    %873 = arith.mulf %872, %14 : vector<2x256xf32>
    %874 = vector.broadcast %870 : vector<2x1xf32> to vector<2x256xf32>
    %875 = arith.addf %874, %873 : vector<2x256xf32>
    %c1_350 = arith.constant 1 : index
    %c21_351 = arith.constant 21 : index
    %876 = memref.load %arg1[%c1_350, %c21_351] : memref<4x32xf32, #tpu.memory_space<smem>>
    %877 = vector.broadcast %876 : f32 to vector<2x256xf32>
    %878 = arith.mulf %877, %15 : vector<2x256xf32>
    %879 = arith.addf %875, %878 : vector<2x256xf32>
    %c2_352 = arith.constant 2 : index
    %c21_353 = arith.constant 21 : index
    %880 = memref.load %arg1[%c2_352, %c21_353] : memref<4x32xf32, #tpu.memory_space<smem>>
    %881 = vector.broadcast %880 : f32 to vector<2x256xf32>
    %882 = arith.mulf %881, %16 : vector<2x256xf32>
    %883 = arith.addf %879, %882 : vector<2x256xf32>
    %c3_354 = arith.constant 3 : index
    %c21_355 = arith.constant 21 : index
    %884 = memref.load %arg1[%c3_354, %c21_355] : memref<4x32xf32, #tpu.memory_space<smem>>
    %885 = vector.broadcast %884 : f32 to vector<2x256xf32>
    %886 = arith.mulf %885, %17 : vector<2x256xf32>
    %887 = arith.addf %883, %886 : vector<2x256xf32>
    %888 = arith.negf %887 : vector<2x256xf32>
    %889 = math.exp %888 : vector<2x256xf32>
    %cst_356 = arith.constant 1.000000e+00 : f32
    %890 = vector.broadcast %cst_356 : f32 to vector<2x256xf32>
    %891 = arith.addf %890, %889 : vector<2x256xf32>
    %892 = arith.divf %890, %891 : vector<2x256xf32>
    %893 = arith.mulf %887, %892 : vector<2x256xf32>
    %c21_357 = arith.constant 21 : index
    %c0_358 = arith.constant 0 : index
    %894 = memref.load %arg2[%c21_357, %c0_358] : memref<32x4xf32, #tpu.memory_space<smem>>
    %895 = vector.broadcast %894 : f32 to vector<2x256xf32>
    %896 = arith.mulf %895, %893 : vector<2x256xf32>
    %897 = arith.addf %857, %896 : vector<2x256xf32>
    %c21_359 = arith.constant 21 : index
    %c1_360 = arith.constant 1 : index
    %898 = memref.load %arg2[%c21_359, %c1_360] : memref<32x4xf32, #tpu.memory_space<smem>>
    %899 = vector.broadcast %898 : f32 to vector<2x256xf32>
    %900 = arith.mulf %899, %893 : vector<2x256xf32>
    %901 = arith.addf %861, %900 : vector<2x256xf32>
    %c21_361 = arith.constant 21 : index
    %c2_362 = arith.constant 2 : index
    %902 = memref.load %arg2[%c21_361, %c2_362] : memref<32x4xf32, #tpu.memory_space<smem>>
    %903 = vector.broadcast %902 : f32 to vector<2x256xf32>
    %904 = arith.mulf %903, %893 : vector<2x256xf32>
    %905 = arith.addf %865, %904 : vector<2x256xf32>
    %c21_363 = arith.constant 21 : index
    %c3_364 = arith.constant 3 : index
    %906 = memref.load %arg2[%c21_363, %c3_364] : memref<32x4xf32, #tpu.memory_space<smem>>
    %907 = vector.broadcast %906 : f32 to vector<2x256xf32>
    %908 = arith.mulf %907, %893 : vector<2x256xf32>
    %909 = arith.addf %869, %908 : vector<2x256xf32>
    %910 = vector.extract_strided_slice %8 {offsets = [0, 22], sizes = [2, 1], strides = [1, 1]} : vector<2x32xf32> to vector<2x1xf32>
    %c0_365 = arith.constant 0 : index
    %c22 = arith.constant 22 : index
    %911 = memref.load %arg1[%c0_365, %c22] : memref<4x32xf32, #tpu.memory_space<smem>>
    %912 = vector.broadcast %911 : f32 to vector<2x256xf32>
    %913 = arith.mulf %912, %14 : vector<2x256xf32>
    %914 = vector.broadcast %910 : vector<2x1xf32> to vector<2x256xf32>
    %915 = arith.addf %914, %913 : vector<2x256xf32>
    %c1_366 = arith.constant 1 : index
    %c22_367 = arith.constant 22 : index
    %916 = memref.load %arg1[%c1_366, %c22_367] : memref<4x32xf32, #tpu.memory_space<smem>>
    %917 = vector.broadcast %916 : f32 to vector<2x256xf32>
    %918 = arith.mulf %917, %15 : vector<2x256xf32>
    %919 = arith.addf %915, %918 : vector<2x256xf32>
    %c2_368 = arith.constant 2 : index
    %c22_369 = arith.constant 22 : index
    %920 = memref.load %arg1[%c2_368, %c22_369] : memref<4x32xf32, #tpu.memory_space<smem>>
    %921 = vector.broadcast %920 : f32 to vector<2x256xf32>
    %922 = arith.mulf %921, %16 : vector<2x256xf32>
    %923 = arith.addf %919, %922 : vector<2x256xf32>
    %c3_370 = arith.constant 3 : index
    %c22_371 = arith.constant 22 : index
    %924 = memref.load %arg1[%c3_370, %c22_371] : memref<4x32xf32, #tpu.memory_space<smem>>
    %925 = vector.broadcast %924 : f32 to vector<2x256xf32>
    %926 = arith.mulf %925, %17 : vector<2x256xf32>
    %927 = arith.addf %923, %926 : vector<2x256xf32>
    %928 = arith.negf %927 : vector<2x256xf32>
    %929 = math.exp %928 : vector<2x256xf32>
    %cst_372 = arith.constant 1.000000e+00 : f32
    %930 = vector.broadcast %cst_372 : f32 to vector<2x256xf32>
    %931 = arith.addf %930, %929 : vector<2x256xf32>
    %932 = arith.divf %930, %931 : vector<2x256xf32>
    %933 = arith.mulf %927, %932 : vector<2x256xf32>
    %c22_373 = arith.constant 22 : index
    %c0_374 = arith.constant 0 : index
    %934 = memref.load %arg2[%c22_373, %c0_374] : memref<32x4xf32, #tpu.memory_space<smem>>
    %935 = vector.broadcast %934 : f32 to vector<2x256xf32>
    %936 = arith.mulf %935, %933 : vector<2x256xf32>
    %937 = arith.addf %897, %936 : vector<2x256xf32>
    %c22_375 = arith.constant 22 : index
    %c1_376 = arith.constant 1 : index
    %938 = memref.load %arg2[%c22_375, %c1_376] : memref<32x4xf32, #tpu.memory_space<smem>>
    %939 = vector.broadcast %938 : f32 to vector<2x256xf32>
    %940 = arith.mulf %939, %933 : vector<2x256xf32>
    %941 = arith.addf %901, %940 : vector<2x256xf32>
    %c22_377 = arith.constant 22 : index
    %c2_378 = arith.constant 2 : index
    %942 = memref.load %arg2[%c22_377, %c2_378] : memref<32x4xf32, #tpu.memory_space<smem>>
    %943 = vector.broadcast %942 : f32 to vector<2x256xf32>
    %944 = arith.mulf %943, %933 : vector<2x256xf32>
    %945 = arith.addf %905, %944 : vector<2x256xf32>
    %c22_379 = arith.constant 22 : index
    %c3_380 = arith.constant 3 : index
    %946 = memref.load %arg2[%c22_379, %c3_380] : memref<32x4xf32, #tpu.memory_space<smem>>
    %947 = vector.broadcast %946 : f32 to vector<2x256xf32>
    %948 = arith.mulf %947, %933 : vector<2x256xf32>
    %949 = arith.addf %909, %948 : vector<2x256xf32>
    %950 = vector.extract_strided_slice %8 {offsets = [0, 23], sizes = [2, 1], strides = [1, 1]} : vector<2x32xf32> to vector<2x1xf32>
    %c0_381 = arith.constant 0 : index
    %c23 = arith.constant 23 : index
    %951 = memref.load %arg1[%c0_381, %c23] : memref<4x32xf32, #tpu.memory_space<smem>>
    %952 = vector.broadcast %951 : f32 to vector<2x256xf32>
    %953 = arith.mulf %952, %14 : vector<2x256xf32>
    %954 = vector.broadcast %950 : vector<2x1xf32> to vector<2x256xf32>
    %955 = arith.addf %954, %953 : vector<2x256xf32>
    %c1_382 = arith.constant 1 : index
    %c23_383 = arith.constant 23 : index
    %956 = memref.load %arg1[%c1_382, %c23_383] : memref<4x32xf32, #tpu.memory_space<smem>>
    %957 = vector.broadcast %956 : f32 to vector<2x256xf32>
    %958 = arith.mulf %957, %15 : vector<2x256xf32>
    %959 = arith.addf %955, %958 : vector<2x256xf32>
    %c2_384 = arith.constant 2 : index
    %c23_385 = arith.constant 23 : index
    %960 = memref.load %arg1[%c2_384, %c23_385] : memref<4x32xf32, #tpu.memory_space<smem>>
    %961 = vector.broadcast %960 : f32 to vector<2x256xf32>
    %962 = arith.mulf %961, %16 : vector<2x256xf32>
    %963 = arith.addf %959, %962 : vector<2x256xf32>
    %c3_386 = arith.constant 3 : index
    %c23_387 = arith.constant 23 : index
    %964 = memref.load %arg1[%c3_386, %c23_387] : memref<4x32xf32, #tpu.memory_space<smem>>
    %965 = vector.broadcast %964 : f32 to vector<2x256xf32>
    %966 = arith.mulf %965, %17 : vector<2x256xf32>
    %967 = arith.addf %963, %966 : vector<2x256xf32>
    %968 = arith.negf %967 : vector<2x256xf32>
    %969 = math.exp %968 : vector<2x256xf32>
    %cst_388 = arith.constant 1.000000e+00 : f32
    %970 = vector.broadcast %cst_388 : f32 to vector<2x256xf32>
    %971 = arith.addf %970, %969 : vector<2x256xf32>
    %972 = arith.divf %970, %971 : vector<2x256xf32>
    %973 = arith.mulf %967, %972 : vector<2x256xf32>
    %c23_389 = arith.constant 23 : index
    %c0_390 = arith.constant 0 : index
    %974 = memref.load %arg2[%c23_389, %c0_390] : memref<32x4xf32, #tpu.memory_space<smem>>
    %975 = vector.broadcast %974 : f32 to vector<2x256xf32>
    %976 = arith.mulf %975, %973 : vector<2x256xf32>
    %977 = arith.addf %937, %976 : vector<2x256xf32>
    %c23_391 = arith.constant 23 : index
    %c1_392 = arith.constant 1 : index
    %978 = memref.load %arg2[%c23_391, %c1_392] : memref<32x4xf32, #tpu.memory_space<smem>>
    %979 = vector.broadcast %978 : f32 to vector<2x256xf32>
    %980 = arith.mulf %979, %973 : vector<2x256xf32>
    %981 = arith.addf %941, %980 : vector<2x256xf32>
    %c23_393 = arith.constant 23 : index
    %c2_394 = arith.constant 2 : index
    %982 = memref.load %arg2[%c23_393, %c2_394] : memref<32x4xf32, #tpu.memory_space<smem>>
    %983 = vector.broadcast %982 : f32 to vector<2x256xf32>
    %984 = arith.mulf %983, %973 : vector<2x256xf32>
    %985 = arith.addf %945, %984 : vector<2x256xf32>
    %c23_395 = arith.constant 23 : index
    %c3_396 = arith.constant 3 : index
    %986 = memref.load %arg2[%c23_395, %c3_396] : memref<32x4xf32, #tpu.memory_space<smem>>
    %987 = vector.broadcast %986 : f32 to vector<2x256xf32>
    %988 = arith.mulf %987, %973 : vector<2x256xf32>
    %989 = arith.addf %949, %988 : vector<2x256xf32>
    %990 = vector.extract_strided_slice %8 {offsets = [0, 24], sizes = [2, 1], strides = [1, 1]} : vector<2x32xf32> to vector<2x1xf32>
    %c0_397 = arith.constant 0 : index
    %c24 = arith.constant 24 : index
    %991 = memref.load %arg1[%c0_397, %c24] : memref<4x32xf32, #tpu.memory_space<smem>>
    %992 = vector.broadcast %991 : f32 to vector<2x256xf32>
    %993 = arith.mulf %992, %14 : vector<2x256xf32>
    %994 = vector.broadcast %990 : vector<2x1xf32> to vector<2x256xf32>
    %995 = arith.addf %994, %993 : vector<2x256xf32>
    %c1_398 = arith.constant 1 : index
    %c24_399 = arith.constant 24 : index
    %996 = memref.load %arg1[%c1_398, %c24_399] : memref<4x32xf32, #tpu.memory_space<smem>>
    %997 = vector.broadcast %996 : f32 to vector<2x256xf32>
    %998 = arith.mulf %997, %15 : vector<2x256xf32>
    %999 = arith.addf %995, %998 : vector<2x256xf32>
    %c2_400 = arith.constant 2 : index
    %c24_401 = arith.constant 24 : index
    %1000 = memref.load %arg1[%c2_400, %c24_401] : memref<4x32xf32, #tpu.memory_space<smem>>
    %1001 = vector.broadcast %1000 : f32 to vector<2x256xf32>
    %1002 = arith.mulf %1001, %16 : vector<2x256xf32>
    %1003 = arith.addf %999, %1002 : vector<2x256xf32>
    %c3_402 = arith.constant 3 : index
    %c24_403 = arith.constant 24 : index
    %1004 = memref.load %arg1[%c3_402, %c24_403] : memref<4x32xf32, #tpu.memory_space<smem>>
    %1005 = vector.broadcast %1004 : f32 to vector<2x256xf32>
    %1006 = arith.mulf %1005, %17 : vector<2x256xf32>
    %1007 = arith.addf %1003, %1006 : vector<2x256xf32>
    %1008 = arith.negf %1007 : vector<2x256xf32>
    %1009 = math.exp %1008 : vector<2x256xf32>
    %cst_404 = arith.constant 1.000000e+00 : f32
    %1010 = vector.broadcast %cst_404 : f32 to vector<2x256xf32>
    %1011 = arith.addf %1010, %1009 : vector<2x256xf32>
    %1012 = arith.divf %1010, %1011 : vector<2x256xf32>
    %1013 = arith.mulf %1007, %1012 : vector<2x256xf32>
    %c24_405 = arith.constant 24 : index
    %c0_406 = arith.constant 0 : index
    %1014 = memref.load %arg2[%c24_405, %c0_406] : memref<32x4xf32, #tpu.memory_space<smem>>
    %1015 = vector.broadcast %1014 : f32 to vector<2x256xf32>
    %1016 = arith.mulf %1015, %1013 : vector<2x256xf32>
    %1017 = arith.addf %977, %1016 : vector<2x256xf32>
    %c24_407 = arith.constant 24 : index
    %c1_408 = arith.constant 1 : index
    %1018 = memref.load %arg2[%c24_407, %c1_408] : memref<32x4xf32, #tpu.memory_space<smem>>
    %1019 = vector.broadcast %1018 : f32 to vector<2x256xf32>
    %1020 = arith.mulf %1019, %1013 : vector<2x256xf32>
    %1021 = arith.addf %981, %1020 : vector<2x256xf32>
    %c24_409 = arith.constant 24 : index
    %c2_410 = arith.constant 2 : index
    %1022 = memref.load %arg2[%c24_409, %c2_410] : memref<32x4xf32, #tpu.memory_space<smem>>
    %1023 = vector.broadcast %1022 : f32 to vector<2x256xf32>
    %1024 = arith.mulf %1023, %1013 : vector<2x256xf32>
    %1025 = arith.addf %985, %1024 : vector<2x256xf32>
    %c24_411 = arith.constant 24 : index
    %c3_412 = arith.constant 3 : index
    %1026 = memref.load %arg2[%c24_411, %c3_412] : memref<32x4xf32, #tpu.memory_space<smem>>
    %1027 = vector.broadcast %1026 : f32 to vector<2x256xf32>
    %1028 = arith.mulf %1027, %1013 : vector<2x256xf32>
    %1029 = arith.addf %989, %1028 : vector<2x256xf32>
    %1030 = vector.extract_strided_slice %8 {offsets = [0, 25], sizes = [2, 1], strides = [1, 1]} : vector<2x32xf32> to vector<2x1xf32>
    %c0_413 = arith.constant 0 : index
    %c25 = arith.constant 25 : index
    %1031 = memref.load %arg1[%c0_413, %c25] : memref<4x32xf32, #tpu.memory_space<smem>>
    %1032 = vector.broadcast %1031 : f32 to vector<2x256xf32>
    %1033 = arith.mulf %1032, %14 : vector<2x256xf32>
    %1034 = vector.broadcast %1030 : vector<2x1xf32> to vector<2x256xf32>
    %1035 = arith.addf %1034, %1033 : vector<2x256xf32>
    %c1_414 = arith.constant 1 : index
    %c25_415 = arith.constant 25 : index
    %1036 = memref.load %arg1[%c1_414, %c25_415] : memref<4x32xf32, #tpu.memory_space<smem>>
    %1037 = vector.broadcast %1036 : f32 to vector<2x256xf32>
    %1038 = arith.mulf %1037, %15 : vector<2x256xf32>
    %1039 = arith.addf %1035, %1038 : vector<2x256xf32>
    %c2_416 = arith.constant 2 : index
    %c25_417 = arith.constant 25 : index
    %1040 = memref.load %arg1[%c2_416, %c25_417] : memref<4x32xf32, #tpu.memory_space<smem>>
    %1041 = vector.broadcast %1040 : f32 to vector<2x256xf32>
    %1042 = arith.mulf %1041, %16 : vector<2x256xf32>
    %1043 = arith.addf %1039, %1042 : vector<2x256xf32>
    %c3_418 = arith.constant 3 : index
    %c25_419 = arith.constant 25 : index
    %1044 = memref.load %arg1[%c3_418, %c25_419] : memref<4x32xf32, #tpu.memory_space<smem>>
    %1045 = vector.broadcast %1044 : f32 to vector<2x256xf32>
    %1046 = arith.mulf %1045, %17 : vector<2x256xf32>
    %1047 = arith.addf %1043, %1046 : vector<2x256xf32>
    %1048 = arith.negf %1047 : vector<2x256xf32>
    %1049 = math.exp %1048 : vector<2x256xf32>
    %cst_420 = arith.constant 1.000000e+00 : f32
    %1050 = vector.broadcast %cst_420 : f32 to vector<2x256xf32>
    %1051 = arith.addf %1050, %1049 : vector<2x256xf32>
    %1052 = arith.divf %1050, %1051 : vector<2x256xf32>
    %1053 = arith.mulf %1047, %1052 : vector<2x256xf32>
    %c25_421 = arith.constant 25 : index
    %c0_422 = arith.constant 0 : index
    %1054 = memref.load %arg2[%c25_421, %c0_422] : memref<32x4xf32, #tpu.memory_space<smem>>
    %1055 = vector.broadcast %1054 : f32 to vector<2x256xf32>
    %1056 = arith.mulf %1055, %1053 : vector<2x256xf32>
    %1057 = arith.addf %1017, %1056 : vector<2x256xf32>
    %c25_423 = arith.constant 25 : index
    %c1_424 = arith.constant 1 : index
    %1058 = memref.load %arg2[%c25_423, %c1_424] : memref<32x4xf32, #tpu.memory_space<smem>>
    %1059 = vector.broadcast %1058 : f32 to vector<2x256xf32>
    %1060 = arith.mulf %1059, %1053 : vector<2x256xf32>
    %1061 = arith.addf %1021, %1060 : vector<2x256xf32>
    %c25_425 = arith.constant 25 : index
    %c2_426 = arith.constant 2 : index
    %1062 = memref.load %arg2[%c25_425, %c2_426] : memref<32x4xf32, #tpu.memory_space<smem>>
    %1063 = vector.broadcast %1062 : f32 to vector<2x256xf32>
    %1064 = arith.mulf %1063, %1053 : vector<2x256xf32>
    %1065 = arith.addf %1025, %1064 : vector<2x256xf32>
    %c25_427 = arith.constant 25 : index
    %c3_428 = arith.constant 3 : index
    %1066 = memref.load %arg2[%c25_427, %c3_428] : memref<32x4xf32, #tpu.memory_space<smem>>
    %1067 = vector.broadcast %1066 : f32 to vector<2x256xf32>
    %1068 = arith.mulf %1067, %1053 : vector<2x256xf32>
    %1069 = arith.addf %1029, %1068 : vector<2x256xf32>
    %1070 = vector.extract_strided_slice %8 {offsets = [0, 26], sizes = [2, 1], strides = [1, 1]} : vector<2x32xf32> to vector<2x1xf32>
    %c0_429 = arith.constant 0 : index
    %c26 = arith.constant 26 : index
    %1071 = memref.load %arg1[%c0_429, %c26] : memref<4x32xf32, #tpu.memory_space<smem>>
    %1072 = vector.broadcast %1071 : f32 to vector<2x256xf32>
    %1073 = arith.mulf %1072, %14 : vector<2x256xf32>
    %1074 = vector.broadcast %1070 : vector<2x1xf32> to vector<2x256xf32>
    %1075 = arith.addf %1074, %1073 : vector<2x256xf32>
    %c1_430 = arith.constant 1 : index
    %c26_431 = arith.constant 26 : index
    %1076 = memref.load %arg1[%c1_430, %c26_431] : memref<4x32xf32, #tpu.memory_space<smem>>
    %1077 = vector.broadcast %1076 : f32 to vector<2x256xf32>
    %1078 = arith.mulf %1077, %15 : vector<2x256xf32>
    %1079 = arith.addf %1075, %1078 : vector<2x256xf32>
    %c2_432 = arith.constant 2 : index
    %c26_433 = arith.constant 26 : index
    %1080 = memref.load %arg1[%c2_432, %c26_433] : memref<4x32xf32, #tpu.memory_space<smem>>
    %1081 = vector.broadcast %1080 : f32 to vector<2x256xf32>
    %1082 = arith.mulf %1081, %16 : vector<2x256xf32>
    %1083 = arith.addf %1079, %1082 : vector<2x256xf32>
    %c3_434 = arith.constant 3 : index
    %c26_435 = arith.constant 26 : index
    %1084 = memref.load %arg1[%c3_434, %c26_435] : memref<4x32xf32, #tpu.memory_space<smem>>
    %1085 = vector.broadcast %1084 : f32 to vector<2x256xf32>
    %1086 = arith.mulf %1085, %17 : vector<2x256xf32>
    %1087 = arith.addf %1083, %1086 : vector<2x256xf32>
    %1088 = arith.negf %1087 : vector<2x256xf32>
    %1089 = math.exp %1088 : vector<2x256xf32>
    %cst_436 = arith.constant 1.000000e+00 : f32
    %1090 = vector.broadcast %cst_436 : f32 to vector<2x256xf32>
    %1091 = arith.addf %1090, %1089 : vector<2x256xf32>
    %1092 = arith.divf %1090, %1091 : vector<2x256xf32>
    %1093 = arith.mulf %1087, %1092 : vector<2x256xf32>
    %c26_437 = arith.constant 26 : index
    %c0_438 = arith.constant 0 : index
    %1094 = memref.load %arg2[%c26_437, %c0_438] : memref<32x4xf32, #tpu.memory_space<smem>>
    %1095 = vector.broadcast %1094 : f32 to vector<2x256xf32>
    %1096 = arith.mulf %1095, %1093 : vector<2x256xf32>
    %1097 = arith.addf %1057, %1096 : vector<2x256xf32>
    %c26_439 = arith.constant 26 : index
    %c1_440 = arith.constant 1 : index
    %1098 = memref.load %arg2[%c26_439, %c1_440] : memref<32x4xf32, #tpu.memory_space<smem>>
    %1099 = vector.broadcast %1098 : f32 to vector<2x256xf32>
    %1100 = arith.mulf %1099, %1093 : vector<2x256xf32>
    %1101 = arith.addf %1061, %1100 : vector<2x256xf32>
    %c26_441 = arith.constant 26 : index
    %c2_442 = arith.constant 2 : index
    %1102 = memref.load %arg2[%c26_441, %c2_442] : memref<32x4xf32, #tpu.memory_space<smem>>
    %1103 = vector.broadcast %1102 : f32 to vector<2x256xf32>
    %1104 = arith.mulf %1103, %1093 : vector<2x256xf32>
    %1105 = arith.addf %1065, %1104 : vector<2x256xf32>
    %c26_443 = arith.constant 26 : index
    %c3_444 = arith.constant 3 : index
    %1106 = memref.load %arg2[%c26_443, %c3_444] : memref<32x4xf32, #tpu.memory_space<smem>>
    %1107 = vector.broadcast %1106 : f32 to vector<2x256xf32>
    %1108 = arith.mulf %1107, %1093 : vector<2x256xf32>
    %1109 = arith.addf %1069, %1108 : vector<2x256xf32>
    %1110 = vector.extract_strided_slice %8 {offsets = [0, 27], sizes = [2, 1], strides = [1, 1]} : vector<2x32xf32> to vector<2x1xf32>
    %c0_445 = arith.constant 0 : index
    %c27 = arith.constant 27 : index
    %1111 = memref.load %arg1[%c0_445, %c27] : memref<4x32xf32, #tpu.memory_space<smem>>
    %1112 = vector.broadcast %1111 : f32 to vector<2x256xf32>
    %1113 = arith.mulf %1112, %14 : vector<2x256xf32>
    %1114 = vector.broadcast %1110 : vector<2x1xf32> to vector<2x256xf32>
    %1115 = arith.addf %1114, %1113 : vector<2x256xf32>
    %c1_446 = arith.constant 1 : index
    %c27_447 = arith.constant 27 : index
    %1116 = memref.load %arg1[%c1_446, %c27_447] : memref<4x32xf32, #tpu.memory_space<smem>>
    %1117 = vector.broadcast %1116 : f32 to vector<2x256xf32>
    %1118 = arith.mulf %1117, %15 : vector<2x256xf32>
    %1119 = arith.addf %1115, %1118 : vector<2x256xf32>
    %c2_448 = arith.constant 2 : index
    %c27_449 = arith.constant 27 : index
    %1120 = memref.load %arg1[%c2_448, %c27_449] : memref<4x32xf32, #tpu.memory_space<smem>>
    %1121 = vector.broadcast %1120 : f32 to vector<2x256xf32>
    %1122 = arith.mulf %1121, %16 : vector<2x256xf32>
    %1123 = arith.addf %1119, %1122 : vector<2x256xf32>
    %c3_450 = arith.constant 3 : index
    %c27_451 = arith.constant 27 : index
    %1124 = memref.load %arg1[%c3_450, %c27_451] : memref<4x32xf32, #tpu.memory_space<smem>>
    %1125 = vector.broadcast %1124 : f32 to vector<2x256xf32>
    %1126 = arith.mulf %1125, %17 : vector<2x256xf32>
    %1127 = arith.addf %1123, %1126 : vector<2x256xf32>
    %1128 = arith.negf %1127 : vector<2x256xf32>
    %1129 = math.exp %1128 : vector<2x256xf32>
    %cst_452 = arith.constant 1.000000e+00 : f32
    %1130 = vector.broadcast %cst_452 : f32 to vector<2x256xf32>
    %1131 = arith.addf %1130, %1129 : vector<2x256xf32>
    %1132 = arith.divf %1130, %1131 : vector<2x256xf32>
    %1133 = arith.mulf %1127, %1132 : vector<2x256xf32>
    %c27_453 = arith.constant 27 : index
    %c0_454 = arith.constant 0 : index
    %1134 = memref.load %arg2[%c27_453, %c0_454] : memref<32x4xf32, #tpu.memory_space<smem>>
    %1135 = vector.broadcast %1134 : f32 to vector<2x256xf32>
    %1136 = arith.mulf %1135, %1133 : vector<2x256xf32>
    %1137 = arith.addf %1097, %1136 : vector<2x256xf32>
    %c27_455 = arith.constant 27 : index
    %c1_456 = arith.constant 1 : index
    %1138 = memref.load %arg2[%c27_455, %c1_456] : memref<32x4xf32, #tpu.memory_space<smem>>
    %1139 = vector.broadcast %1138 : f32 to vector<2x256xf32>
    %1140 = arith.mulf %1139, %1133 : vector<2x256xf32>
    %1141 = arith.addf %1101, %1140 : vector<2x256xf32>
    %c27_457 = arith.constant 27 : index
    %c2_458 = arith.constant 2 : index
    %1142 = memref.load %arg2[%c27_457, %c2_458] : memref<32x4xf32, #tpu.memory_space<smem>>
    %1143 = vector.broadcast %1142 : f32 to vector<2x256xf32>
    %1144 = arith.mulf %1143, %1133 : vector<2x256xf32>
    %1145 = arith.addf %1105, %1144 : vector<2x256xf32>
    %c27_459 = arith.constant 27 : index
    %c3_460 = arith.constant 3 : index
    %1146 = memref.load %arg2[%c27_459, %c3_460] : memref<32x4xf32, #tpu.memory_space<smem>>
    %1147 = vector.broadcast %1146 : f32 to vector<2x256xf32>
    %1148 = arith.mulf %1147, %1133 : vector<2x256xf32>
    %1149 = arith.addf %1109, %1148 : vector<2x256xf32>
    %1150 = vector.extract_strided_slice %8 {offsets = [0, 28], sizes = [2, 1], strides = [1, 1]} : vector<2x32xf32> to vector<2x1xf32>
    %c0_461 = arith.constant 0 : index
    %c28 = arith.constant 28 : index
    %1151 = memref.load %arg1[%c0_461, %c28] : memref<4x32xf32, #tpu.memory_space<smem>>
    %1152 = vector.broadcast %1151 : f32 to vector<2x256xf32>
    %1153 = arith.mulf %1152, %14 : vector<2x256xf32>
    %1154 = vector.broadcast %1150 : vector<2x1xf32> to vector<2x256xf32>
    %1155 = arith.addf %1154, %1153 : vector<2x256xf32>
    %c1_462 = arith.constant 1 : index
    %c28_463 = arith.constant 28 : index
    %1156 = memref.load %arg1[%c1_462, %c28_463] : memref<4x32xf32, #tpu.memory_space<smem>>
    %1157 = vector.broadcast %1156 : f32 to vector<2x256xf32>
    %1158 = arith.mulf %1157, %15 : vector<2x256xf32>
    %1159 = arith.addf %1155, %1158 : vector<2x256xf32>
    %c2_464 = arith.constant 2 : index
    %c28_465 = arith.constant 28 : index
    %1160 = memref.load %arg1[%c2_464, %c28_465] : memref<4x32xf32, #tpu.memory_space<smem>>
    %1161 = vector.broadcast %1160 : f32 to vector<2x256xf32>
    %1162 = arith.mulf %1161, %16 : vector<2x256xf32>
    %1163 = arith.addf %1159, %1162 : vector<2x256xf32>
    %c3_466 = arith.constant 3 : index
    %c28_467 = arith.constant 28 : index
    %1164 = memref.load %arg1[%c3_466, %c28_467] : memref<4x32xf32, #tpu.memory_space<smem>>
    %1165 = vector.broadcast %1164 : f32 to vector<2x256xf32>
    %1166 = arith.mulf %1165, %17 : vector<2x256xf32>
    %1167 = arith.addf %1163, %1166 : vector<2x256xf32>
    %1168 = arith.negf %1167 : vector<2x256xf32>
    %1169 = math.exp %1168 : vector<2x256xf32>
    %cst_468 = arith.constant 1.000000e+00 : f32
    %1170 = vector.broadcast %cst_468 : f32 to vector<2x256xf32>
    %1171 = arith.addf %1170, %1169 : vector<2x256xf32>
    %1172 = arith.divf %1170, %1171 : vector<2x256xf32>
    %1173 = arith.mulf %1167, %1172 : vector<2x256xf32>
    %c28_469 = arith.constant 28 : index
    %c0_470 = arith.constant 0 : index
    %1174 = memref.load %arg2[%c28_469, %c0_470] : memref<32x4xf32, #tpu.memory_space<smem>>
    %1175 = vector.broadcast %1174 : f32 to vector<2x256xf32>
    %1176 = arith.mulf %1175, %1173 : vector<2x256xf32>
    %1177 = arith.addf %1137, %1176 : vector<2x256xf32>
    %c28_471 = arith.constant 28 : index
    %c1_472 = arith.constant 1 : index
    %1178 = memref.load %arg2[%c28_471, %c1_472] : memref<32x4xf32, #tpu.memory_space<smem>>
    %1179 = vector.broadcast %1178 : f32 to vector<2x256xf32>
    %1180 = arith.mulf %1179, %1173 : vector<2x256xf32>
    %1181 = arith.addf %1141, %1180 : vector<2x256xf32>
    %c28_473 = arith.constant 28 : index
    %c2_474 = arith.constant 2 : index
    %1182 = memref.load %arg2[%c28_473, %c2_474] : memref<32x4xf32, #tpu.memory_space<smem>>
    %1183 = vector.broadcast %1182 : f32 to vector<2x256xf32>
    %1184 = arith.mulf %1183, %1173 : vector<2x256xf32>
    %1185 = arith.addf %1145, %1184 : vector<2x256xf32>
    %c28_475 = arith.constant 28 : index
    %c3_476 = arith.constant 3 : index
    %1186 = memref.load %arg2[%c28_475, %c3_476] : memref<32x4xf32, #tpu.memory_space<smem>>
    %1187 = vector.broadcast %1186 : f32 to vector<2x256xf32>
    %1188 = arith.mulf %1187, %1173 : vector<2x256xf32>
    %1189 = arith.addf %1149, %1188 : vector<2x256xf32>
    %1190 = vector.extract_strided_slice %8 {offsets = [0, 29], sizes = [2, 1], strides = [1, 1]} : vector<2x32xf32> to vector<2x1xf32>
    %c0_477 = arith.constant 0 : index
    %c29 = arith.constant 29 : index
    %1191 = memref.load %arg1[%c0_477, %c29] : memref<4x32xf32, #tpu.memory_space<smem>>
    %1192 = vector.broadcast %1191 : f32 to vector<2x256xf32>
    %1193 = arith.mulf %1192, %14 : vector<2x256xf32>
    %1194 = vector.broadcast %1190 : vector<2x1xf32> to vector<2x256xf32>
    %1195 = arith.addf %1194, %1193 : vector<2x256xf32>
    %c1_478 = arith.constant 1 : index
    %c29_479 = arith.constant 29 : index
    %1196 = memref.load %arg1[%c1_478, %c29_479] : memref<4x32xf32, #tpu.memory_space<smem>>
    %1197 = vector.broadcast %1196 : f32 to vector<2x256xf32>
    %1198 = arith.mulf %1197, %15 : vector<2x256xf32>
    %1199 = arith.addf %1195, %1198 : vector<2x256xf32>
    %c2_480 = arith.constant 2 : index
    %c29_481 = arith.constant 29 : index
    %1200 = memref.load %arg1[%c2_480, %c29_481] : memref<4x32xf32, #tpu.memory_space<smem>>
    %1201 = vector.broadcast %1200 : f32 to vector<2x256xf32>
    %1202 = arith.mulf %1201, %16 : vector<2x256xf32>
    %1203 = arith.addf %1199, %1202 : vector<2x256xf32>
    %c3_482 = arith.constant 3 : index
    %c29_483 = arith.constant 29 : index
    %1204 = memref.load %arg1[%c3_482, %c29_483] : memref<4x32xf32, #tpu.memory_space<smem>>
    %1205 = vector.broadcast %1204 : f32 to vector<2x256xf32>
    %1206 = arith.mulf %1205, %17 : vector<2x256xf32>
    %1207 = arith.addf %1203, %1206 : vector<2x256xf32>
    %1208 = arith.negf %1207 : vector<2x256xf32>
    %1209 = math.exp %1208 : vector<2x256xf32>
    %cst_484 = arith.constant 1.000000e+00 : f32
    %1210 = vector.broadcast %cst_484 : f32 to vector<2x256xf32>
    %1211 = arith.addf %1210, %1209 : vector<2x256xf32>
    %1212 = arith.divf %1210, %1211 : vector<2x256xf32>
    %1213 = arith.mulf %1207, %1212 : vector<2x256xf32>
    %c29_485 = arith.constant 29 : index
    %c0_486 = arith.constant 0 : index
    %1214 = memref.load %arg2[%c29_485, %c0_486] : memref<32x4xf32, #tpu.memory_space<smem>>
    %1215 = vector.broadcast %1214 : f32 to vector<2x256xf32>
    %1216 = arith.mulf %1215, %1213 : vector<2x256xf32>
    %1217 = arith.addf %1177, %1216 : vector<2x256xf32>
    %c29_487 = arith.constant 29 : index
    %c1_488 = arith.constant 1 : index
    %1218 = memref.load %arg2[%c29_487, %c1_488] : memref<32x4xf32, #tpu.memory_space<smem>>
    %1219 = vector.broadcast %1218 : f32 to vector<2x256xf32>
    %1220 = arith.mulf %1219, %1213 : vector<2x256xf32>
    %1221 = arith.addf %1181, %1220 : vector<2x256xf32>
    %c29_489 = arith.constant 29 : index
    %c2_490 = arith.constant 2 : index
    %1222 = memref.load %arg2[%c29_489, %c2_490] : memref<32x4xf32, #tpu.memory_space<smem>>
    %1223 = vector.broadcast %1222 : f32 to vector<2x256xf32>
    %1224 = arith.mulf %1223, %1213 : vector<2x256xf32>
    %1225 = arith.addf %1185, %1224 : vector<2x256xf32>
    %c29_491 = arith.constant 29 : index
    %c3_492 = arith.constant 3 : index
    %1226 = memref.load %arg2[%c29_491, %c3_492] : memref<32x4xf32, #tpu.memory_space<smem>>
    %1227 = vector.broadcast %1226 : f32 to vector<2x256xf32>
    %1228 = arith.mulf %1227, %1213 : vector<2x256xf32>
    %1229 = arith.addf %1189, %1228 : vector<2x256xf32>
    %1230 = vector.extract_strided_slice %8 {offsets = [0, 30], sizes = [2, 1], strides = [1, 1]} : vector<2x32xf32> to vector<2x1xf32>
    %c0_493 = arith.constant 0 : index
    %c30 = arith.constant 30 : index
    %1231 = memref.load %arg1[%c0_493, %c30] : memref<4x32xf32, #tpu.memory_space<smem>>
    %1232 = vector.broadcast %1231 : f32 to vector<2x256xf32>
    %1233 = arith.mulf %1232, %14 : vector<2x256xf32>
    %1234 = vector.broadcast %1230 : vector<2x1xf32> to vector<2x256xf32>
    %1235 = arith.addf %1234, %1233 : vector<2x256xf32>
    %c1_494 = arith.constant 1 : index
    %c30_495 = arith.constant 30 : index
    %1236 = memref.load %arg1[%c1_494, %c30_495] : memref<4x32xf32, #tpu.memory_space<smem>>
    %1237 = vector.broadcast %1236 : f32 to vector<2x256xf32>
    %1238 = arith.mulf %1237, %15 : vector<2x256xf32>
    %1239 = arith.addf %1235, %1238 : vector<2x256xf32>
    %c2_496 = arith.constant 2 : index
    %c30_497 = arith.constant 30 : index
    %1240 = memref.load %arg1[%c2_496, %c30_497] : memref<4x32xf32, #tpu.memory_space<smem>>
    %1241 = vector.broadcast %1240 : f32 to vector<2x256xf32>
    %1242 = arith.mulf %1241, %16 : vector<2x256xf32>
    %1243 = arith.addf %1239, %1242 : vector<2x256xf32>
    %c3_498 = arith.constant 3 : index
    %c30_499 = arith.constant 30 : index
    %1244 = memref.load %arg1[%c3_498, %c30_499] : memref<4x32xf32, #tpu.memory_space<smem>>
    %1245 = vector.broadcast %1244 : f32 to vector<2x256xf32>
    %1246 = arith.mulf %1245, %17 : vector<2x256xf32>
    %1247 = arith.addf %1243, %1246 : vector<2x256xf32>
    %1248 = arith.negf %1247 : vector<2x256xf32>
    %1249 = math.exp %1248 : vector<2x256xf32>
    %cst_500 = arith.constant 1.000000e+00 : f32
    %1250 = vector.broadcast %cst_500 : f32 to vector<2x256xf32>
    %1251 = arith.addf %1250, %1249 : vector<2x256xf32>
    %1252 = arith.divf %1250, %1251 : vector<2x256xf32>
    %1253 = arith.mulf %1247, %1252 : vector<2x256xf32>
    %c30_501 = arith.constant 30 : index
    %c0_502 = arith.constant 0 : index
    %1254 = memref.load %arg2[%c30_501, %c0_502] : memref<32x4xf32, #tpu.memory_space<smem>>
    %1255 = vector.broadcast %1254 : f32 to vector<2x256xf32>
    %1256 = arith.mulf %1255, %1253 : vector<2x256xf32>
    %1257 = arith.addf %1217, %1256 : vector<2x256xf32>
    %c30_503 = arith.constant 30 : index
    %c1_504 = arith.constant 1 : index
    %1258 = memref.load %arg2[%c30_503, %c1_504] : memref<32x4xf32, #tpu.memory_space<smem>>
    %1259 = vector.broadcast %1258 : f32 to vector<2x256xf32>
    %1260 = arith.mulf %1259, %1253 : vector<2x256xf32>
    %1261 = arith.addf %1221, %1260 : vector<2x256xf32>
    %c30_505 = arith.constant 30 : index
    %c2_506 = arith.constant 2 : index
    %1262 = memref.load %arg2[%c30_505, %c2_506] : memref<32x4xf32, #tpu.memory_space<smem>>
    %1263 = vector.broadcast %1262 : f32 to vector<2x256xf32>
    %1264 = arith.mulf %1263, %1253 : vector<2x256xf32>
    %1265 = arith.addf %1225, %1264 : vector<2x256xf32>
    %c30_507 = arith.constant 30 : index
    %c3_508 = arith.constant 3 : index
    %1266 = memref.load %arg2[%c30_507, %c3_508] : memref<32x4xf32, #tpu.memory_space<smem>>
    %1267 = vector.broadcast %1266 : f32 to vector<2x256xf32>
    %1268 = arith.mulf %1267, %1253 : vector<2x256xf32>
    %1269 = arith.addf %1229, %1268 : vector<2x256xf32>
    %1270 = vector.extract_strided_slice %8 {offsets = [0, 31], sizes = [2, 1], strides = [1, 1]} : vector<2x32xf32> to vector<2x1xf32>
    %c0_509 = arith.constant 0 : index
    %c31 = arith.constant 31 : index
    %1271 = memref.load %arg1[%c0_509, %c31] : memref<4x32xf32, #tpu.memory_space<smem>>
    %1272 = vector.broadcast %1271 : f32 to vector<2x256xf32>
    %1273 = arith.mulf %1272, %14 : vector<2x256xf32>
    %1274 = vector.broadcast %1270 : vector<2x1xf32> to vector<2x256xf32>
    %1275 = arith.addf %1274, %1273 : vector<2x256xf32>
    %c1_510 = arith.constant 1 : index
    %c31_511 = arith.constant 31 : index
    %1276 = memref.load %arg1[%c1_510, %c31_511] : memref<4x32xf32, #tpu.memory_space<smem>>
    %1277 = vector.broadcast %1276 : f32 to vector<2x256xf32>
    %1278 = arith.mulf %1277, %15 : vector<2x256xf32>
    %1279 = arith.addf %1275, %1278 : vector<2x256xf32>
    %c2_512 = arith.constant 2 : index
    %c31_513 = arith.constant 31 : index
    %1280 = memref.load %arg1[%c2_512, %c31_513] : memref<4x32xf32, #tpu.memory_space<smem>>
    %1281 = vector.broadcast %1280 : f32 to vector<2x256xf32>
    %1282 = arith.mulf %1281, %16 : vector<2x256xf32>
    %1283 = arith.addf %1279, %1282 : vector<2x256xf32>
    %c3_514 = arith.constant 3 : index
    %c31_515 = arith.constant 31 : index
    %1284 = memref.load %arg1[%c3_514, %c31_515] : memref<4x32xf32, #tpu.memory_space<smem>>
    %1285 = vector.broadcast %1284 : f32 to vector<2x256xf32>
    %1286 = arith.mulf %1285, %17 : vector<2x256xf32>
    %1287 = arith.addf %1283, %1286 : vector<2x256xf32>
    %1288 = arith.negf %1287 : vector<2x256xf32>
    %1289 = math.exp %1288 : vector<2x256xf32>
    %cst_516 = arith.constant 1.000000e+00 : f32
    %1290 = vector.broadcast %cst_516 : f32 to vector<2x256xf32>
    %1291 = arith.addf %1290, %1289 : vector<2x256xf32>
    %1292 = arith.divf %1290, %1291 : vector<2x256xf32>
    %1293 = arith.mulf %1287, %1292 : vector<2x256xf32>
    %c31_517 = arith.constant 31 : index
    %c0_518 = arith.constant 0 : index
    %1294 = memref.load %arg2[%c31_517, %c0_518] : memref<32x4xf32, #tpu.memory_space<smem>>
    %1295 = vector.broadcast %1294 : f32 to vector<2x256xf32>
    %1296 = arith.mulf %1295, %1293 : vector<2x256xf32>
    %1297 = arith.addf %1257, %1296 : vector<2x256xf32>
    %c31_519 = arith.constant 31 : index
    %c1_520 = arith.constant 1 : index
    %1298 = memref.load %arg2[%c31_519, %c1_520] : memref<32x4xf32, #tpu.memory_space<smem>>
    %1299 = vector.broadcast %1298 : f32 to vector<2x256xf32>
    %1300 = arith.mulf %1299, %1293 : vector<2x256xf32>
    %1301 = arith.addf %1261, %1300 : vector<2x256xf32>
    %c31_521 = arith.constant 31 : index
    %c2_522 = arith.constant 2 : index
    %1302 = memref.load %arg2[%c31_521, %c2_522] : memref<32x4xf32, #tpu.memory_space<smem>>
    %1303 = vector.broadcast %1302 : f32 to vector<2x256xf32>
    %1304 = arith.mulf %1303, %1293 : vector<2x256xf32>
    %1305 = arith.addf %1265, %1304 : vector<2x256xf32>
    %c31_523 = arith.constant 31 : index
    %c3_524 = arith.constant 3 : index
    %1306 = memref.load %arg2[%c31_523, %c3_524] : memref<32x4xf32, #tpu.memory_space<smem>>
    %1307 = vector.broadcast %1306 : f32 to vector<2x256xf32>
    %1308 = arith.mulf %1307, %1293 : vector<2x256xf32>
    %1309 = arith.addf %1269, %1308 : vector<2x256xf32>
    %cst_525 = arith.constant 0.000000e+00 : f32
    %1310 = vector.broadcast %cst_525 : f32 to vector<2x256xf32>
    %1311 = arith.subf %1297, %18 : vector<2x256xf32>
    %1312 = arith.mulf %1311, %1311 : vector<2x256xf32>
    %1313 = arith.addf %1310, %1312 : vector<2x256xf32>
    %1314 = arith.subf %1301, %19 : vector<2x256xf32>
    %1315 = arith.mulf %1314, %1314 : vector<2x256xf32>
    %1316 = arith.addf %1313, %1315 : vector<2x256xf32>
    %1317 = arith.subf %1305, %20 : vector<2x256xf32>
    %1318 = arith.mulf %1317, %1317 : vector<2x256xf32>
    %1319 = arith.addf %1316, %1318 : vector<2x256xf32>
    %1320 = arith.subf %1309, %21 : vector<2x256xf32>
    %1321 = arith.mulf %1320, %1320 : vector<2x256xf32>
    %1322 = arith.addf %1319, %1321 : vector<2x256xf32>
    %1323 = vector.broadcast %6 : vector<2x1xf32> to vector<2x256xf32>
    %1324 = arith.mulf %1322, %1323 : vector<2x256xf32>
    %1325 = vector.shape_cast %1324 : vector<2x256xf32> to vector<1x2x256xf32>
    %cst_526 = arith.constant dense<0.000000e+00> : vector<1xf32>
    %1326 = vector.multi_reduction <add>, %1325, %cst_526 [1, 2] : vector<1x2x256xf32> to vector<1xf32>
    %1327 = vector.shape_cast %1326 : vector<1xf32> to vector<1x1x1xf32>
    %1328 = vector.extract %1327[0, 0, 0] : f32 from vector<1x1x1xf32>
    %1329 = vector.broadcast %1328 : f32 to vector<8x128xf32>
    %c0_527 = arith.constant 0 : index
    %c0_528 = arith.constant 0 : index
    %1330 = vector.load %arg8[%c0_527, %c0_528] : memref<8x128xf32, #tpu.memory_space<vmem>>, vector<8x128xf32>
    tpu.vector_store %arg8[%c0_527, %c0_528], %1329 {strides = array<i32>} : memref<8x128xf32, #tpu.memory_space<vmem>>, vector<8x128xf32>,
    return
  }
  func.func @transform_0(%arg0: i32) -> (i32, i32) {
    %c0_i32 = arith.constant 0 : i32
    %c0_i32_0 = arith.constant 0 : i32
    %c0_i32_1 = arith.constant 0 : i32
    return %c0_i32, %c0_i32_0 : i32, i32
  }
  func.func @transform_1(%arg0: i32) -> (i32, i32) {
    %c0_i32 = arith.constant 0 : i32
    %c0_i32_0 = arith.constant 0 : i32
    %c0_i32_1 = arith.constant 0 : i32
    return %c0_i32, %c0_i32_0 : i32, i32
  }
  func.func @transform_2(%arg0: i32) -> i32 {
    %c0_i32 = arith.constant 0 : i32
    %c0_i32_0 = arith.constant 0 : i32
    return %c0_i32 : i32
  }
  func.func @transform_3(%arg0: i32) -> (i32, i32) {
    %c0_i32 = arith.constant 0 : i32
    %c0_i32_0 = arith.constant 0 : i32
    return %arg0, %c0_i32 : i32, i32
  }
  func.func @transform_4(%arg0: i32) -> (i32, i32) {
    %c0_i32 = arith.constant 0 : i32
    %c0_i32_0 = arith.constant 0 : i32
    return %arg0, %c0_i32 : i32, i32
  }
  func.func @transform_5(%arg0: i32) -> (i32, i32, i32) {
    %c0_i32 = arith.constant 0 : i32
    %c0_i32_0 = arith.constant 0 : i32
    %c0_i32_1 = arith.constant 0 : i32
    return %arg0, %c0_i32, %c0_i32_0 : i32, i32, i32
  }
  func.func @transform_6(%arg0: i32) -> (i32, i32, i32) {
    %c0_i32 = arith.constant 0 : i32
    %c0_i32_0 = arith.constant 0 : i32
    %c0_i32_1 = arith.constant 0 : i32
    return %arg0, %c0_i32, %c0_i32_0 : i32, i32, i32
  }
  func.func @transform_7(%arg0: i32) -> (i32, i32) {
    %c0_i32 = arith.constant 0 : i32
    %c0_i32_0 = arith.constant 0 : i32
    return %arg0, %c0_i32 : i32, i32
  }
}

</mosaic_0001>

<llo_original>
// kernel: tpu_custom_call.1
$region0: #{tpu_custom_call.1}
  #allocation0 [shape = 'u32[]', space=smem, size = 0x4, offset = 0x4, fixed_abs, tag = 'smem constant byte address 0x4 - core index']
  #allocation1 [shape = 'u32[144,128]{1,0:T(1,128)}', space=vmem, size = 0x12000, scoped, tag = 'internal scratch']
  %s0 = inlined_call_operand.vmem [shape: f32[4,32], index: 0, kind: input, shape index: {}]
  %s1 = inlined_call_operand.vmem [shape: f32[32,4], index: 1, kind: input, shape index: {}]
  %s2 = inlined_call_operand.vmem [shape: f32[4], index: 2, kind: input, shape index: {}]
  %s3 = inlined_call_operand.vmem [shape: f32[2,1024], index: 3, kind: input, shape index: {}]
  %s4 = inlined_call_operand.vmem [shape: f32[2,1024], index: 4, kind: input, shape index: {}]
  %s5 = inlined_call_operand.vmem [shape: f32[1,2,32], index: 5, kind: input, shape index: {}]
  %s6 = inlined_call_operand.vmem [shape: f32[1,2,3], index: 6, kind: input, shape index: {}]
  %s7 = inlined_call_operand.hbm [shape: f32[8,128], index: 7, kind: output, shape index: {}]
  %s8 = sld [smem:[#allocation0]]
  $region50: #{tpu_custom_call.1} parent=0
    _
  %s10 = ssub.s32 1, %s8
  %s11 = scalar_select 0, %s10, %s8
  $region1: #{tpu_custom_call.1} parent=0
    #allocation2 [shape = 'u8[2048]{0}', space=smem, size = 0x800, scoped, tag = 'input window, operand 0, single buffered']
    #allocation3 [shape = 's32[1]{0}', space=sflag, size = 0x4, scoped, tag = 'scoped memory for tpu_custom_call.1']
    #allocation4 [shape = 's32[1]{0}', space=sflag, size = 0x4, scoped, tag = 'scoped memory for tpu_custom_call.1']
    #allocation5 [shape = 'u8[16384]{0}', space=smem, size = 0x4000, scoped, tag = 'input window, operand 1, single buffered']
    #allocation6 [shape = 's32[1]{0}', space=sflag, size = 0x4, scoped, tag = 'scoped memory for tpu_custom_call.1']
    #allocation7 [shape = 'u8[512]{0}', space=smem, size = 0x200, scoped, tag = 'input window, operand 2, single buffered']
    #allocation8 [shape = 'u8[4096]{0}', space=vmem, size = 0x1000, scoped, tag = 'output window, operand 0, single buffered']
    %12 = vsyncpa [#allocation4], 0
    %13 = vsyncpa [#allocation6], 0
    %14 = vsyncpa [#allocation3], 0
    // Predicated region
    $region2: #{tpu_custom_call.1} parent=1 // pred_check
      _
    $region3: #{tpu_custom_call.1} parent=1 // pred_check_branch
      %16 = sbr.rel (0) target = $region5
    $region4: #{tpu_custom_call.1} parent=1 // pred_region
      %s18 = ssub.s32 64, 64
      %19 = vsyncadd [#allocation4], %s18
      %s21 = sshll.u32 %s0, 4
      %s22 = int_to_ptr.vmem [resolvable:$true] %s21
      %24 = dma.vmem_to_smem %s22, 64, [#allocation2], [#allocation4]
    $region5: #{tpu_custom_call.1} parent=1 // pred_fallthru
      _
    // Predicated region
    $region6: #{tpu_custom_call.1} parent=1 // pred_check
      _
    $region7: #{tpu_custom_call.1} parent=1 // pred_check_branch
      %26 = sbr.rel (0) target = $region9
    $region8: #{tpu_custom_call.1} parent=1 // pred_region
      %s28 = ssub.s32 512, 512
      %29 = vsyncadd [#allocation6], %s28
      %s30 = sshll.u32 %s1, 4
      %s31 = int_to_ptr.vmem [resolvable:$true] %s30
      %36 = dma.vmem_to_smem %s31, 512, [#allocation5], [#allocation6], 128, 128, 8
    $region9: #{tpu_custom_call.1} parent=1 // pred_fallthru
      _
    // Predicated region
    $region10: #{tpu_custom_call.1} parent=1 // pred_check
      _
    $region11: #{tpu_custom_call.1} parent=1 // pred_check_branch
      %38 = sbr.rel (0) target = $region13
    $region12: #{tpu_custom_call.1} parent=1 // pred_region
      %s40 = ssub.s32 16, 16
      %41 = vsyncadd [#allocation6], %s40
      %s43 = sshll.u32 %s2, 4
      %s44 = int_to_ptr.vmem [resolvable:$true] %s43
      %46 = dma.vmem_to_smem %s44, 16, [#allocation7], [#allocation6]
    $region13: #{tpu_custom_call.1} parent=1 // pred_fallthru
      _
    // Predicated region
    $region14: #{tpu_custom_call.1} parent=1 // pred_check
      _
    $region15: #{tpu_custom_call.1} parent=1 // pred_check_branch
      %48 = sbr.rel (0) target = $region17
    $region16: #{tpu_custom_call.1} parent=1 // pred_region
      _
    $region17: #{tpu_custom_call.1} parent=1 // pred_fallthru
      _
    // Predicated region
    $region18: #{tpu_custom_call.1} parent=1 // pred_check
      _
    $region19: #{tpu_custom_call.1} parent=1 // pred_check_branch
      %50 = sbr.rel (0) target = $region21
    $region20: #{tpu_custom_call.1} parent=1 // pred_region
      _
    $region21: #{tpu_custom_call.1} parent=1 // pred_fallthru
      _
    // Predicated region
    $region22: #{tpu_custom_call.1} parent=1 // pred_check
      _
    $region23: #{tpu_custom_call.1} parent=1 // pred_check_branch
      %52 = sbr.rel (0) target = $region25
    $region24: #{tpu_custom_call.1} parent=1 // pred_region
      _
    $region25: #{tpu_custom_call.1} parent=1 // pred_fallthru
      _
    // Predicated region
    $region26: #{tpu_custom_call.1} parent=1 // pred_check
      _
    $region27: #{tpu_custom_call.1} parent=1 // pred_check_branch
      %54 = sbr.rel (0) target = $region29
    $region28: #{tpu_custom_call.1} parent=1 // pred_region
      _
    $region29: #{tpu_custom_call.1} parent=1 // pred_fallthru
      _
    // Predicated region
    $region30: #{tpu_custom_call.1} parent=1 // pred_check
      _
    $region31: #{tpu_custom_call.1} parent=1 // pred_check_branch
      %56 = sbr.rel (0) target = $region33
    $region32: #{tpu_custom_call.1} parent=1 // pred_region
      %57 = dma.done [#allocation4], 64
    $region33: #{tpu_custom_call.1} parent=1 // pred_fallthru
      _
    // Predicated region
    $region34: #{tpu_custom_call.1} parent=1 // pred_check
      _
    $region35: #{tpu_custom_call.1} parent=1 // pred_check_branch
      %59 = sbr.rel (0) target = $region37
    $region36: #{tpu_custom_call.1} parent=1 // pred_region
      %60 = dma.done [#allocation6], 512
    $region37: #{tpu_custom_call.1} parent=1 // pred_fallthru
      _
    // Predicated region
    $region38: #{tpu_custom_call.1} parent=1 // pred_check
      _
    $region39: #{tpu_custom_call.1} parent=1 // pred_check_branch
      %62 = sbr.rel (0) target = $region41
    $region40: #{tpu_custom_call.1} parent=1 // pred_region
      %63 = dma.done [#allocation6], 16
    $region41: #{tpu_custom_call.1} parent=1 // pred_fallthru
      _
    %64 = sfence
    %v65 = vld [vmem:[%s3] sm:$0xff]
    %v66 = vld [vmem:[%s3 + $0x8] sm:$0xff]
    %v67 = vld [vmem:[%s4] sm:$0xff]
    %v68 = vld [vmem:[%s4 + $0x8] sm:$0xff]
    %v69 = vld [vmem:[%s6] sm:$0x3]
    %v70 = vld [vmem:[%s5] sm:$0x3]
    %72 = vset.pattern.permute.xlu0 0
    %73 = vperm.xlu0 %72, %v69
    %v74 = vpop.permute.xlu0 %73
    %v78 = vcombine.high %v65, %v65
    %v80 = vunpack.c.l.s4 1983009808
    %v81 = vunpack.c.0.s8 %v80
    %v82 = vlaneseq
    %v83 = vshrl.u32 %v82, 7
    %v84 = vsub.s32 %v81, %v83
    %v85 = vrot.slane %v65, %v84
    %v87 = vunpack.c.l.s4 1983009808
    %v88 = vunpack.c.0.s8 %v87
    %v89 = vlaneseq
    %v90 = vshrl.u32 %v89, 7
    %v91 = vsub.s32 %v88, %v90
    %v92 = vrot.slane %v78, %v91
    %v93 = vcombine.high %v85, %v85
    %v94 = vcombine.high %v92, %v92
    %v95 = vcombine.high %v66, %v66
    %v97 = vunpack.c.l.s4 1983009808
    %v98 = vunpack.c.0.s8 %v97
    %v99 = vlaneseq
    %v100 = vshrl.u32 %v99, 7
    %v101 = vsub.s32 %v98, %v100
    %v102 = vrot.slane %v66, %v101
    %v104 = vunpack.c.l.s4 1983009808
    %v105 = vunpack.c.0.s8 %v104
    %v106 = vlaneseq
    %v107 = vshrl.u32 %v106, 7
    %v108 = vsub.s32 %v105, %v107
    %v109 = vrot.slane %v95, %v108
    %v110 = vcombine.high %v102, %v102
    %v111 = vcombine.high %v109, %v109
    %v120 = vmul.f32 %v74, %v85
    %v121 = vmul.f32 %v74, %v93
    %v122 = vmul.f32 %v74, %v92
    %v123 = vmul.f32 %v74, %v94
    %v124 = vmul.f32 %v74, %v102
    %v125 = vmul.f32 %v74, %v110
    %v126 = vmul.f32 %v74, %v109
    %v127 = vmul.f32 %v74, %v111
    %128 = vset.pattern.permute.xlu0 1
    %129 = vperm.xlu0 %128, %v69
    %v130 = vpop.permute.xlu0 %129
    %v134 = vcombine.high %v67, %v67
    %v136 = vunpack.c.l.s4 1983009808
    %v137 = vunpack.c.0.s8 %v136
    %v138 = vlaneseq
    %v139 = vshrl.u32 %v138, 7
    %v140 = vsub.s32 %v137, %v139
    %v141 = vrot.slane %v67, %v140
    %v143 = vunpack.c.l.s4 1983009808
    %v144 = vunpack.c.0.s8 %v143
    %v145 = vlaneseq
    %v146 = vshrl.u32 %v145, 7
    %v147 = vsub.s32 %v144, %v146
    %v148 = vrot.slane %v134, %v147
    %v149 = vcombine.high %v141, %v141
    %v150 = vcombine.high %v148, %v148
    %v151 = vcombine.high %v68, %v68
    %v153 = vunpack.c.l.s4 1983009808
    %v154 = vunpack.c.0.s8 %v153
    %v155 = vlaneseq
    %v156 = vshrl.u32 %v155, 7
    %v157 = vsub.s32 %v154, %v156
    %v158 = vrot.slane %v68, %v157
    %v160 = vunpack.c.l.s4 1983009808
    %v161 = vunpack.c.0.s8 %v160
    %v162 = vlaneseq
    %v163 = vshrl.u32 %v162, 7
    %v164 = vsub.s32 %v161, %v163
    %v165 = vrot.slane %v151, %v164
    %v166 = vcombine.high %v158, %v158
    %v167 = vcombine.high %v165, %v165
    %v176 = vmul.f32 %v130, %v141
    %v177 = vmul.f32 %v130, %v149
    %v178 = vmul.f32 %v130, %v148
    %v179 = vmul.f32 %v130, %v150
    %v180 = vmul.f32 %v130, %v158
    %v181 = vmul.f32 %v130, %v166
    %v182 = vmul.f32 %v130, %v165
    %v183 = vmul.f32 %v130, %v167
    %v184 = vadd.f32 %v120, %v176
    %v185 = vadd.f32 %v121, %v177
    %v186 = vadd.f32 %v122, %v178
    %v187 = vadd.f32 %v123, %v179
    %v188 = vadd.f32 %v124, %v180
    %v189 = vadd.f32 %v125, %v181
    %v190 = vadd.f32 %v126, %v182
    %v191 = vadd.f32 %v127, %v183
    %s192 = sld [smem:[#allocation7]]
    %v193 = vstv %s192
    %s194 = sld [smem:[#allocation7 + $0x1]]
    %v195 = vstv %s194
    %s196 = sld [smem:[#allocation7 + $0x2]]
    %v197 = vstv %s196
    %s198 = sld [smem:[#allocation7 + $0x3]]
    %v199 = vstv %s198
    %s200 = sld [smem:[#allocation2]]
    %v201 = vstv %s200
    %v202 = vmul.f32 %v201, %v184
    %v203 = vmul.f32 %v201, %v185
    %205 = vset.pattern.permute.xlu0 0
    %206 = vperm.xlu0 %205, %v70
    %v207 = vpop.permute.xlu0 %206
    %v209 = vadd.f32 %v207, %v202
    %v210 = vadd.f32 %v207, %v203
    %s211 = sld [smem:[#allocation2 + $0x80]]
    %v212 = vstv %s211
    %v213 = vmul.f32 %v212, %v186
    %v214 = vmul.f32 %v212, %v187
    %v215 = vadd.f32 %v209, %v213
    %v216 = vadd.f32 %v210, %v214
    %s217 = sld [smem:[#allocation2 + $0x100]]
    %v218 = vstv %s217
    %v219 = vmul.f32 %v218, %v188
    %v220 = vmul.f32 %v218, %v189
    %v221 = vadd.f32 %v215, %v219
    %v222 = vadd.f32 %v216, %v220
    %s223 = sld [smem:[#allocation2 + $0x180]]
    %v224 = vstv %s223
    %v225 = vmul.f32 %v224, %v190
    %v226 = vmul.f32 %v224, %v191
    %v227 = vadd.f32 %v221, %v225
    %v228 = vadd.f32 %v222, %v226
    %v229 = vxor.u32 %v227, 2147483648
    %v230 = vxor.u32 %v228, 2147483648
    %v231 = vmul.f32 %v229, 1.442695
    %v232 = vpow.pop %v231
    %v233 = vmul.f32 %v230, 1.442695
    %v234 = vpow.pop %v233
    %v235 = vadd.f32 %v232, 1.0
    %v236 = vadd.f32 %v234, 1.0
    %v237 = vrcp.pop %v235
    %v238 = vmul.f32 1.0, %v237
    %v239 = vrcp.pop %v236
    %v240 = vmul.f32 1.0, %v239
    %v241 = vmul.f32 %v227, %v238
    %v242 = vmul.f32 %v228, %v240
    %s243 = sld [smem:[#allocation5]]
    %v244 = vstv %s243
    %v245 = vmul.f32 %v244, %v241
    %v246 = vmul.f32 %v244, %v242
    %v247 = vadd.f32 %v193, %v245
    %v248 = vadd.f32 %v193, %v246
    %s249 = sld [smem:[#allocation5 + $0x1]]
    %v250 = vstv %s249
    %v251 = vmul.f32 %v250, %v241
    %v252 = vmul.f32 %v250, %v242
    %v253 = vadd.f32 %v195, %v251
    %v254 = vadd.f32 %v195, %v252
    %s255 = sld [smem:[#allocation5 + $0x2]]
    %v256 = vstv %s255
    %v257 = vmul.f32 %v256, %v241
    %v258 = vmul.f32 %v256, %v242
    %v259 = vadd.f32 %v197, %v257
    %v260 = vadd.f32 %v197, %v258
    %s261 = sld [smem:[#allocation5 + $0x3]]
    %v262 = vstv %s261
    %v263 = vmul.f32 %v262, %v241
    %v264 = vmul.f32 %v262, %v242
    %v265 = vadd.f32 %v199, %v263
    %v266 = vadd.f32 %v199, %v264
    %s267 = sld [smem:[#allocation2 + $0x1]]
    %v268 = vstv %s267
    %v269 = vmul.f32 %v268, %v184
    %v270 = vmul.f32 %v268, %v185
    %271 = vset.pattern.permute.xlu0 1
    %272 = vperm.xlu0 %271, %v70
    %v273 = vpop.permute.xlu0 %272
    %v275 = vadd.f32 %v273, %v269
    %v276 = vadd.f32 %v273, %v270
    %s277 = sld [smem:[#allocation2 + $0x81]]
    %v278 = vstv %s277
    %v279 = vmul.f32 %v278, %v186
    %v280 = vmul.f32 %v278, %v187
    %v281 = vadd.f32 %v275, %v279
    %v282 = vadd.f32 %v276, %v280
    %s283 = sld [smem:[#allocation2 + $0x101]]
    %v284 = vstv %s283
    %v285 = vmul.f32 %v284, %v188
    %v286 = vmul.f32 %v284, %v189
    %v287 = vadd.f32 %v281, %v285
    %v288 = vadd.f32 %v282, %v286
    %s289 = sld [smem:[#allocation2 + $0x181]]
    %v290 = vstv %s289
    %v291 = vmul.f32 %v290, %v190
    %v292 = vmul.f32 %v290, %v191
    %v293 = vadd.f32 %v287, %v291
    %v294 = vadd.f32 %v288, %v292
    %v295 = vxor.u32 %v293, 2147483648
    %v296 = vxor.u32 %v294, 2147483648
    %v297 = vmul.f32 %v295, 1.442695
    %v298 = vpow.pop %v297
    %v299 = vmul.f32 %v296, 1.442695
    %v300 = vpow.pop %v299
    %v301 = vadd.f32 %v298, 1.0
    %v302 = vadd.f32 %v300, 1.0
    %v303 = vrcp.pop %v301
    %v304 = vmul.f32 1.0, %v303
    %v305 = vrcp.pop %v302
    %v306 = vmul.f32 1.0, %v305
    %v307 = vmul.f32 %v293, %v304
    %v308 = vmul.f32 %v294, %v306
    %s309 = sld [smem:[#allocation5 + $0x80]]
    %v310 = vstv %s309
    %v311 = vmul.f32 %v310, %v307
    %v312 = vmul.f32 %v310, %v308
    %v313 = vadd.f32 %v247, %v311
    %v314 = vadd.f32 %v248, %v312
    %s315 = sld [smem:[#allocation5 + $0x81]]
    %v316 = vstv %s315
    %v317 = vmul.f32 %v316, %v307
    %v318 = vmul.f32 %v316, %v308
    %v319 = vadd.f32 %v253, %v317
    %v320 = vadd.f32 %v254, %v318
    %s321 = sld [smem:[#allocation5 + $0x82]]
    %v322 = vstv %s321
    %v323 = vmul.f32 %v322, %v307
    %v324 = vmul.f32 %v322, %v308
    %v325 = vadd.f32 %v259, %v323
    %v326 = vadd.f32 %v260, %v324
    %s327 = sld [smem:[#allocation5 + $0x83]]
    %v328 = vstv %s327
    %v329 = vmul.f32 %v328, %v307
    %v330 = vmul.f32 %v328, %v308
    %v331 = vadd.f32 %v265, %v329
    %v332 = vadd.f32 %v266, %v330
    %s333 = sld [smem:[#allocation2 + $0x2]]
    %v334 = vstv %s333
    %v335 = vmul.f32 %v334, %v184
    %v336 = vmul.f32 %v334, %v185
    %337 = vset.pattern.permute.xlu0 2
    %338 = vperm.xlu0 %337, %v70
    %v339 = vpop.permute.xlu0 %338
    %v341 = vadd.f32 %v339, %v335
    %v342 = vadd.f32 %v339, %v336
    %s343 = sld [smem:[#allocation2 + $0x82]]
    %v344 = vstv %s343
    %v345 = vmul.f32 %v344, %v186
    %v346 = vmul.f32 %v344, %v187
    %v347 = vadd.f32 %v341, %v345
    %v348 = vadd.f32 %v342, %v346
    %s349 = sld [smem:[#allocation2 + $0x102]]
    %v350 = vstv %s349
    %v351 = vmul.f32 %v350, %v188
    %v352 = vmul.f32 %v350, %v189
    %v353 = vadd.f32 %v347, %v351
    %v354 = vadd.f32 %v348, %v352
    %s355 = sld [smem:[#allocation2 + $0x182]]
    %v356 = vstv %s355
    %v357 = vmul.f32 %v356, %v190
    %v358 = vmul.f32 %v356, %v191
    %v359 = vadd.f32 %v353, %v357
    %v360 = vadd.f32 %v354, %v358
    %v361 = vxor.u32 %v359, 2147483648
    %v362 = vxor.u32 %v360, 2147483648
    %v363 = vmul.f32 %v361, 1.442695
    %v364 = vpow.pop %v363
    %v365 = vmul.f32 %v362, 1.442695
    %v366 = vpow.pop %v365
    %v367 = vadd.f32 %v364, 1.0
    %v368 = vadd.f32 %v366, 1.0
    %v369 = vrcp.pop %v367
    %v370 = vmul.f32 1.0, %v369
    %v371 = vrcp.pop %v368
    %v372 = vmul.f32 1.0, %v371
    %v373 = vmul.f32 %v359, %v370
    %v374 = vmul.f32 %v360, %v372
    %s375 = sld [smem:[#allocation5 + $0x100]]
    %v376 = vstv %s375
    %v377 = vmul.f32 %v376, %v373
    %v378 = vmul.f32 %v376, %v374
    %v379 = vadd.f32 %v313, %v377
    %v380 = vadd.f32 %v314, %v378
    %s381 = sld [smem:[#allocation5 + $0x101]]
    %v382 = vstv %s381
    %v383 = vmul.f32 %v382, %v373
    %v384 = vmul.f32 %v382, %v374
    %v385 = vadd.f32 %v319, %v383
    %v386 = vadd.f32 %v320, %v384
    %s387 = sld [smem:[#allocation5 + $0x102]]
    %v388 = vstv %s387
    %v389 = vmul.f32 %v388, %v373
    %v390 = vmul.f32 %v388, %v374
    %v391 = vadd.f32 %v325, %v389
    %v392 = vadd.f32 %v326, %v390
    %s393 = sld [smem:[#allocation5 + $0x103]]
    %v394 = vstv %s393
    %v395 = vmul.f32 %v394, %v373
    %v396 = vmul.f32 %v394, %v374
    %v397 = vadd.f32 %v331, %v395
    %v398 = vadd.f32 %v332, %v396
    %s399 = sld [smem:[#allocation2 + $0x3]]
    %v400 = vstv %s399
    %v401 = vmul.f32 %v400, %v184
    %v402 = vmul.f32 %v400, %v185
    %403 = vset.pattern.permute.xlu0 3
    %404 = vperm.xlu0 %403, %v70
    %v405 = vpop.permute.xlu0 %404
    %v407 = vadd.f32 %v405, %v401
    %v408 = vadd.f32 %v405, %v402
    %s409 = sld [smem:[#allocation2 + $0x83]]
    %v410 = vstv %s409
    %v411 = vmul.f32 %v410, %v186
    %v412 = vmul.f32 %v410, %v187
    %v413 = vadd.f32 %v407, %v411
    %v414 = vadd.f32 %v408, %v412
    %s415 = sld [smem:[#allocation2 + $0x103]]
    %v416 = vstv %s415
    %v417 = vmul.f32 %v416, %v188
    %v418 = vmul.f32 %v416, %v189
    %v419 = vadd.f32 %v413, %v417
    %v420 = vadd.f32 %v414, %v418
    %s421 = sld [smem:[#allocation2 + $0x183]]
    %v422 = vstv %s421
    %v423 = vmul.f32 %v422, %v190
    %v424 = vmul.f32 %v422, %v191
    %v425 = vadd.f32 %v419, %v423
    %v426 = vadd.f32 %v420, %v424
    %v427 = vxor.u32 %v425, 2147483648
    %v428 = vxor.u32 %v426, 2147483648
    %v429 = vmul.f32 %v427, 1.442695
    %v430 = vpow.pop %v429
    %v431 = vmul.f32 %v428, 1.442695
    %v432 = vpow.pop %v431
    %v433 = vadd.f32 %v430, 1.0
    %v434 = vadd.f32 %v432, 1.0
    %v435 = vrcp.pop %v433
    %v436 = vmul.f32 1.0, %v435
    %v437 = vrcp.pop %v434
    %v438 = vmul.f32 1.0, %v437
    %v439 = vmul.f32 %v425, %v436
    %v440 = vmul.f32 %v426, %v438
    %s441 = sld [smem:[#allocation5 + $0x180]]
    %v442 = vstv %s441
    %v443 = vmul.f32 %v442, %v439
    %v444 = vmul.f32 %v442, %v440
    %v445 = vadd.f32 %v379, %v443
    %v446 = vadd.f32 %v380, %v444
    %s447 = sld [smem:[#allocation5 + $0x181]]
    %v448 = vstv %s447
    %v449 = vmul.f32 %v448, %v439
    %v450 = vmul.f32 %v448, %v440
    %v451 = vadd.f32 %v385, %v449
    %v452 = vadd.f32 %v386, %v450
    %s453 = sld [smem:[#allocation5 + $0x182]]
    %v454 = vstv %s453
    %v455 = vmul.f32 %v454, %v439
    %v456 = vmul.f32 %v454, %v440
    %v457 = vadd.f32 %v391, %v455
    %v458 = vadd.f32 %v392, %v456
    %s459 = sld [smem:[#allocation5 + $0x183]]
    %v460 = vstv %s459
    %v461 = vmul.f32 %v460, %v439
    %v462 = vmul.f32 %v460, %v440
    %v463 = vadd.f32 %v397, %v461
    %v464 = vadd.f32 %v398, %v462
    %s465 = sld [smem:[#allocation2 + $0x4]]
    %v466 = vstv %s465
    %v467 = vmul.f32 %v466, %v184
    %v468 = vmul.f32 %v466, %v185
    %469 = vset.pattern.permute.xlu0 4
    %470 = vperm.xlu0 %469, %v70
    %v471 = vpop.permute.xlu0 %470
    %v473 = vadd.f32 %v471, %v467
    %v474 = vadd.f32 %v471, %v468
    %s475 = sld [smem:[#allocation2 + $0x84]]
    %v476 = vstv %s475
    %v477 = vmul.f32 %v476, %v186
    %v478 = vmul.f32 %v476, %v187
    %v479 = vadd.f32 %v473, %v477
    %v480 = vadd.f32 %v474, %v478
    %s481 = sld [smem:[#allocation2 + $0x104]]
    %v482 = vstv %s481
    %v483 = vmul.f32 %v482, %v188
    %v484 = vmul.f32 %v482, %v189
    %v485 = vadd.f32 %v479, %v483
    %v486 = vadd.f32 %v480, %v484
    %s487 = sld [smem:[#allocation2 + $0x184]]
    %v488 = vstv %s487
    %v489 = vmul.f32 %v488, %v190
    %v490 = vmul.f32 %v488, %v191
    %v491 = vadd.f32 %v485, %v489
    %v492 = vadd.f32 %v486, %v490
    %v493 = vxor.u32 %v491, 2147483648
    %v494 = vxor.u32 %v492, 2147483648
    %v495 = vmul.f32 %v493, 1.442695
    %v496 = vpow.pop %v495
    %v497 = vmul.f32 %v494, 1.442695
    %v498 = vpow.pop %v497
    %v499 = vadd.f32 %v496, 1.0
    %v500 = vadd.f32 %v498, 1.0
    %v501 = vrcp.pop %v499
    %v502 = vmul.f32 1.0, %v501
    %v503 = vrcp.pop %v500
    %v504 = vmul.f32 1.0, %v503
    %v505 = vmul.f32 %v491, %v502
    %v506 = vmul.f32 %v492, %v504
    %s507 = sld [smem:[#allocation5 + $0x200]]
    %v508 = vstv %s507
    %v509 = vmul.f32 %v508, %v505
    %v510 = vmul.f32 %v508, %v506
    %v511 = vadd.f32 %v445, %v509
    %v512 = vadd.f32 %v446, %v510
    %s513 = sld [smem:[#allocation5 + $0x201]]
    %v514 = vstv %s513
    %v515 = vmul.f32 %v514, %v505
    %v516 = vmul.f32 %v514, %v506
    %v517 = vadd.f32 %v451, %v515
    %v518 = vadd.f32 %v452, %v516
    %s519 = sld [smem:[#allocation5 + $0x202]]
    %v520 = vstv %s519
    %v521 = vmul.f32 %v520, %v505
    %v522 = vmul.f32 %v520, %v506
    %v523 = vadd.f32 %v457, %v521
    %v524 = vadd.f32 %v458, %v522
    %s525 = sld [smem:[#allocation5 + $0x203]]
    %v526 = vstv %s525
    %v527 = vmul.f32 %v526, %v505
    %v528 = vmul.f32 %v526, %v506
    %v529 = vadd.f32 %v463, %v527
    %v530 = vadd.f32 %v464, %v528
    %s531 = sld [smem:[#allocation2 + $0x5]]
    %v532 = vstv %s531
    %v533 = vmul.f32 %v532, %v184
    %v534 = vmul.f32 %v532, %v185
    %535 = vset.pattern.permute.xlu0 5
    %536 = vperm.xlu0 %535, %v70
    %v537 = vpop.permute.xlu0 %536
    %v539 = vadd.f32 %v537, %v533
    %v540 = vadd.f32 %v537, %v534
    %s541 = sld [smem:[#allocation2 + $0x85]]
    %v542 = vstv %s541
    %v543 = vmul.f32 %v542, %v186
    %v544 = vmul.f32 %v542, %v187
    %v545 = vadd.f32 %v539, %v543
    %v546 = vadd.f32 %v540, %v544
    %s547 = sld [smem:[#allocation2 + $0x105]]
    %v548 = vstv %s547
    %v549 = vmul.f32 %v548, %v188
    %v550 = vmul.f32 %v548, %v189
    %v551 = vadd.f32 %v545, %v549
    %v552 = vadd.f32 %v546, %v550
    %s553 = sld [smem:[#allocation2 + $0x185]]
    %v554 = vstv %s553
    %v555 = vmul.f32 %v554, %v190
    %v556 = vmul.f32 %v554, %v191
    %v557 = vadd.f32 %v551, %v555
    %v558 = vadd.f32 %v552, %v556
    %v559 = vxor.u32 %v557, 2147483648
    %v560 = vxor.u32 %v558, 2147483648
    %v561 = vmul.f32 %v559, 1.442695
    %v562 = vpow.pop %v561
    %v563 = vmul.f32 %v560, 1.442695
    %v564 = vpow.pop %v563
    %v565 = vadd.f32 %v562, 1.0
    %v566 = vadd.f32 %v564, 1.0
    %v567 = vrcp.pop %v565
    %v568 = vmul.f32 1.0, %v567
    %v569 = vrcp.pop %v566
    %v570 = vmul.f32 1.0, %v569
    %v571 = vmul.f32 %v557, %v568
    %v572 = vmul.f32 %v558, %v570
    %s573 = sld [smem:[#allocation5 + $0x280]]
    %v574 = vstv %s573
    %v575 = vmul.f32 %v574, %v571
    %v576 = vmul.f32 %v574, %v572
    %v577 = vadd.f32 %v511, %v575
    %v578 = vadd.f32 %v512, %v576
    %s579 = sld [smem:[#allocation5 + $0x281]]
    %v580 = vstv %s579
    %v581 = vmul.f32 %v580, %v571
    %v582 = vmul.f32 %v580, %v572
    %v583 = vadd.f32 %v517, %v581
    %v584 = vadd.f32 %v518, %v582
    %s585 = sld [smem:[#allocation5 + $0x282]]
    %v586 = vstv %s585
    %v587 = vmul.f32 %v586, %v571
    %v588 = vmul.f32 %v586, %v572
    %v589 = vadd.f32 %v523, %v587
    %v590 = vadd.f32 %v524, %v588
    %s591 = sld [smem:[#allocation5 + $0x283]]
    %v592 = vstv %s591
    %v593 = vmul.f32 %v592, %v571
    %v594 = vmul.f32 %v592, %v572
    %v595 = vadd.f32 %v529, %v593
    %v596 = vadd.f32 %v530, %v594
    %s597 = sld [smem:[#allocation2 + $0x6]]
    %v598 = vstv %s597
    %v599 = vmul.f32 %v598, %v184
    %v600 = vmul.f32 %v598, %v185
    %601 = vset.pattern.permute.xlu0 6
    %602 = vperm.xlu0 %601, %v70
    %v603 = vpop.permute.xlu0 %602
    %v605 = vadd.f32 %v603, %v599
    %v606 = vadd.f32 %v603, %v600
    %s607 = sld [smem:[#allocation2 + $0x86]]
    %v608 = vstv %s607
    %v609 = vmul.f32 %v608, %v186
    %v610 = vmul.f32 %v608, %v187
    %v611 = vadd.f32 %v605, %v609
    %v612 = vadd.f32 %v606, %v610
    %s613 = sld [smem:[#allocation2 + $0x106]]
    %v614 = vstv %s613
    %v615 = vmul.f32 %v614, %v188
    %v616 = vmul.f32 %v614, %v189
    %v617 = vadd.f32 %v611, %v615
    %v618 = vadd.f32 %v612, %v616
    %s619 = sld [smem:[#allocation2 + $0x186]]
    %v620 = vstv %s619
    %v621 = vmul.f32 %v620, %v190
    %v622 = vmul.f32 %v620, %v191
    %v623 = vadd.f32 %v617, %v621
    %v624 = vadd.f32 %v618, %v622
    %v625 = vxor.u32 %v623, 2147483648
    %v626 = vxor.u32 %v624, 2147483648
    %v627 = vmul.f32 %v625, 1.442695
    %v628 = vpow.pop %v627
    %v629 = vmul.f32 %v626, 1.442695
    %v630 = vpow.pop %v629
    %v631 = vadd.f32 %v628, 1.0
    %v632 = vadd.f32 %v630, 1.0
    %v633 = vrcp.pop %v631
    %v634 = vmul.f32 1.0, %v633
    %v635 = vrcp.pop %v632
    %v636 = vmul.f32 1.0, %v635
    %v637 = vmul.f32 %v623, %v634
    %v638 = vmul.f32 %v624, %v636
    %s639 = sld [smem:[#allocation5 + $0x300]]
    %v640 = vstv %s639
    %v641 = vmul.f32 %v640, %v637
    %v642 = vmul.f32 %v640, %v638
    %v643 = vadd.f32 %v577, %v641
    %v644 = vadd.f32 %v578, %v642
    %s645 = sld [smem:[#allocation5 + $0x301]]
    %v646 = vstv %s645
    %v647 = vmul.f32 %v646, %v637
    %v648 = vmul.f32 %v646, %v638
    %v649 = vadd.f32 %v583, %v647
    %v650 = vadd.f32 %v584, %v648
    %s651 = sld [smem:[#allocation5 + $0x302]]
    %v652 = vstv %s651
    %v653 = vmul.f32 %v652, %v637
    %v654 = vmul.f32 %v652, %v638
    %v655 = vadd.f32 %v589, %v653
    %v656 = vadd.f32 %v590, %v654
    %s657 = sld [smem:[#allocation5 + $0x303]]
    %v658 = vstv %s657
    %v659 = vmul.f32 %v658, %v637
    %v660 = vmul.f32 %v658, %v638
    %v661 = vadd.f32 %v595, %v659
    %v662 = vadd.f32 %v596, %v660
    %s663 = sld [smem:[#allocation2 + $0x7]]
    %v664 = vstv %s663
    %v665 = vmul.f32 %v664, %v184
    %v666 = vmul.f32 %v664, %v185
    %667 = vset.pattern.permute.xlu0 7
    %668 = vperm.xlu0 %667, %v70
    %v669 = vpop.permute.xlu0 %668
    %v671 = vadd.f32 %v669, %v665
    %v672 = vadd.f32 %v669, %v666
    %s673 = sld [smem:[#allocation2 + $0x87]]
    %v674 = vstv %s673
    %v675 = vmul.f32 %v674, %v186
    %v676 = vmul.f32 %v674, %v187
    %v677 = vadd.f32 %v671, %v675
    %v678 = vadd.f32 %v672, %v676
    %s679 = sld [smem:[#allocation2 + $0x107]]
    %v680 = vstv %s679
    %v681 = vmul.f32 %v680, %v188
    %v682 = vmul.f32 %v680, %v189
    %v683 = vadd.f32 %v677, %v681
    %v684 = vadd.f32 %v678, %v682
    %s685 = sld [smem:[#allocation2 + $0x187]]
    %v686 = vstv %s685
    %v687 = vmul.f32 %v686, %v190
    %v688 = vmul.f32 %v686, %v191
    %v689 = vadd.f32 %v683, %v687
    %v690 = vadd.f32 %v684, %v688
    %v691 = vxor.u32 %v689, 2147483648
    %v692 = vxor.u32 %v690, 2147483648
    %v693 = vmul.f32 %v691, 1.442695
    %v694 = vpow.pop %v693
    %v695 = vmul.f32 %v692, 1.442695
    %v696 = vpow.pop %v695
    %v697 = vadd.f32 %v694, 1.0
    %v698 = vadd.f32 %v696, 1.0
    %v699 = vrcp.pop %v697
    %v700 = vmul.f32 1.0, %v699
    %v701 = vrcp.pop %v698
    %v702 = vmul.f32 1.0, %v701
    %v703 = vmul.f32 %v689, %v700
    %v704 = vmul.f32 %v690, %v702
    %s705 = sld [smem:[#allocation5 + $0x380]]
    %v706 = vstv %s705
    %v707 = vmul.f32 %v706, %v703
    %v708 = vmul.f32 %v706, %v704
    %v709 = vadd.f32 %v643, %v707
    %v710 = vadd.f32 %v644, %v708
    %s711 = sld [smem:[#allocation5 + $0x381]]
    %v712 = vstv %s711
    %v713 = vmul.f32 %v712, %v703
    %v714 = vmul.f32 %v712, %v704
    %v715 = vadd.f32 %v649, %v713
    %v716 = vadd.f32 %v650, %v714
    %s717 = sld [smem:[#allocation5 + $0x382]]
    %v718 = vstv %s717
    %v719 = vmul.f32 %v718, %v703
    %v720 = vmul.f32 %v718, %v704
    %v721 = vadd.f32 %v655, %v719
    %v722 = vadd.f32 %v656, %v720
    %s723 = sld [smem:[#allocation5 + $0x383]]
    %v724 = vstv %s723
    %v725 = vmul.f32 %v724, %v703
    %v726 = vmul.f32 %v724, %v704
    %v727 = vadd.f32 %v661, %v725
    %v728 = vadd.f32 %v662, %v726
    %s729 = sld [smem:[#allocation2 + $0x8]]
    %v730 = vstv %s729
    %v731 = vmul.f32 %v730, %v184
    %v732 = vmul.f32 %v730, %v185
    %733 = vset.pattern.permute.xlu0 8
    %734 = vperm.xlu0 %733, %v70
    %v735 = vpop.permute.xlu0 %734
    %v737 = vadd.f32 %v735, %v731
    %v738 = vadd.f32 %v735, %v732
    %s739 = sld [smem:[#allocation2 + $0x88]]
    %v740 = vstv %s739
    %v741 = vmul.f32 %v740, %v186
    %v742 = vmul.f32 %v740, %v187
    %v743 = vadd.f32 %v737, %v741
    %v744 = vadd.f32 %v738, %v742
    %s745 = sld [smem:[#allocation2 + $0x108]]
    %v746 = vstv %s745
    %v747 = vmul.f32 %v746, %v188
    %v748 = vmul.f32 %v746, %v189
    %v749 = vadd.f32 %v743, %v747
    %v750 = vadd.f32 %v744, %v748
    %s751 = sld [smem:[#allocation2 + $0x188]]
    %v752 = vstv %s751
    %v753 = vmul.f32 %v752, %v190
    %v754 = vmul.f32 %v752, %v191
    %v755 = vadd.f32 %v749, %v753
    %v756 = vadd.f32 %v750, %v754
    %v757 = vxor.u32 %v755, 2147483648
    %v758 = vxor.u32 %v756, 2147483648
    %v759 = vmul.f32 %v757, 1.442695
    %v760 = vpow.pop %v759
    %v761 = vmul.f32 %v758, 1.442695
    %v762 = vpow.pop %v761
    %v763 = vadd.f32 %v760, 1.0
    %v764 = vadd.f32 %v762, 1.0
    %v765 = vrcp.pop %v763
    %v766 = vmul.f32 1.0, %v765
    %v767 = vrcp.pop %v764
    %v768 = vmul.f32 1.0, %v767
    %v769 = vmul.f32 %v755, %v766
    %v770 = vmul.f32 %v756, %v768
    %s771 = sld [smem:[#allocation5 + $0x400]]
    %v772 = vstv %s771
    %v773 = vmul.f32 %v772, %v769
    %v774 = vmul.f32 %v772, %v770
    %v775 = vadd.f32 %v709, %v773
    %v776 = vadd.f32 %v710, %v774
    %s777 = sld [smem:[#allocation5 + $0x401]]
    %v778 = vstv %s777
    %v779 = vmul.f32 %v778, %v769
    %v780 = vmul.f32 %v778, %v770
    %v781 = vadd.f32 %v715, %v779
    %v782 = vadd.f32 %v716, %v780
    %s783 = sld [smem:[#allocation5 + $0x402]]
    %v784 = vstv %s783
    %v785 = vmul.f32 %v784, %v769
    %v786 = vmul.f32 %v784, %v770
    %v787 = vadd.f32 %v721, %v785
    %v788 = vadd.f32 %v722, %v786
    %s789 = sld [smem:[#allocation5 + $0x403]]
    %v790 = vstv %s789
    %v791 = vmul.f32 %v790, %v769
    %v792 = vmul.f32 %v790, %v770
    %v793 = vadd.f32 %v727, %v791
    %v794 = vadd.f32 %v728, %v792
    %s795 = sld [smem:[#allocation2 + $0x9]]
    %v796 = vstv %s795
    %v797 = vmul.f32 %v796, %v184
    %v798 = vmul.f32 %v796, %v185
    %799 = vset.pattern.permute.xlu0 9
    %800 = vperm.xlu0 %799, %v70
    %v801 = vpop.permute.xlu0 %800
    %v803 = vadd.f32 %v801, %v797
    %v804 = vadd.f32 %v801, %v798
    %s805 = sld [smem:[#allocation2 + $0x89]]
    %v806 = vstv %s805
    %v807 = vmul.f32 %v806, %v186
    %v808 = vmul.f32 %v806, %v187
    %v809 = vadd.f32 %v803, %v807
    %v810 = vadd.f32 %v804, %v808
    %s811 = sld [smem:[#allocation2 + $0x109]]
    %v812 = vstv %s811
    %v813 = vmul.f32 %v812, %v188
    %v814 = vmul.f32 %v812, %v189
    %v815 = vadd.f32 %v809, %v813
    %v816 = vadd.f32 %v810, %v814
    %s817 = sld [smem:[#allocation2 + $0x189]]
    %v818 = vstv %s817
    %v819 = vmul.f32 %v818, %v190
    %v820 = vmul.f32 %v818, %v191
    %v821 = vadd.f32 %v815, %v819
    %v822 = vadd.f32 %v816, %v820
    %v823 = vxor.u32 %v821, 2147483648
    %v824 = vxor.u32 %v822, 2147483648
    %v825 = vmul.f32 %v823, 1.442695
    %v826 = vpow.pop %v825
    %v827 = vmul.f32 %v824, 1.442695
    %v828 = vpow.pop %v827
    %v829 = vadd.f32 %v826, 1.0
    %v830 = vadd.f32 %v828, 1.0
    %v831 = vrcp.pop %v829
    %v832 = vmul.f32 1.0, %v831
    %v833 = vrcp.pop %v830
    %v834 = vmul.f32 1.0, %v833
    %v835 = vmul.f32 %v821, %v832
    %v836 = vmul.f32 %v822, %v834
    %s837 = sld [smem:[#allocation5 + $0x480]]
    %v838 = vstv %s837
    %v839 = vmul.f32 %v838, %v835
    %v840 = vmul.f32 %v838, %v836
    %v841 = vadd.f32 %v775, %v839
    %v842 = vadd.f32 %v776, %v840
    %s843 = sld [smem:[#allocation5 + $0x481]]
    %v844 = vstv %s843
    %v845 = vmul.f32 %v844, %v835
    %v846 = vmul.f32 %v844, %v836
    %v847 = vadd.f32 %v781, %v845
    %v848 = vadd.f32 %v782, %v846
    %s849 = sld [smem:[#allocation5 + $0x482]]
    %v850 = vstv %s849
    %v851 = vmul.f32 %v850, %v835
    %v852 = vmul.f32 %v850, %v836
    %v853 = vadd.f32 %v787, %v851
    %v854 = vadd.f32 %v788, %v852
    %s855 = sld [smem:[#allocation5 + $0x483]]
    %v856 = vstv %s855
    %v857 = vmul.f32 %v856, %v835
    %v858 = vmul.f32 %v856, %v836
    %v859 = vadd.f32 %v793, %v857
    %v860 = vadd.f32 %v794, %v858
    %s861 = sld [smem:[#allocation2 + $0xa]]
    %v862 = vstv %s861
    %v863 = vmul.f32 %v862, %v184
    %v864 = vmul.f32 %v862, %v185
    %865 = vset.pattern.permute.xlu0 10
    %866 = vperm.xlu0 %865, %v70
    %v867 = vpop.permute.xlu0 %866
    %v869 = vadd.f32 %v867, %v863
    %v870 = vadd.f32 %v867, %v864
    %s871 = sld [smem:[#allocation2 + $0x8a]]
    %v872 = vstv %s871
    %v873 = vmul.f32 %v872, %v186
    %v874 = vmul.f32 %v872, %v187
    %v875 = vadd.f32 %v869, %v873
    %v876 = vadd.f32 %v870, %v874
    %s877 = sld [smem:[#allocation2 + $0x10a]]
    %v878 = vstv %s877
    %v879 = vmul.f32 %v878, %v188
    %v880 = vmul.f32 %v878, %v189
    %v881 = vadd.f32 %v875, %v879
    %v882 = vadd.f32 %v876, %v880
    %s883 = sld [smem:[#allocation2 + $0x18a]]
    %v884 = vstv %s883
    %v885 = vmul.f32 %v884, %v190
    %v886 = vmul.f32 %v884, %v191
    %v887 = vadd.f32 %v881, %v885
    %v888 = vadd.f32 %v882, %v886
    %v889 = vxor.u32 %v887, 2147483648
    %v890 = vxor.u32 %v888, 2147483648
    %v891 = vmul.f32 %v889, 1.442695
    %v892 = vpow.pop %v891
    %v893 = vmul.f32 %v890, 1.442695
    %v894 = vpow.pop %v893
    %v895 = vadd.f32 %v892, 1.0
    %v896 = vadd.f32 %v894, 1.0
    %v897 = vrcp.pop %v895
    %v898 = vmul.f32 1.0, %v897
    %v899 = vrcp.pop %v896
    %v900 = vmul.f32 1.0, %v899
    %v901 = vmul.f32 %v887, %v898
    %v902 = vmul.f32 %v888, %v900
    %s903 = sld [smem:[#allocation5 + $0x500]]
    %v904 = vstv %s903
    %v905 = vmul.f32 %v904, %v901
    %v906 = vmul.f32 %v904, %v902
    %v907 = vadd.f32 %v841, %v905
    %v908 = vadd.f32 %v842, %v906
    %s909 = sld [smem:[#allocation5 + $0x501]]
    %v910 = vstv %s909
    %v911 = vmul.f32 %v910, %v901
    %v912 = vmul.f32 %v910, %v902
    %v913 = vadd.f32 %v847, %v911
    %v914 = vadd.f32 %v848, %v912
    %s915 = sld [smem:[#allocation5 + $0x502]]
    %v916 = vstv %s915
    %v917 = vmul.f32 %v916, %v901
    %v918 = vmul.f32 %v916, %v902
    %v919 = vadd.f32 %v853, %v917
    %v920 = vadd.f32 %v854, %v918
    %s921 = sld [smem:[#allocation5 + $0x503]]
    %v922 = vstv %s921
    %v923 = vmul.f32 %v922, %v901
    %v924 = vmul.f32 %v922, %v902
    %v925 = vadd.f32 %v859, %v923
    %v926 = vadd.f32 %v860, %v924
    %s927 = sld [smem:[#allocation2 + $0xb]]
    %v928 = vstv %s927
    %v929 = vmul.f32 %v928, %v184
    %v930 = vmul.f32 %v928, %v185
    %931 = vset.pattern.permute.xlu0 11
    %932 = vperm.xlu0 %931, %v70
    %v933 = vpop.permute.xlu0 %932
    %v935 = vadd.f32 %v933, %v929
    %v936 = vadd.f32 %v933, %v930
    %s937 = sld [smem:[#allocation2 + $0x8b]]
    %v938 = vstv %s937
    %v939 = vmul.f32 %v938, %v186
    %v940 = vmul.f32 %v938, %v187
    %v941 = vadd.f32 %v935, %v939
    %v942 = vadd.f32 %v936, %v940
    %s943 = sld [smem:[#allocation2 + $0x10b]]
    %v944 = vstv %s943
    %v945 = vmul.f32 %v944, %v188
    %v946 = vmul.f32 %v944, %v189
    %v947 = vadd.f32 %v941, %v945
    %v948 = vadd.f32 %v942, %v946
    %s949 = sld [smem:[#allocation2 + $0x18b]]
    %v950 = vstv %s949
    %v951 = vmul.f32 %v950, %v190
    %v952 = vmul.f32 %v950, %v191
    %v953 = vadd.f32 %v947, %v951
    %v954 = vadd.f32 %v948, %v952
    %v955 = vxor.u32 %v953, 2147483648
    %v956 = vxor.u32 %v954, 2147483648
    %v957 = vmul.f32 %v955, 1.442695
    %v958 = vpow.pop %v957
    %v959 = vmul.f32 %v956, 1.442695
    %v960 = vpow.pop %v959
    %v961 = vadd.f32 %v958, 1.0
    %v962 = vadd.f32 %v960, 1.0
    %v963 = vrcp.pop %v961
    %v964 = vmul.f32 1.0, %v963
    %v965 = vrcp.pop %v962
    %v966 = vmul.f32 1.0, %v965
    %v967 = vmul.f32 %v953, %v964
    %v968 = vmul.f32 %v954, %v966
    %s969 = sld [smem:[#allocation5 + $0x580]]
    %v970 = vstv %s969
    %v971 = vmul.f32 %v970, %v967
    %v972 = vmul.f32 %v970, %v968
    %v973 = vadd.f32 %v907, %v971
    %v974 = vadd.f32 %v908, %v972
    %s975 = sld [smem:[#allocation5 + $0x581]]
    %v976 = vstv %s975
    %v977 = vmul.f32 %v976, %v967
    %v978 = vmul.f32 %v976, %v968
    %v979 = vadd.f32 %v913, %v977
    %v980 = vadd.f32 %v914, %v978
    %s981 = sld [smem:[#allocation5 + $0x582]]
    %v982 = vstv %s981
    %v983 = vmul.f32 %v982, %v967
    %v984 = vmul.f32 %v982, %v968
    %v985 = vadd.f32 %v919, %v983
    %v986 = vadd.f32 %v920, %v984
    %s987 = sld [smem:[#allocation5 + $0x583]]
    %v988 = vstv %s987
    %v989 = vmul.f32 %v988, %v967
    %v990 = vmul.f32 %v988, %v968
    %v991 = vadd.f32 %v925, %v989
    %v992 = vadd.f32 %v926, %v990
    %s993 = sld [smem:[#allocation2 + $0xc]]
    %v994 = vstv %s993
    %v995 = vmul.f32 %v994, %v184
    %v996 = vmul.f32 %v994, %v185
    %997 = vset.pattern.permute.xlu0 12
    %998 = vperm.xlu0 %997, %v70
    %v999 = vpop.permute.xlu0 %998
    %v1001 = vadd.f32 %v999, %v995
    %v1002 = vadd.f32 %v999, %v996
    %s1003 = sld [smem:[#allocation2 + $0x8c]]
    %v1004 = vstv %s1003
    %v1005 = vmul.f32 %v1004, %v186
    %v1006 = vmul.f32 %v1004, %v187
    %v1007 = vadd.f32 %v1001, %v1005
    %v1008 = vadd.f32 %v1002, %v1006
    %s1009 = sld [smem:[#allocation2 + $0x10c]]
    %v1010 = vstv %s1009
    %v1011 = vmul.f32 %v1010, %v188
    %v1012 = vmul.f32 %v1010, %v189
    %v1013 = vadd.f32 %v1007, %v1011
    %v1014 = vadd.f32 %v1008, %v1012
    %s1015 = sld [smem:[#allocation2 + $0x18c]]
    %v1016 = vstv %s1015
    %v1017 = vmul.f32 %v1016, %v190
    %v1018 = vmul.f32 %v1016, %v191
    %v1019 = vadd.f32 %v1013, %v1017
    %v1020 = vadd.f32 %v1014, %v1018
    %v1021 = vxor.u32 %v1019, 2147483648
    %v1022 = vxor.u32 %v1020, 2147483648
    %v1023 = vmul.f32 %v1021, 1.442695
    %v1024 = vpow.pop %v1023
    %v1025 = vmul.f32 %v1022, 1.442695
    %v1026 = vpow.pop %v1025
    %v1027 = vadd.f32 %v1024, 1.0
    %v1028 = vadd.f32 %v1026, 1.0
    %v1029 = vrcp.pop %v1027
    %v1030 = vmul.f32 1.0, %v1029
    %v1031 = vrcp.pop %v1028
    %v1032 = vmul.f32 1.0, %v1031
    %v1033 = vmul.f32 %v1019, %v1030
    %v1034 = vmul.f32 %v1020, %v1032
    %s1035 = sld [smem:[#allocation5 + $0x600]]
    %v1036 = vstv %s1035
    %v1037 = vmul.f32 %v1036, %v1033
    %v1038 = vmul.f32 %v1036, %v1034
    %v1039 = vadd.f32 %v973, %v1037
    %v1040 = vadd.f32 %v974, %v1038
    %s1041 = sld [smem:[#allocation5 + $0x601]]
    %v1042 = vstv %s1041
    %v1043 = vmul.f32 %v1042, %v1033
    %v1044 = vmul.f32 %v1042, %v1034
    %v1045 = vadd.f32 %v979, %v1043
    %v1046 = vadd.f32 %v980, %v1044
    %s1047 = sld [smem:[#allocation5 + $0x602]]
    %v1048 = vstv %s1047
    %v1049 = vmul.f32 %v1048, %v1033
    %v1050 = vmul.f32 %v1048, %v1034
    %v1051 = vadd.f32 %v985, %v1049
    %v1052 = vadd.f32 %v986, %v1050
    %s1053 = sld [smem:[#allocation5 + $0x603]]
    %v1054 = vstv %s1053
    %v1055 = vmul.f32 %v1054, %v1033
    %v1056 = vmul.f32 %v1054, %v1034
    %v1057 = vadd.f32 %v991, %v1055
    %v1058 = vadd.f32 %v992, %v1056
    %s1059 = sld [smem:[#allocation2 + $0xd]]
    %v1060 = vstv %s1059
    %v1061 = vmul.f32 %v1060, %v184
    %v1062 = vmul.f32 %v1060, %v185
    %1063 = vset.pattern.permute.xlu0 13
    %1064 = vperm.xlu0 %1063, %v70
    %v1065 = vpop.permute.xlu0 %1064
    %v1067 = vadd.f32 %v1065, %v1061
    %v1068 = vadd.f32 %v1065, %v1062
    %s1069 = sld [smem:[#allocation2 + $0x8d]]
    %v1070 = vstv %s1069
    %v1071 = vmul.f32 %v1070, %v186
    %v1072 = vmul.f32 %v1070, %v187
    %v1073 = vadd.f32 %v1067, %v1071
    %v1074 = vadd.f32 %v1068, %v1072
    %s1075 = sld [smem:[#allocation2 + $0x10d]]
    %v1076 = vstv %s1075
    %v1077 = vmul.f32 %v1076, %v188
    %v1078 = vmul.f32 %v1076, %v189
    %v1079 = vadd.f32 %v1073, %v1077
    %v1080 = vadd.f32 %v1074, %v1078
    %s1081 = sld [smem:[#allocation2 + $0x18d]]
    %v1082 = vstv %s1081
    %v1083 = vmul.f32 %v1082, %v190
    %v1084 = vmul.f32 %v1082, %v191
    %v1085 = vadd.f32 %v1079, %v1083
    %v1086 = vadd.f32 %v1080, %v1084
    %v1087 = vxor.u32 %v1085, 2147483648
    %v1088 = vxor.u32 %v1086, 2147483648
    %v1089 = vmul.f32 %v1087, 1.442695
    %v1090 = vpow.pop %v1089
    %v1091 = vmul.f32 %v1088, 1.442695
    %v1092 = vpow.pop %v1091
    %v1093 = vadd.f32 %v1090, 1.0
    %v1094 = vadd.f32 %v1092, 1.0
    %v1095 = vrcp.pop %v1093
    %v1096 = vmul.f32 1.0, %v1095
    %v1097 = vrcp.pop %v1094
    %v1098 = vmul.f32 1.0, %v1097
    %v1099 = vmul.f32 %v1085, %v1096
    %v1100 = vmul.f32 %v1086, %v1098
    %s1101 = sld [smem:[#allocation5 + $0x680]]
    %v1102 = vstv %s1101
    %v1103 = vmul.f32 %v1102, %v1099
    %v1104 = vmul.f32 %v1102, %v1100
    %v1105 = vadd.f32 %v1039, %v1103
    %v1106 = vadd.f32 %v1040, %v1104
    %s1107 = sld [smem:[#allocation5 + $0x681]]
    %v1108 = vstv %s1107
    %v1109 = vmul.f32 %v1108, %v1099
    %v1110 = vmul.f32 %v1108, %v1100
    %v1111 = vadd.f32 %v1045, %v1109
    %v1112 = vadd.f32 %v1046, %v1110
    %s1113 = sld [smem:[#allocation5 + $0x682]]
    %v1114 = vstv %s1113
    %v1115 = vmul.f32 %v1114, %v1099
    %v1116 = vmul.f32 %v1114, %v1100
    %v1117 = vadd.f32 %v1051, %v1115
    %v1118 = vadd.f32 %v1052, %v1116
    %s1119 = sld [smem:[#allocation5 + $0x683]]
    %v1120 = vstv %s1119
    %v1121 = vmul.f32 %v1120, %v1099
    %v1122 = vmul.f32 %v1120, %v1100
    %v1123 = vadd.f32 %v1057, %v1121
    %v1124 = vadd.f32 %v1058, %v1122
    %s1125 = sld [smem:[#allocation2 + $0xe]]
    %v1126 = vstv %s1125
    %v1127 = vmul.f32 %v1126, %v184
    %v1128 = vmul.f32 %v1126, %v185
    %1129 = vset.pattern.permute.xlu0 14
    %1130 = vperm.xlu0 %1129, %v70
    %v1131 = vpop.permute.xlu0 %1130
    %v1133 = vadd.f32 %v1131, %v1127
    %v1134 = vadd.f32 %v1131, %v1128
    %s1135 = sld [smem:[#allocation2 + $0x8e]]
    %v1136 = vstv %s1135
    %v1137 = vmul.f32 %v1136, %v186
    %v1138 = vmul.f32 %v1136, %v187
    %v1139 = vadd.f32 %v1133, %v1137
    %v1140 = vadd.f32 %v1134, %v1138
    %s1141 = sld [smem:[#allocation2 + $0x10e]]
    %v1142 = vstv %s1141
    %v1143 = vmul.f32 %v1142, %v188
    %v1144 = vmul.f32 %v1142, %v189
    %v1145 = vadd.f32 %v1139, %v1143
    %v1146 = vadd.f32 %v1140, %v1144
    %s1147 = sld [smem:[#allocation2 + $0x18e]]
    %v1148 = vstv %s1147
    %v1149 = vmul.f32 %v1148, %v190
    %v1150 = vmul.f32 %v1148, %v191
    %v1151 = vadd.f32 %v1145, %v1149
    %v1152 = vadd.f32 %v1146, %v1150
    %v1153 = vxor.u32 %v1151, 2147483648
    %v1154 = vxor.u32 %v1152, 2147483648
    %v1155 = vmul.f32 %v1153, 1.442695
    %v1156 = vpow.pop %v1155
    %v1157 = vmul.f32 %v1154, 1.442695
    %v1158 = vpow.pop %v1157
    %v1159 = vadd.f32 %v1156, 1.0
    %v1160 = vadd.f32 %v1158, 1.0
    %v1161 = vrcp.pop %v1159
    %v1162 = vmul.f32 1.0, %v1161
    %v1163 = vrcp.pop %v1160
    %v1164 = vmul.f32 1.0, %v1163
    %v1165 = vmul.f32 %v1151, %v1162
    %v1166 = vmul.f32 %v1152, %v1164
    %s1167 = sld [smem:[#allocation5 + $0x700]]
    %v1168 = vstv %s1167
    %v1169 = vmul.f32 %v1168, %v1165
    %v1170 = vmul.f32 %v1168, %v1166
    %v1171 = vadd.f32 %v1105, %v1169
    %v1172 = vadd.f32 %v1106, %v1170
    %s1173 = sld [smem:[#allocation5 + $0x701]]
    %v1174 = vstv %s1173
    %v1175 = vmul.f32 %v1174, %v1165
    %v1176 = vmul.f32 %v1174, %v1166
    %v1177 = vadd.f32 %v1111, %v1175
    %v1178 = vadd.f32 %v1112, %v1176
    %s1179 = sld [smem:[#allocation5 + $0x702]]
    %v1180 = vstv %s1179
    %v1181 = vmul.f32 %v1180, %v1165
    %v1182 = vmul.f32 %v1180, %v1166
    %v1183 = vadd.f32 %v1117, %v1181
    %v1184 = vadd.f32 %v1118, %v1182
    %s1185 = sld [smem:[#allocation5 + $0x703]]
    %v1186 = vstv %s1185
    %v1187 = vmul.f32 %v1186, %v1165
    %v1188 = vmul.f32 %v1186, %v1166
    %v1189 = vadd.f32 %v1123, %v1187
    %v1190 = vadd.f32 %v1124, %v1188
    %s1191 = sld [smem:[#allocation2 + $0xf]]
    %v1192 = vstv %s1191
    %v1193 = vmul.f32 %v1192, %v184
    %v1194 = vmul.f32 %v1192, %v185
    %1195 = vset.pattern.permute.xlu0 15
    %1196 = vperm.xlu0 %1195, %v70
    %v1197 = vpop.permute.xlu0 %1196
    %v1199 = vadd.f32 %v1197, %v1193
    %v1200 = vadd.f32 %v1197, %v1194
    %s1201 = sld [smem:[#allocation2 + $0x8f]]
    %v1202 = vstv %s1201
    %v1203 = vmul.f32 %v1202, %v186
    %v1204 = vmul.f32 %v1202, %v187
    %v1205 = vadd.f32 %v1199, %v1203
    %v1206 = vadd.f32 %v1200, %v1204
    %s1207 = sld [smem:[#allocation2 + $0x10f]]
    %v1208 = vstv %s1207
    %v1209 = vmul.f32 %v1208, %v188
    %v1210 = vmul.f32 %v1208, %v189
    %v1211 = vadd.f32 %v1205, %v1209
    %v1212 = vadd.f32 %v1206, %v1210
    %s1213 = sld [smem:[#allocation2 + $0x18f]]
    %v1214 = vstv %s1213
    %v1215 = vmul.f32 %v1214, %v190
    %v1216 = vmul.f32 %v1214, %v191
    %v1217 = vadd.f32 %v1211, %v1215
    %v1218 = vadd.f32 %v1212, %v1216
    %v1219 = vxor.u32 %v1217, 2147483648
    %v1220 = vxor.u32 %v1218, 2147483648
    %v1221 = vmul.f32 %v1219, 1.442695
    %v1222 = vpow.pop %v1221
    %v1223 = vmul.f32 %v1220, 1.442695
    %v1224 = vpow.pop %v1223
    %v1225 = vadd.f32 %v1222, 1.0
    %v1226 = vadd.f32 %v1224, 1.0
    %v1227 = vrcp.pop %v1225
    %v1228 = vmul.f32 1.0, %v1227
    %v1229 = vrcp.pop %v1226
    %v1230 = vmul.f32 1.0, %v1229
    %v1231 = vmul.f32 %v1217, %v1228
    %v1232 = vmul.f32 %v1218, %v1230
    %s1233 = sld [smem:[#allocation5 + $0x780]]
    %v1234 = vstv %s1233
    %v1235 = vmul.f32 %v1234, %v1231
    %v1236 = vmul.f32 %v1234, %v1232
    %v1237 = vadd.f32 %v1171, %v1235
    %v1238 = vadd.f32 %v1172, %v1236
    %s1239 = sld [smem:[#allocation5 + $0x781]]
    %v1240 = vstv %s1239
    %v1241 = vmul.f32 %v1240, %v1231
    %v1242 = vmul.f32 %v1240, %v1232
    %v1243 = vadd.f32 %v1177, %v1241
    %v1244 = vadd.f32 %v1178, %v1242
    %s1245 = sld [smem:[#allocation5 + $0x782]]
    %v1246 = vstv %s1245
    %v1247 = vmul.f32 %v1246, %v1231
    %v1248 = vmul.f32 %v1246, %v1232
    %v1249 = vadd.f32 %v1183, %v1247
    %v1250 = vadd.f32 %v1184, %v1248
    %s1251 = sld [smem:[#allocation5 + $0x783]]
    %v1252 = vstv %s1251
    %v1253 = vmul.f32 %v1252, %v1231
    %v1254 = vmul.f32 %v1252, %v1232
    %v1255 = vadd.f32 %v1189, %v1253
    %v1256 = vadd.f32 %v1190, %v1254
    %s1257 = sld [smem:[#allocation2 + $0x10]]
    %v1258 = vstv %s1257
    %v1259 = vmul.f32 %v1258, %v184
    %v1260 = vmul.f32 %v1258, %v185
    %1261 = vset.pattern.permute.xlu0 16
    %1262 = vperm.xlu0 %1261, %v70
    %v1263 = vpop.permute.xlu0 %1262
    %v1265 = vadd.f32 %v1263, %v1259
    %v1266 = vadd.f32 %v1263, %v1260
    %s1267 = sld [smem:[#allocation2 + $0x90]]
    %v1268 = vstv %s1267
    %v1269 = vmul.f32 %v1268, %v186
    %v1270 = vmul.f32 %v1268, %v187
    %v1271 = vadd.f32 %v1265, %v1269
    %v1272 = vadd.f32 %v1266, %v1270
    %s1273 = sld [smem:[#allocation2 + $0x110]]
    %v1274 = vstv %s1273
    %v1275 = vmul.f32 %v1274, %v188
    %v1276 = vmul.f32 %v1274, %v189
    %v1277 = vadd.f32 %v1271, %v1275
    %v1278 = vadd.f32 %v1272, %v1276
    %s1279 = sld [smem:[#allocation2 + $0x190]]
    %v1280 = vstv %s1279
    %v1281 = vmul.f32 %v1280, %v190
    %v1282 = vmul.f32 %v1280, %v191
    %v1283 = vadd.f32 %v1277, %v1281
    %v1284 = vadd.f32 %v1278, %v1282
    %v1285 = vxor.u32 %v1283, 2147483648
    %v1286 = vxor.u32 %v1284, 2147483648
    %v1287 = vmul.f32 %v1285, 1.442695
    %v1288 = vpow.pop %v1287
    %v1289 = vmul.f32 %v1286, 1.442695
    %v1290 = vpow.pop %v1289
    %v1291 = vadd.f32 %v1288, 1.0
    %v1292 = vadd.f32 %v1290, 1.0
    %v1293 = vrcp.pop %v1291
    %v1294 = vmul.f32 1.0, %v1293
    %v1295 = vrcp.pop %v1292
    %v1296 = vmul.f32 1.0, %v1295
    %v1297 = vmul.f32 %v1283, %v1294
    %v1298 = vmul.f32 %v1284, %v1296
    %s1299 = sld [smem:[#allocation5 + $0x800]]
    %v1300 = vstv %s1299
    %v1301 = vmul.f32 %v1300, %v1297
    %v1302 = vmul.f32 %v1300, %v1298
    %v1303 = vadd.f32 %v1237, %v1301
    %v1304 = vadd.f32 %v1238, %v1302
    %s1305 = sld [smem:[#allocation5 + $0x801]]
    %v1306 = vstv %s1305
    %v1307 = vmul.f32 %v1306, %v1297
    %v1308 = vmul.f32 %v1306, %v1298
    %v1309 = vadd.f32 %v1243, %v1307
    %v1310 = vadd.f32 %v1244, %v1308
    %s1311 = sld [smem:[#allocation5 + $0x802]]
    %v1312 = vstv %s1311
    %v1313 = vmul.f32 %v1312, %v1297
    %v1314 = vmul.f32 %v1312, %v1298
    %v1315 = vadd.f32 %v1249, %v1313
    %v1316 = vadd.f32 %v1250, %v1314
    %s1317 = sld [smem:[#allocation5 + $0x803]]
    %v1318 = vstv %s1317
    %v1319 = vmul.f32 %v1318, %v1297
    %v1320 = vmul.f32 %v1318, %v1298
    %v1321 = vadd.f32 %v1255, %v1319
    %v1322 = vadd.f32 %v1256, %v1320
    %s1323 = sld [smem:[#allocation2 + $0x11]]
    %v1324 = vstv %s1323
    %v1325 = vmul.f32 %v1324, %v184
    %v1326 = vmul.f32 %v1324, %v185
    %1327 = vset.pattern.permute.xlu0 17
    %1328 = vperm.xlu0 %1327, %v70
    %v1329 = vpop.permute.xlu0 %1328
    %v1331 = vadd.f32 %v1329, %v1325
    %v1332 = vadd.f32 %v1329, %v1326
    %s1333 = sld [smem:[#allocation2 + $0x91]]
    %v1334 = vstv %s1333
    %v1335 = vmul.f32 %v1334, %v186
    %v1336 = vmul.f32 %v1334, %v187
    %v1337 = vadd.f32 %v1331, %v1335
    %v1338 = vadd.f32 %v1332, %v1336
    %s1339 = sld [smem:[#allocation2 + $0x111]]
    %v1340 = vstv %s1339
    %v1341 = vmul.f32 %v1340, %v188
    %v1342 = vmul.f32 %v1340, %v189
    %v1343 = vadd.f32 %v1337, %v1341
    %v1344 = vadd.f32 %v1338, %v1342
    %s1345 = sld [smem:[#allocation2 + $0x191]]
    %v1346 = vstv %s1345
    %v1347 = vmul.f32 %v1346, %v190
    %v1348 = vmul.f32 %v1346, %v191
    %v1349 = vadd.f32 %v1343, %v1347
    %v1350 = vadd.f32 %v1344, %v1348
    %v1351 = vxor.u32 %v1349, 2147483648
    %v1352 = vxor.u32 %v1350, 2147483648
    %v1353 = vmul.f32 %v1351, 1.442695
    %v1354 = vpow.pop %v1353
    %v1355 = vmul.f32 %v1352, 1.442695
    %v1356 = vpow.pop %v1355
    %v1357 = vadd.f32 %v1354, 1.0
    %v1358 = vadd.f32 %v1356, 1.0
    %v1359 = vrcp.pop %v1357
    %v1360 = vmul.f32 1.0, %v1359
    %v1361 = vrcp.pop %v1358
    %v1362 = vmul.f32 1.0, %v1361
    %v1363 = vmul.f32 %v1349, %v1360
    %v1364 = vmul.f32 %v1350, %v1362
    %s1365 = sld [smem:[#allocation5 + $0x880]]
    %v1366 = vstv %s1365
    %v1367 = vmul.f32 %v1366, %v1363
    %v1368 = vmul.f32 %v1366, %v1364
    %v1369 = vadd.f32 %v1303, %v1367
    %v1370 = vadd.f32 %v1304, %v1368
    %s1371 = sld [smem:[#allocation5 + $0x881]]
    %v1372 = vstv %s1371
    %v1373 = vmul.f32 %v1372, %v1363
    %v1374 = vmul.f32 %v1372, %v1364
    %v1375 = vadd.f32 %v1309, %v1373
    %v1376 = vadd.f32 %v1310, %v1374
    %s1377 = sld [smem:[#allocation5 + $0x882]]
    %v1378 = vstv %s1377
    %v1379 = vmul.f32 %v1378, %v1363
    %v1380 = vmul.f32 %v1378, %v1364
    %v1381 = vadd.f32 %v1315, %v1379
    %v1382 = vadd.f32 %v1316, %v1380
    %s1383 = sld [smem:[#allocation5 + $0x883]]
    %v1384 = vstv %s1383
    %v1385 = vmul.f32 %v1384, %v1363
    %v1386 = vmul.f32 %v1384, %v1364
    %v1387 = vadd.f32 %v1321, %v1385
    %v1388 = vadd.f32 %v1322, %v1386
    %s1389 = sld [smem:[#allocation2 + $0x12]]
    %v1390 = vstv %s1389
    %v1391 = vmul.f32 %v1390, %v184
    %v1392 = vmul.f32 %v1390, %v185
    %1393 = vset.pattern.permute.xlu0 18
    %1394 = vperm.xlu0 %1393, %v70
    %v1395 = vpop.permute.xlu0 %1394
    %v1397 = vadd.f32 %v1395, %v1391
    %v1398 = vadd.f32 %v1395, %v1392
    %s1399 = sld [smem:[#allocation2 + $0x92]]
    %v1400 = vstv %s1399
    %v1401 = vmul.f32 %v1400, %v186
    %v1402 = vmul.f32 %v1400, %v187
    %v1403 = vadd.f32 %v1397, %v1401
    %v1404 = vadd.f32 %v1398, %v1402
    %s1405 = sld [smem:[#allocation2 + $0x112]]
    %v1406 = vstv %s1405
    %v1407 = vmul.f32 %v1406, %v188
    %v1408 = vmul.f32 %v1406, %v189
    %v1409 = vadd.f32 %v1403, %v1407
    %v1410 = vadd.f32 %v1404, %v1408
    %s1411 = sld [smem:[#allocation2 + $0x192]]
    %v1412 = vstv %s1411
    %v1413 = vmul.f32 %v1412, %v190
    %v1414 = vmul.f32 %v1412, %v191
    %v1415 = vadd.f32 %v1409, %v1413
    %v1416 = vadd.f32 %v1410, %v1414
    %v1417 = vxor.u32 %v1415, 2147483648
    %v1418 = vxor.u32 %v1416, 2147483648
    %v1419 = vmul.f32 %v1417, 1.442695
    %v1420 = vpow.pop %v1419
    %v1421 = vmul.f32 %v1418, 1.442695
    %v1422 = vpow.pop %v1421
    %v1423 = vadd.f32 %v1420, 1.0
    %v1424 = vadd.f32 %v1422, 1.0
    %v1425 = vrcp.pop %v1423
    %v1426 = vmul.f32 1.0, %v1425
    %v1427 = vrcp.pop %v1424
    %v1428 = vmul.f32 1.0, %v1427
    %v1429 = vmul.f32 %v1415, %v1426
    %v1430 = vmul.f32 %v1416, %v1428
    %s1431 = sld [smem:[#allocation5 + $0x900]]
    %v1432 = vstv %s1431
    %v1433 = vmul.f32 %v1432, %v1429
    %v1434 = vmul.f32 %v1432, %v1430
    %v1435 = vadd.f32 %v1369, %v1433
    %v1436 = vadd.f32 %v1370, %v1434
    %s1437 = sld [smem:[#allocation5 + $0x901]]
    %v1438 = vstv %s1437
    %v1439 = vmul.f32 %v1438, %v1429
    %v1440 = vmul.f32 %v1438, %v1430
    %v1441 = vadd.f32 %v1375, %v1439
    %v1442 = vadd.f32 %v1376, %v1440
    %s1443 = sld [smem:[#allocation5 + $0x902]]
    %v1444 = vstv %s1443
    %v1445 = vmul.f32 %v1444, %v1429
    %v1446 = vmul.f32 %v1444, %v1430
    %v1447 = vadd.f32 %v1381, %v1445
    %v1448 = vadd.f32 %v1382, %v1446
    %s1449 = sld [smem:[#allocation5 + $0x903]]
    %v1450 = vstv %s1449
    %v1451 = vmul.f32 %v1450, %v1429
    %v1452 = vmul.f32 %v1450, %v1430
    %v1453 = vadd.f32 %v1387, %v1451
    %v1454 = vadd.f32 %v1388, %v1452
    %s1455 = sld [smem:[#allocation2 + $0x13]]
    %v1456 = vstv %s1455
    %v1457 = vmul.f32 %v1456, %v184
    %v1458 = vmul.f32 %v1456, %v185
    %1459 = vset.pattern.permute.xlu0 19
    %1460 = vperm.xlu0 %1459, %v70
    %v1461 = vpop.permute.xlu0 %1460
    %v1463 = vadd.f32 %v1461, %v1457
    %v1464 = vadd.f32 %v1461, %v1458
    %s1465 = sld [smem:[#allocation2 + $0x93]]
    %v1466 = vstv %s1465
    %v1467 = vmul.f32 %v1466, %v186
    %v1468 = vmul.f32 %v1466, %v187
    %v1469 = vadd.f32 %v1463, %v1467
    %v1470 = vadd.f32 %v1464, %v1468
    %s1471 = sld [smem:[#allocation2 + $0x113]]
    %v1472 = vstv %s1471
    %v1473 = vmul.f32 %v1472, %v188
    %v1474 = vmul.f32 %v1472, %v189
    %v1475 = vadd.f32 %v1469, %v1473
    %v1476 = vadd.f32 %v1470, %v1474
    %s1477 = sld [smem:[#allocation2 + $0x193]]
    %v1478 = vstv %s1477
    %v1479 = vmul.f32 %v1478, %v190
    %v1480 = vmul.f32 %v1478, %v191
    %v1481 = vadd.f32 %v1475, %v1479
    %v1482 = vadd.f32 %v1476, %v1480
    %v1483 = vxor.u32 %v1481, 2147483648
    %v1484 = vxor.u32 %v1482, 2147483648
    %v1485 = vmul.f32 %v1483, 1.442695
    %v1486 = vpow.pop %v1485
    %v1487 = vmul.f32 %v1484, 1.442695
    %v1488 = vpow.pop %v1487
    %v1489 = vadd.f32 %v1486, 1.0
    %v1490 = vadd.f32 %v1488, 1.0
    %v1491 = vrcp.pop %v1489
    %v1492 = vmul.f32 1.0, %v1491
    %v1493 = vrcp.pop %v1490
    %v1494 = vmul.f32 1.0, %v1493
    %v1495 = vmul.f32 %v1481, %v1492
    %v1496 = vmul.f32 %v1482, %v1494
    %s1497 = sld [smem:[#allocation5 + $0x980]]
    %v1498 = vstv %s1497
    %v1499 = vmul.f32 %v1498, %v1495
    %v1500 = vmul.f32 %v1498, %v1496
    %v1501 = vadd.f32 %v1435, %v1499
    %v1502 = vadd.f32 %v1436, %v1500
    %s1503 = sld [smem:[#allocation5 + $0x981]]
    %v1504 = vstv %s1503
    %v1505 = vmul.f32 %v1504, %v1495
    %v1506 = vmul.f32 %v1504, %v1496
    %v1507 = vadd.f32 %v1441, %v1505
    %v1508 = vadd.f32 %v1442, %v1506
    %s1509 = sld [smem:[#allocation5 + $0x982]]
    %v1510 = vstv %s1509
    %v1511 = vmul.f32 %v1510, %v1495
    %v1512 = vmul.f32 %v1510, %v1496
    %v1513 = vadd.f32 %v1447, %v1511
    %v1514 = vadd.f32 %v1448, %v1512
    %s1515 = sld [smem:[#allocation5 + $0x983]]
    %v1516 = vstv %s1515
    %v1517 = vmul.f32 %v1516, %v1495
    %v1518 = vmul.f32 %v1516, %v1496
    %v1519 = vadd.f32 %v1453, %v1517
    %v1520 = vadd.f32 %v1454, %v1518
    %s1521 = sld [smem:[#allocation2 + $0x14]]
    %v1522 = vstv %s1521
    %v1523 = vmul.f32 %v1522, %v184
    %v1524 = vmul.f32 %v1522, %v185
    %1525 = vset.pattern.permute.xlu0 20
    %1526 = vperm.xlu0 %1525, %v70
    %v1527 = vpop.permute.xlu0 %1526
    %v1529 = vadd.f32 %v1527, %v1523
    %v1530 = vadd.f32 %v1527, %v1524
    %s1531 = sld [smem:[#allocation2 + $0x94]]
    %v1532 = vstv %s1531
    %v1533 = vmul.f32 %v1532, %v186
    %v1534 = vmul.f32 %v1532, %v187
    %v1535 = vadd.f32 %v1529, %v1533
    %v1536 = vadd.f32 %v1530, %v1534
    %s1537 = sld [smem:[#allocation2 + $0x114]]
    %v1538 = vstv %s1537
    %v1539 = vmul.f32 %v1538, %v188
    %v1540 = vmul.f32 %v1538, %v189
    %v1541 = vadd.f32 %v1535, %v1539
    %v1542 = vadd.f32 %v1536, %v1540
    %s1543 = sld [smem:[#allocation2 + $0x194]]
    %v1544 = vstv %s1543
    %v1545 = vmul.f32 %v1544, %v190
    %v1546 = vmul.f32 %v1544, %v191
    %v1547 = vadd.f32 %v1541, %v1545
    %v1548 = vadd.f32 %v1542, %v1546
    %v1549 = vxor.u32 %v1547, 2147483648
    %v1550 = vxor.u32 %v1548, 2147483648
    %v1551 = vmul.f32 %v1549, 1.442695
    %v1552 = vpow.pop %v1551
    %v1553 = vmul.f32 %v1550, 1.442695
    %v1554 = vpow.pop %v1553
    %v1555 = vadd.f32 %v1552, 1.0
    %v1556 = vadd.f32 %v1554, 1.0
    %v1557 = vrcp.pop %v1555
    %v1558 = vmul.f32 1.0, %v1557
    %v1559 = vrcp.pop %v1556
    %v1560 = vmul.f32 1.0, %v1559
    %v1561 = vmul.f32 %v1547, %v1558
    %v1562 = vmul.f32 %v1548, %v1560
    %s1563 = sld [smem:[#allocation5 + $0xa00]]
    %v1564 = vstv %s1563
    %v1565 = vmul.f32 %v1564, %v1561
    %v1566 = vmul.f32 %v1564, %v1562
    %v1567 = vadd.f32 %v1501, %v1565
    %v1568 = vadd.f32 %v1502, %v1566
    %s1569 = sld [smem:[#allocation5 + $0xa01]]
    %v1570 = vstv %s1569
    %v1571 = vmul.f32 %v1570, %v1561
    %v1572 = vmul.f32 %v1570, %v1562
    %v1573 = vadd.f32 %v1507, %v1571
    %v1574 = vadd.f32 %v1508, %v1572
    %s1575 = sld [smem:[#allocation5 + $0xa02]]
    %v1576 = vstv %s1575
    %v1577 = vmul.f32 %v1576, %v1561
    %v1578 = vmul.f32 %v1576, %v1562
    %v1579 = vadd.f32 %v1513, %v1577
    %v1580 = vadd.f32 %v1514, %v1578
    %s1581 = sld [smem:[#allocation5 + $0xa03]]
    %v1582 = vstv %s1581
    %v1583 = vmul.f32 %v1582, %v1561
    %v1584 = vmul.f32 %v1582, %v1562
    %v1585 = vadd.f32 %v1519, %v1583
    %v1586 = vadd.f32 %v1520, %v1584
    %s1587 = sld [smem:[#allocation2 + $0x15]]
    %v1588 = vstv %s1587
    %v1589 = vmul.f32 %v1588, %v184
    %v1590 = vmul.f32 %v1588, %v185
    %1591 = vset.pattern.permute.xlu0 21
    %1592 = vperm.xlu0 %1591, %v70
    %v1593 = vpop.permute.xlu0 %1592
    %v1595 = vadd.f32 %v1593, %v1589
    %v1596 = vadd.f32 %v1593, %v1590
    %s1597 = sld [smem:[#allocation2 + $0x95]]
    %v1598 = vstv %s1597
    %v1599 = vmul.f32 %v1598, %v186
    %v1600 = vmul.f32 %v1598, %v187
    %v1601 = vadd.f32 %v1595, %v1599
    %v1602 = vadd.f32 %v1596, %v1600
    %s1603 = sld [smem:[#allocation2 + $0x115]]
    %v1604 = vstv %s1603
    %v1605 = vmul.f32 %v1604, %v188
    %v1606 = vmul.f32 %v1604, %v189
    %v1607 = vadd.f32 %v1601, %v1605
    %v1608 = vadd.f32 %v1602, %v1606
    %s1609 = sld [smem:[#allocation2 + $0x195]]
    %v1610 = vstv %s1609
    %v1611 = vmul.f32 %v1610, %v190
    %v1612 = vmul.f32 %v1610, %v191
    %v1613 = vadd.f32 %v1607, %v1611
    %v1614 = vadd.f32 %v1608, %v1612
    %v1615 = vxor.u32 %v1613, 2147483648
    %v1616 = vxor.u32 %v1614, 2147483648
    %v1617 = vmul.f32 %v1615, 1.442695
    %v1618 = vpow.pop %v1617
    %v1619 = vmul.f32 %v1616, 1.442695
    %v1620 = vpow.pop %v1619
    %v1621 = vadd.f32 %v1618, 1.0
    %v1622 = vadd.f32 %v1620, 1.0
    %v1623 = vrcp.pop %v1621
    %v1624 = vmul.f32 1.0, %v1623
    %v1625 = vrcp.pop %v1622
    %v1626 = vmul.f32 1.0, %v1625
    %v1627 = vmul.f32 %v1613, %v1624
    %v1628 = vmul.f32 %v1614, %v1626
    %s1629 = sld [smem:[#allocation5 + $0xa80]]
    %v1630 = vstv %s1629
    %v1631 = vmul.f32 %v1630, %v1627
    %v1632 = vmul.f32 %v1630, %v1628
    %v1633 = vadd.f32 %v1567, %v1631
    %v1634 = vadd.f32 %v1568, %v1632
    %s1635 = sld [smem:[#allocation5 + $0xa81]]
    %v1636 = vstv %s1635
    %v1637 = vmul.f32 %v1636, %v1627
    %v1638 = vmul.f32 %v1636, %v1628
    %v1639 = vadd.f32 %v1573, %v1637
    %v1640 = vadd.f32 %v1574, %v1638
    %s1641 = sld [smem:[#allocation5 + $0xa82]]
    %v1642 = vstv %s1641
    %v1643 = vmul.f32 %v1642, %v1627
    %v1644 = vmul.f32 %v1642, %v1628
    %v1645 = vadd.f32 %v1579, %v1643
    %v1646 = vadd.f32 %v1580, %v1644
    %s1647 = sld [smem:[#allocation5 + $0xa83]]
    %v1648 = vstv %s1647
    %v1649 = vmul.f32 %v1648, %v1627
    %v1650 = vmul.f32 %v1648, %v1628
    %v1651 = vadd.f32 %v1585, %v1649
    %v1652 = vadd.f32 %v1586, %v1650
    %s1653 = sld [smem:[#allocation2 + $0x16]]
    %v1654 = vstv %s1653
    %v1655 = vmul.f32 %v1654, %v184
    %v1656 = vmul.f32 %v1654, %v185
    %1657 = vset.pattern.permute.xlu0 22
    %1658 = vperm.xlu0 %1657, %v70
    %v1659 = vpop.permute.xlu0 %1658
    %v1661 = vadd.f32 %v1659, %v1655
    %v1662 = vadd.f32 %v1659, %v1656
    %s1663 = sld [smem:[#allocation2 + $0x96]]
    %v1664 = vstv %s1663
    %v1665 = vmul.f32 %v1664, %v186
    %v1666 = vmul.f32 %v1664, %v187
    %v1667 = vadd.f32 %v1661, %v1665
    %v1668 = vadd.f32 %v1662, %v1666
    %s1669 = sld [smem:[#allocation2 + $0x116]]
    %v1670 = vstv %s1669
    %v1671 = vmul.f32 %v1670, %v188
    %v1672 = vmul.f32 %v1670, %v189
    %v1673 = vadd.f32 %v1667, %v1671
    %v1674 = vadd.f32 %v1668, %v1672
    %s1675 = sld [smem:[#allocation2 + $0x196]]
    %v1676 = vstv %s1675
    %v1677 = vmul.f32 %v1676, %v190
    %v1678 = vmul.f32 %v1676, %v191
    %v1679 = vadd.f32 %v1673, %v1677
    %v1680 = vadd.f32 %v1674, %v1678
    %v1681 = vxor.u32 %v1679, 2147483648
    %v1682 = vxor.u32 %v1680, 2147483648
    %v1683 = vmul.f32 %v1681, 1.442695
    %v1684 = vpow.pop %v1683
    %v1685 = vmul.f32 %v1682, 1.442695
    %v1686 = vpow.pop %v1685
    %v1687 = vadd.f32 %v1684, 1.0
    %v1688 = vadd.f32 %v1686, 1.0
    %v1689 = vrcp.pop %v1687
    %v1690 = vmul.f32 1.0, %v1689
    %v1691 = vrcp.pop %v1688
    %v1692 = vmul.f32 1.0, %v1691
    %v1693 = vmul.f32 %v1679, %v1690
    %v1694 = vmul.f32 %v1680, %v1692
    %s1695 = sld [smem:[#allocation5 + $0xb00]]
    %v1696 = vstv %s1695
    %v1697 = vmul.f32 %v1696, %v1693
    %v1698 = vmul.f32 %v1696, %v1694
    %v1699 = vadd.f32 %v1633, %v1697
    %v1700 = vadd.f32 %v1634, %v1698
    %s1701 = sld [smem:[#allocation5 + $0xb01]]
    %v1702 = vstv %s1701
    %v1703 = vmul.f32 %v1702, %v1693
    %v1704 = vmul.f32 %v1702, %v1694
    %v1705 = vadd.f32 %v1639, %v1703
    %v1706 = vadd.f32 %v1640, %v1704
    %s1707 = sld [smem:[#allocation5 + $0xb02]]
    %v1708 = vstv %s1707
    %v1709 = vmul.f32 %v1708, %v1693
    %v1710 = vmul.f32 %v1708, %v1694
    %v1711 = vadd.f32 %v1645, %v1709
    %v1712 = vadd.f32 %v1646, %v1710
    %s1713 = sld [smem:[#allocation5 + $0xb03]]
    %v1714 = vstv %s1713
    %v1715 = vmul.f32 %v1714, %v1693
    %v1716 = vmul.f32 %v1714, %v1694
    %v1717 = vadd.f32 %v1651, %v1715
    %v1718 = vadd.f32 %v1652, %v1716
    %s1719 = sld [smem:[#allocation2 + $0x17]]
    %v1720 = vstv %s1719
    %v1721 = vmul.f32 %v1720, %v184
    %v1722 = vmul.f32 %v1720, %v185
    %1723 = vset.pattern.permute.xlu0 23
    %1724 = vperm.xlu0 %1723, %v70
    %v1725 = vpop.permute.xlu0 %1724
    %v1727 = vadd.f32 %v1725, %v1721
    %v1728 = vadd.f32 %v1725, %v1722
    %s1729 = sld [smem:[#allocation2 + $0x97]]
    %v1730 = vstv %s1729
    %v1731 = vmul.f32 %v1730, %v186
    %v1732 = vmul.f32 %v1730, %v187
    %v1733 = vadd.f32 %v1727, %v1731
    %v1734 = vadd.f32 %v1728, %v1732
    %s1735 = sld [smem:[#allocation2 + $0x117]]
    %v1736 = vstv %s1735
    %v1737 = vmul.f32 %v1736, %v188
    %v1738 = vmul.f32 %v1736, %v189
    %v1739 = vadd.f32 %v1733, %v1737
    %v1740 = vadd.f32 %v1734, %v1738
    %s1741 = sld [smem:[#allocation2 + $0x197]]
    %v1742 = vstv %s1741
    %v1743 = vmul.f32 %v1742, %v190
    %v1744 = vmul.f32 %v1742, %v191
    %v1745 = vadd.f32 %v1739, %v1743
    %v1746 = vadd.f32 %v1740, %v1744
    %v1747 = vxor.u32 %v1745, 2147483648
    %v1748 = vxor.u32 %v1746, 2147483648
    %v1749 = vmul.f32 %v1747, 1.442695
    %v1750 = vpow.pop %v1749
    %v1751 = vmul.f32 %v1748, 1.442695
    %v1752 = vpow.pop %v1751
    %v1753 = vadd.f32 %v1750, 1.0
    %v1754 = vadd.f32 %v1752, 1.0
    %v1755 = vrcp.pop %v1753
    %v1756 = vmul.f32 1.0, %v1755
    %v1757 = vrcp.pop %v1754
    %v1758 = vmul.f32 1.0, %v1757
    %v1759 = vmul.f32 %v1745, %v1756
    %v1760 = vmul.f32 %v1746, %v1758
    %s1761 = sld [smem:[#allocation5 + $0xb80]]
    %v1762 = vstv %s1761
    %v1763 = vmul.f32 %v1762, %v1759
    %v1764 = vmul.f32 %v1762, %v1760
    %v1765 = vadd.f32 %v1699, %v1763
    %v1766 = vadd.f32 %v1700, %v1764
    %s1767 = sld [smem:[#allocation5 + $0xb81]]
    %v1768 = vstv %s1767
    %v1769 = vmul.f32 %v1768, %v1759
    %v1770 = vmul.f32 %v1768, %v1760
    %v1771 = vadd.f32 %v1705, %v1769
    %v1772 = vadd.f32 %v1706, %v1770
    %s1773 = sld [smem:[#allocation5 + $0xb82]]
    %v1774 = vstv %s1773
    %v1775 = vmul.f32 %v1774, %v1759
    %v1776 = vmul.f32 %v1774, %v1760
    %v1777 = vadd.f32 %v1711, %v1775
    %v1778 = vadd.f32 %v1712, %v1776
    %s1779 = sld [smem:[#allocation5 + $0xb83]]
    %v1780 = vstv %s1779
    %v1781 = vmul.f32 %v1780, %v1759
    %v1782 = vmul.f32 %v1780, %v1760
    %v1783 = vadd.f32 %v1717, %v1781
    %v1784 = vadd.f32 %v1718, %v1782
    %s1785 = sld [smem:[#allocation2 + $0x18]]
    %v1786 = vstv %s1785
    %v1787 = vmul.f32 %v1786, %v184
    %v1788 = vmul.f32 %v1786, %v185
    %1789 = vset.pattern.permute.xlu0 24
    %1790 = vperm.xlu0 %1789, %v70
    %v1791 = vpop.permute.xlu0 %1790
    %v1793 = vadd.f32 %v1791, %v1787
    %v1794 = vadd.f32 %v1791, %v1788
    %s1795 = sld [smem:[#allocation2 + $0x98]]
    %v1796 = vstv %s1795
    %v1797 = vmul.f32 %v1796, %v186
    %v1798 = vmul.f32 %v1796, %v187
    %v1799 = vadd.f32 %v1793, %v1797
    %v1800 = vadd.f32 %v1794, %v1798
    %s1801 = sld [smem:[#allocation2 + $0x118]]
    %v1802 = vstv %s1801
    %v1803 = vmul.f32 %v1802, %v188
    %v1804 = vmul.f32 %v1802, %v189
    %v1805 = vadd.f32 %v1799, %v1803
    %v1806 = vadd.f32 %v1800, %v1804
    %s1807 = sld [smem:[#allocation2 + $0x198]]
    %v1808 = vstv %s1807
    %v1809 = vmul.f32 %v1808, %v190
    %v1810 = vmul.f32 %v1808, %v191
    %v1811 = vadd.f32 %v1805, %v1809
    %v1812 = vadd.f32 %v1806, %v1810
    %v1813 = vxor.u32 %v1811, 2147483648
    %v1814 = vxor.u32 %v1812, 2147483648
    %v1815 = vmul.f32 %v1813, 1.442695
    %v1816 = vpow.pop %v1815
    %v1817 = vmul.f32 %v1814, 1.442695
    %v1818 = vpow.pop %v1817
    %v1819 = vadd.f32 %v1816, 1.0
    %v1820 = vadd.f32 %v1818, 1.0
    %v1821 = vrcp.pop %v1819
    %v1822 = vmul.f32 1.0, %v1821
    %v1823 = vrcp.pop %v1820
    %v1824 = vmul.f32 1.0, %v1823
    %v1825 = vmul.f32 %v1811, %v1822
    %v1826 = vmul.f32 %v1812, %v1824
    %s1827 = sld [smem:[#allocation5 + $0xc00]]
    %v1828 = vstv %s1827
    %v1829 = vmul.f32 %v1828, %v1825
    %v1830 = vmul.f32 %v1828, %v1826
    %v1831 = vadd.f32 %v1765, %v1829
    %v1832 = vadd.f32 %v1766, %v1830
    %s1833 = sld [smem:[#allocation5 + $0xc01]]
    %v1834 = vstv %s1833
    %v1835 = vmul.f32 %v1834, %v1825
    %v1836 = vmul.f32 %v1834, %v1826
    %v1837 = vadd.f32 %v1771, %v1835
    %v1838 = vadd.f32 %v1772, %v1836
    %s1839 = sld [smem:[#allocation5 + $0xc02]]
    %v1840 = vstv %s1839
    %v1841 = vmul.f32 %v1840, %v1825
    %v1842 = vmul.f32 %v1840, %v1826
    %v1843 = vadd.f32 %v1777, %v1841
    %v1844 = vadd.f32 %v1778, %v1842
    %s1845 = sld [smem:[#allocation5 + $0xc03]]
    %v1846 = vstv %s1845
    %v1847 = vmul.f32 %v1846, %v1825
    %v1848 = vmul.f32 %v1846, %v1826
    %v1849 = vadd.f32 %v1783, %v1847
    %v1850 = vadd.f32 %v1784, %v1848
    %s1851 = sld [smem:[#allocation2 + $0x19]]
    %v1852 = vstv %s1851
    %v1853 = vmul.f32 %v1852, %v184
    %v1854 = vmul.f32 %v1852, %v185
    %1855 = vset.pattern.permute.xlu0 25
    %1856 = vperm.xlu0 %1855, %v70
    %v1857 = vpop.permute.xlu0 %1856
    %v1859 = vadd.f32 %v1857, %v1853
    %v1860 = vadd.f32 %v1857, %v1854
    %s1861 = sld [smem:[#allocation2 + $0x99]]
    %v1862 = vstv %s1861
    %v1863 = vmul.f32 %v1862, %v186
    %v1864 = vmul.f32 %v1862, %v187
    %v1865 = vadd.f32 %v1859, %v1863
    %v1866 = vadd.f32 %v1860, %v1864
    %s1867 = sld [smem:[#allocation2 + $0x119]]
    %v1868 = vstv %s1867
    %v1869 = vmul.f32 %v1868, %v188
    %v1870 = vmul.f32 %v1868, %v189
    %v1871 = vadd.f32 %v1865, %v1869
    %v1872 = vadd.f32 %v1866, %v1870
    %s1873 = sld [smem:[#allocation2 + $0x199]]
    %v1874 = vstv %s1873
    %v1875 = vmul.f32 %v1874, %v190
    %v1876 = vmul.f32 %v1874, %v191
    %v1877 = vadd.f32 %v1871, %v1875
    %v1878 = vadd.f32 %v1872, %v1876
    %v1879 = vxor.u32 %v1877, 2147483648
    %v1880 = vxor.u32 %v1878, 2147483648
    %v1881 = vmul.f32 %v1879, 1.442695
    %v1882 = vpow.pop %v1881
    %v1883 = vmul.f32 %v1880, 1.442695
    %v1884 = vpow.pop %v1883
    %v1885 = vadd.f32 %v1882, 1.0
    %v1886 = vadd.f32 %v1884, 1.0
    %v1887 = vrcp.pop %v1885
    %v1888 = vmul.f32 1.0, %v1887
    %v1889 = vrcp.pop %v1886
    %v1890 = vmul.f32 1.0, %v1889
    %v1891 = vmul.f32 %v1877, %v1888
    %v1892 = vmul.f32 %v1878, %v1890
    %s1893 = sld [smem:[#allocation5 + $0xc80]]
    %v1894 = vstv %s1893
    %v1895 = vmul.f32 %v1894, %v1891
    %v1896 = vmul.f32 %v1894, %v1892
    %v1897 = vadd.f32 %v1831, %v1895
    %v1898 = vadd.f32 %v1832, %v1896
    %s1899 = sld [smem:[#allocation5 + $0xc81]]
    %v1900 = vstv %s1899
    %v1901 = vmul.f32 %v1900, %v1891
    %v1902 = vmul.f32 %v1900, %v1892
    %v1903 = vadd.f32 %v1837, %v1901
    %v1904 = vadd.f32 %v1838, %v1902
    %s1905 = sld [smem:[#allocation5 + $0xc82]]
    %v1906 = vstv %s1905
    %v1907 = vmul.f32 %v1906, %v1891
    %v1908 = vmul.f32 %v1906, %v1892
    %v1909 = vadd.f32 %v1843, %v1907
    %v1910 = vadd.f32 %v1844, %v1908
    %s1911 = sld [smem:[#allocation5 + $0xc83]]
    %v1912 = vstv %s1911
    %v1913 = vmul.f32 %v1912, %v1891
    %v1914 = vmul.f32 %v1912, %v1892
    %v1915 = vadd.f32 %v1849, %v1913
    %v1916 = vadd.f32 %v1850, %v1914
    %s1917 = sld [smem:[#allocation2 + $0x1a]]
    %v1918 = vstv %s1917
    %v1919 = vmul.f32 %v1918, %v184
    %v1920 = vmul.f32 %v1918, %v185
    %1921 = vset.pattern.permute.xlu0 26
    %1922 = vperm.xlu0 %1921, %v70
    %v1923 = vpop.permute.xlu0 %1922
    %v1925 = vadd.f32 %v1923, %v1919
    %v1926 = vadd.f32 %v1923, %v1920
    %s1927 = sld [smem:[#allocation2 + $0x9a]]
    %v1928 = vstv %s1927
    %v1929 = vmul.f32 %v1928, %v186
    %v1930 = vmul.f32 %v1928, %v187
    %v1931 = vadd.f32 %v1925, %v1929
    %v1932 = vadd.f32 %v1926, %v1930
    %s1933 = sld [smem:[#allocation2 + $0x11a]]
    %v1934 = vstv %s1933
    %v1935 = vmul.f32 %v1934, %v188
    %v1936 = vmul.f32 %v1934, %v189
    %v1937 = vadd.f32 %v1931, %v1935
    %v1938 = vadd.f32 %v1932, %v1936
    %s1939 = sld [smem:[#allocation2 + $0x19a]]
    %v1940 = vstv %s1939
    %v1941 = vmul.f32 %v1940, %v190
    %v1942 = vmul.f32 %v1940, %v191
    %v1943 = vadd.f32 %v1937, %v1941
    %v1944 = vadd.f32 %v1938, %v1942
    %v1945 = vxor.u32 %v1943, 2147483648
    %v1946 = vxor.u32 %v1944, 2147483648
    %v1947 = vmul.f32 %v1945, 1.442695
    %v1948 = vpow.pop %v1947
    %v1949 = vmul.f32 %v1946, 1.442695
    %v1950 = vpow.pop %v1949
    %v1951 = vadd.f32 %v1948, 1.0
    %v1952 = vadd.f32 %v1950, 1.0
    %v1953 = vrcp.pop %v1951
    %v1954 = vmul.f32 1.0, %v1953
    %v1955 = vrcp.pop %v1952
    %v1956 = vmul.f32 1.0, %v1955
    %v1957 = vmul.f32 %v1943, %v1954
    %v1958 = vmul.f32 %v1944, %v1956
    %s1959 = sld [smem:[#allocation5 + $0xd00]]
    %v1960 = vstv %s1959
    %v1961 = vmul.f32 %v1960, %v1957
    %v1962 = vmul.f32 %v1960, %v1958
    %v1963 = vadd.f32 %v1897, %v1961
    %v1964 = vadd.f32 %v1898, %v1962
    %s1965 = sld [smem:[#allocation5 + $0xd01]]
    %v1966 = vstv %s1965
    %v1967 = vmul.f32 %v1966, %v1957
    %v1968 = vmul.f32 %v1966, %v1958
    %v1969 = vadd.f32 %v1903, %v1967
    %v1970 = vadd.f32 %v1904, %v1968
    %s1971 = sld [smem:[#allocation5 + $0xd02]]
    %v1972 = vstv %s1971
    %v1973 = vmul.f32 %v1972, %v1957
    %v1974 = vmul.f32 %v1972, %v1958
    %v1975 = vadd.f32 %v1909, %v1973
    %v1976 = vadd.f32 %v1910, %v1974
    %s1977 = sld [smem:[#allocation5 + $0xd03]]
    %v1978 = vstv %s1977
    %v1979 = vmul.f32 %v1978, %v1957
    %v1980 = vmul.f32 %v1978, %v1958
    %v1981 = vadd.f32 %v1915, %v1979
    %v1982 = vadd.f32 %v1916, %v1980
    %s1983 = sld [smem:[#allocation2 + $0x1b]]
    %v1984 = vstv %s1983
    %v1985 = vmul.f32 %v1984, %v184
    %v1986 = vmul.f32 %v1984, %v185
    %1987 = vset.pattern.permute.xlu0 27
    %1988 = vperm.xlu0 %1987, %v70
    %v1989 = vpop.permute.xlu0 %1988
    %v1991 = vadd.f32 %v1989, %v1985
    %v1992 = vadd.f32 %v1989, %v1986
    %s1993 = sld [smem:[#allocation2 + $0x9b]]
    %v1994 = vstv %s1993
    %v1995 = vmul.f32 %v1994, %v186
    %v1996 = vmul.f32 %v1994, %v187
    %v1997 = vadd.f32 %v1991, %v1995
    %v1998 = vadd.f32 %v1992, %v1996
    %s1999 = sld [smem:[#allocation2 + $0x11b]]
    %v2000 = vstv %s1999
    %v2001 = vmul.f32 %v2000, %v188
    %v2002 = vmul.f32 %v2000, %v189
    %v2003 = vadd.f32 %v1997, %v2001
    %v2004 = vadd.f32 %v1998, %v2002
    %s2005 = sld [smem:[#allocation2 + $0x19b]]
    %v2006 = vstv %s2005
    %v2007 = vmul.f32 %v2006, %v190
    %v2008 = vmul.f32 %v2006, %v191
    %v2009 = vadd.f32 %v2003, %v2007
    %v2010 = vadd.f32 %v2004, %v2008
    %v2011 = vxor.u32 %v2009, 2147483648
    %v2012 = vxor.u32 %v2010, 2147483648
    %v2013 = vmul.f32 %v2011, 1.442695
    %v2014 = vpow.pop %v2013
    %v2015 = vmul.f32 %v2012, 1.442695
    %v2016 = vpow.pop %v2015
    %v2017 = vadd.f32 %v2014, 1.0
    %v2018 = vadd.f32 %v2016, 1.0
    %v2019 = vrcp.pop %v2017
    %v2020 = vmul.f32 1.0, %v2019
    %v2021 = vrcp.pop %v2018
    %v2022 = vmul.f32 1.0, %v2021
    %v2023 = vmul.f32 %v2009, %v2020
    %v2024 = vmul.f32 %v2010, %v2022
    %s2025 = sld [smem:[#allocation5 + $0xd80]]
    %v2026 = vstv %s2025
    %v2027 = vmul.f32 %v2026, %v2023
    %v2028 = vmul.f32 %v2026, %v2024
    %v2029 = vadd.f32 %v1963, %v2027
    %v2030 = vadd.f32 %v1964, %v2028
    %s2031 = sld [smem:[#allocation5 + $0xd81]]
    %v2032 = vstv %s2031
    %v2033 = vmul.f32 %v2032, %v2023
    %v2034 = vmul.f32 %v2032, %v2024
    %v2035 = vadd.f32 %v1969, %v2033
    %v2036 = vadd.f32 %v1970, %v2034
    %s2037 = sld [smem:[#allocation5 + $0xd82]]
    %v2038 = vstv %s2037
    %v2039 = vmul.f32 %v2038, %v2023
    %v2040 = vmul.f32 %v2038, %v2024
    %v2041 = vadd.f32 %v1975, %v2039
    %v2042 = vadd.f32 %v1976, %v2040
    %s2043 = sld [smem:[#allocation5 + $0xd83]]
    %v2044 = vstv %s2043
    %v2045 = vmul.f32 %v2044, %v2023
    %v2046 = vmul.f32 %v2044, %v2024
    %v2047 = vadd.f32 %v1981, %v2045
    %v2048 = vadd.f32 %v1982, %v2046
    %s2049 = sld [smem:[#allocation2 + $0x1c]]
    %v2050 = vstv %s2049
    %v2051 = vmul.f32 %v2050, %v184
    %v2052 = vmul.f32 %v2050, %v185
    %2053 = vset.pattern.permute.xlu0 28
    %2054 = vperm.xlu0 %2053, %v70
    %v2055 = vpop.permute.xlu0 %2054
    %v2057 = vadd.f32 %v2055, %v2051
    %v2058 = vadd.f32 %v2055, %v2052
    %s2059 = sld [smem:[#allocation2 + $0x9c]]
    %v2060 = vstv %s2059
    %v2061 = vmul.f32 %v2060, %v186
    %v2062 = vmul.f32 %v2060, %v187
    %v2063 = vadd.f32 %v2057, %v2061
    %v2064 = vadd.f32 %v2058, %v2062
    %s2065 = sld [smem:[#allocation2 + $0x11c]]
    %v2066 = vstv %s2065
    %v2067 = vmul.f32 %v2066, %v188
    %v2068 = vmul.f32 %v2066, %v189
    %v2069 = vadd.f32 %v2063, %v2067
    %v2070 = vadd.f32 %v2064, %v2068
    %s2071 = sld [smem:[#allocation2 + $0x19c]]
    %v2072 = vstv %s2071
    %v2073 = vmul.f32 %v2072, %v190
    %v2074 = vmul.f32 %v2072, %v191
    %v2075 = vadd.f32 %v2069, %v2073
    %v2076 = vadd.f32 %v2070, %v2074
    %v2077 = vxor.u32 %v2075, 2147483648
    %v2078 = vxor.u32 %v2076, 2147483648
    %v2079 = vmul.f32 %v2077, 1.442695
    %v2080 = vpow.pop %v2079
    %v2081 = vmul.f32 %v2078, 1.442695
    %v2082 = vpow.pop %v2081
    %v2083 = vadd.f32 %v2080, 1.0
    %v2084 = vadd.f32 %v2082, 1.0
    %v2085 = vrcp.pop %v2083
    %v2086 = vmul.f32 1.0, %v2085
    %v2087 = vrcp.pop %v2084
    %v2088 = vmul.f32 1.0, %v2087
    %v2089 = vmul.f32 %v2075, %v2086
    %v2090 = vmul.f32 %v2076, %v2088
    %s2091 = sld [smem:[#allocation5 + $0xe00]]
    %v2092 = vstv %s2091
    %v2093 = vmul.f32 %v2092, %v2089
    %v2094 = vmul.f32 %v2092, %v2090
    %v2095 = vadd.f32 %v2029, %v2093
    %v2096 = vadd.f32 %v2030, %v2094
    %s2097 = sld [smem:[#allocation5 + $0xe01]]
    %v2098 = vstv %s2097
    %v2099 = vmul.f32 %v2098, %v2089
    %v2100 = vmul.f32 %v2098, %v2090
    %v2101 = vadd.f32 %v2035, %v2099
    %v2102 = vadd.f32 %v2036, %v2100
    %s2103 = sld [smem:[#allocation5 + $0xe02]]
    %v2104 = vstv %s2103
    %v2105 = vmul.f32 %v2104, %v2089
    %v2106 = vmul.f32 %v2104, %v2090
    %v2107 = vadd.f32 %v2041, %v2105
    %v2108 = vadd.f32 %v2042, %v2106
    %s2109 = sld [smem:[#allocation5 + $0xe03]]
    %v2110 = vstv %s2109
    %v2111 = vmul.f32 %v2110, %v2089
    %v2112 = vmul.f32 %v2110, %v2090
    %v2113 = vadd.f32 %v2047, %v2111
    %v2114 = vadd.f32 %v2048, %v2112
    %s2115 = sld [smem:[#allocation2 + $0x1d]]
    %v2116 = vstv %s2115
    %v2117 = vmul.f32 %v2116, %v184
    %v2118 = vmul.f32 %v2116, %v185
    %2119 = vset.pattern.permute.xlu0 29
    %2120 = vperm.xlu0 %2119, %v70
    %v2121 = vpop.permute.xlu0 %2120
    %v2123 = vadd.f32 %v2121, %v2117
    %v2124 = vadd.f32 %v2121, %v2118
    %s2125 = sld [smem:[#allocation2 + $0x9d]]
    %v2126 = vstv %s2125
    %v2127 = vmul.f32 %v2126, %v186
    %v2128 = vmul.f32 %v2126, %v187
    %v2129 = vadd.f32 %v2123, %v2127
    %v2130 = vadd.f32 %v2124, %v2128
    %s2131 = sld [smem:[#allocation2 + $0x11d]]
    %v2132 = vstv %s2131
    %v2133 = vmul.f32 %v2132, %v188
    %v2134 = vmul.f32 %v2132, %v189
    %v2135 = vadd.f32 %v2129, %v2133
    %v2136 = vadd.f32 %v2130, %v2134
    %s2137 = sld [smem:[#allocation2 + $0x19d]]
    %v2138 = vstv %s2137
    %v2139 = vmul.f32 %v2138, %v190
    %v2140 = vmul.f32 %v2138, %v191
    %v2141 = vadd.f32 %v2135, %v2139
    %v2142 = vadd.f32 %v2136, %v2140
    %v2143 = vxor.u32 %v2141, 2147483648
    %v2144 = vxor.u32 %v2142, 2147483648
    %v2145 = vmul.f32 %v2143, 1.442695
    %v2146 = vpow.pop %v2145
    %v2147 = vmul.f32 %v2144, 1.442695
    %v2148 = vpow.pop %v2147
    %v2149 = vadd.f32 %v2146, 1.0
    %v2150 = vadd.f32 %v2148, 1.0
    %v2151 = vrcp.pop %v2149
    %v2152 = vmul.f32 1.0, %v2151
    %v2153 = vrcp.pop %v2150
    %v2154 = vmul.f32 1.0, %v2153
    %v2155 = vmul.f32 %v2141, %v2152
    %v2156 = vmul.f32 %v2142, %v2154
    %s2157 = sld [smem:[#allocation5 + $0xe80]]
    %v2158 = vstv %s2157
    %v2159 = vmul.f32 %v2158, %v2155
    %v2160 = vmul.f32 %v2158, %v2156
    %v2161 = vadd.f32 %v2095, %v2159
    %v2162 = vadd.f32 %v2096, %v2160
    %s2163 = sld [smem:[#allocation5 + $0xe81]]
    %v2164 = vstv %s2163
    %v2165 = vmul.f32 %v2164, %v2155
    %v2166 = vmul.f32 %v2164, %v2156
    %v2167 = vadd.f32 %v2101, %v2165
    %v2168 = vadd.f32 %v2102, %v2166
    %s2169 = sld [smem:[#allocation5 + $0xe82]]
    %v2170 = vstv %s2169
    %v2171 = vmul.f32 %v2170, %v2155
    %v2172 = vmul.f32 %v2170, %v2156
    %v2173 = vadd.f32 %v2107, %v2171
    %v2174 = vadd.f32 %v2108, %v2172
    %s2175 = sld [smem:[#allocation5 + $0xe83]]
    %v2176 = vstv %s2175
    %v2177 = vmul.f32 %v2176, %v2155
    %v2178 = vmul.f32 %v2176, %v2156
    %v2179 = vadd.f32 %v2113, %v2177
    %v2180 = vadd.f32 %v2114, %v2178
    %s2181 = sld [smem:[#allocation2 + $0x1e]]
    %v2182 = vstv %s2181
    %v2183 = vmul.f32 %v2182, %v184
    %v2184 = vmul.f32 %v2182, %v185
    %2185 = vset.pattern.permute.xlu0 30
    %2186 = vperm.xlu0 %2185, %v70
    %v2187 = vpop.permute.xlu0 %2186
    %v2189 = vadd.f32 %v2187, %v2183
    %v2190 = vadd.f32 %v2187, %v2184
    %s2191 = sld [smem:[#allocation2 + $0x9e]]
    %v2192 = vstv %s2191
    %v2193 = vmul.f32 %v2192, %v186
    %v2194 = vmul.f32 %v2192, %v187
    %v2195 = vadd.f32 %v2189, %v2193
    %v2196 = vadd.f32 %v2190, %v2194
    %s2197 = sld [smem:[#allocation2 + $0x11e]]
    %v2198 = vstv %s2197
    %v2199 = vmul.f32 %v2198, %v188
    %v2200 = vmul.f32 %v2198, %v189
    %v2201 = vadd.f32 %v2195, %v2199
    %v2202 = vadd.f32 %v2196, %v2200
    %s2203 = sld [smem:[#allocation2 + $0x19e]]
    %v2204 = vstv %s2203
    %v2205 = vmul.f32 %v2204, %v190
    %v2206 = vmul.f32 %v2204, %v191
    %v2207 = vadd.f32 %v2201, %v2205
    %v2208 = vadd.f32 %v2202, %v2206
    %v2209 = vxor.u32 %v2207, 2147483648
    %v2210 = vxor.u32 %v2208, 2147483648
    %v2211 = vmul.f32 %v2209, 1.442695
    %v2212 = vpow.pop %v2211
    %v2213 = vmul.f32 %v2210, 1.442695
    %v2214 = vpow.pop %v2213
    %v2215 = vadd.f32 %v2212, 1.0
    %v2216 = vadd.f32 %v2214, 1.0
    %v2217 = vrcp.pop %v2215
    %v2218 = vmul.f32 1.0, %v2217
    %v2219 = vrcp.pop %v2216
    %v2220 = vmul.f32 1.0, %v2219
    %v2221 = vmul.f32 %v2207, %v2218
    %v2222 = vmul.f32 %v2208, %v2220
    %s2223 = sld [smem:[#allocation5 + $0xf00]]
    %v2224 = vstv %s2223
    %v2225 = vmul.f32 %v2224, %v2221
    %v2226 = vmul.f32 %v2224, %v2222
    %v2227 = vadd.f32 %v2161, %v2225
    %v2228 = vadd.f32 %v2162, %v2226
    %s2229 = sld [smem:[#allocation5 + $0xf01]]
    %v2230 = vstv %s2229
    %v2231 = vmul.f32 %v2230, %v2221
    %v2232 = vmul.f32 %v2230, %v2222
    %v2233 = vadd.f32 %v2167, %v2231
    %v2234 = vadd.f32 %v2168, %v2232
    %s2235 = sld [smem:[#allocation5 + $0xf02]]
    %v2236 = vstv %s2235
    %v2237 = vmul.f32 %v2236, %v2221
    %v2238 = vmul.f32 %v2236, %v2222
    %v2239 = vadd.f32 %v2173, %v2237
    %v2240 = vadd.f32 %v2174, %v2238
    %s2241 = sld [smem:[#allocation5 + $0xf03]]
    %v2242 = vstv %s2241
    %v2243 = vmul.f32 %v2242, %v2221
    %v2244 = vmul.f32 %v2242, %v2222
    %v2245 = vadd.f32 %v2179, %v2243
    %v2246 = vadd.f32 %v2180, %v2244
    %s2247 = sld [smem:[#allocation2 + $0x1f]]
    %v2248 = vstv %s2247
    %v2249 = vmul.f32 %v2248, %v184
    %v2250 = vmul.f32 %v2248, %v185
    %2251 = vset.pattern.permute.xlu0 31
    %2252 = vperm.xlu0 %2251, %v70
    %v2253 = vpop.permute.xlu0 %2252
    %v2255 = vadd.f32 %v2253, %v2249
    %v2256 = vadd.f32 %v2253, %v2250
    %s2257 = sld [smem:[#allocation2 + $0x9f]]
    %v2258 = vstv %s2257
    %v2259 = vmul.f32 %v2258, %v186
    %v2260 = vmul.f32 %v2258, %v187
    %v2261 = vadd.f32 %v2255, %v2259
    %v2262 = vadd.f32 %v2256, %v2260
    %s2263 = sld [smem:[#allocation2 + $0x11f]]
    %v2264 = vstv %s2263
    %v2265 = vmul.f32 %v2264, %v188
    %v2266 = vmul.f32 %v2264, %v189
    %v2267 = vadd.f32 %v2261, %v2265
    %v2268 = vadd.f32 %v2262, %v2266
    %s2269 = sld [smem:[#allocation2 + $0x19f]]
    %v2270 = vstv %s2269
    %v2271 = vmul.f32 %v2270, %v190
    %v2272 = vmul.f32 %v2270, %v191
    %v2273 = vadd.f32 %v2267, %v2271
    %v2274 = vadd.f32 %v2268, %v2272
    %v2275 = vxor.u32 %v2273, 2147483648
    %v2276 = vxor.u32 %v2274, 2147483648
    %v2277 = vmul.f32 %v2275, 1.442695
    %v2278 = vpow.pop %v2277
    %v2279 = vmul.f32 %v2276, 1.442695
    %v2280 = vpow.pop %v2279
    %v2281 = vadd.f32 %v2278, 1.0
    %v2282 = vadd.f32 %v2280, 1.0
    %v2283 = vrcp.pop %v2281
    %v2284 = vmul.f32 1.0, %v2283
    %v2285 = vrcp.pop %v2282
    %v2286 = vmul.f32 1.0, %v2285
    %v2287 = vmul.f32 %v2273, %v2284
    %v2288 = vmul.f32 %v2274, %v2286
    %s2289 = sld [smem:[#allocation5 + $0xf80]]
    %v2290 = vstv %s2289
    %v2291 = vmul.f32 %v2290, %v2287
    %v2292 = vmul.f32 %v2290, %v2288
    %v2293 = vadd.f32 %v2227, %v2291
    %v2294 = vadd.f32 %v2228, %v2292
    %s2295 = sld [smem:[#allocation5 + $0xf81]]
    %v2296 = vstv %s2295
    %v2297 = vmul.f32 %v2296, %v2287
    %v2298 = vmul.f32 %v2296, %v2288
    %v2299 = vadd.f32 %v2233, %v2297
    %v2300 = vadd.f32 %v2234, %v2298
    %s2301 = sld [smem:[#allocation5 + $0xf82]]
    %v2302 = vstv %s2301
    %v2303 = vmul.f32 %v2302, %v2287
    %v2304 = vmul.f32 %v2302, %v2288
    %v2305 = vadd.f32 %v2239, %v2303
    %v2306 = vadd.f32 %v2240, %v2304
    %s2307 = sld [smem:[#allocation5 + $0xf83]]
    %v2308 = vstv %s2307
    %v2309 = vmul.f32 %v2308, %v2287
    %v2310 = vmul.f32 %v2308, %v2288
    %v2311 = vadd.f32 %v2245, %v2309
    %v2312 = vadd.f32 %v2246, %v2310
    %v2313 = vsub.f32 %v2293, %v141
    %v2314 = vsub.f32 %v2294, %v149
    %v2315 = vmul.f32 %v2313, %v2313
    %v2316 = vmul.f32 %v2314, %v2314
    %v2317 = vadd.f32 %v2315, 0.0
    %v2318 = vadd.f32 %v2316, 0.0
    %v2319 = vsub.f32 %v2299, %v148
    %v2320 = vsub.f32 %v2300, %v150
    %v2321 = vmul.f32 %v2319, %v2319
    %v2322 = vmul.f32 %v2320, %v2320
    %v2323 = vadd.f32 %v2317, %v2321
    %v2324 = vadd.f32 %v2318, %v2322
    %v2325 = vsub.f32 %v2305, %v158
    %v2326 = vsub.f32 %v2306, %v166
    %v2327 = vmul.f32 %v2325, %v2325
    %v2328 = vmul.f32 %v2326, %v2326
    %v2329 = vadd.f32 %v2323, %v2327
    %v2330 = vadd.f32 %v2324, %v2328
    %v2331 = vsub.f32 %v2311, %v165
    %v2332 = vsub.f32 %v2312, %v167
    %v2333 = vmul.f32 %v2331, %v2331
    %v2334 = vmul.f32 %v2332, %v2332
    %v2335 = vadd.f32 %v2329, %v2333
    %v2336 = vadd.f32 %v2330, %v2334
    %2337 = vset.pattern.permute.xlu0 2
    %2338 = vperm.xlu0 %2337, %v69
    %v2339 = vpop.permute.xlu0 %2338
    %v2341 = vmul.f32 %v2335, %v2339
    %v2342 = vmul.f32 %v2336, %v2339
    %vm2343 = vcmask 1041408
    %v2344 = vsel %vm2343, %v2341, 0.0
    %v2345 = vsel %vm2343, %v2342, 0.0
    %v2346 = vadd.f32 %v2344, %v2345
    %2347 = vadd.xlane.f32.xlu0 %v2346
    %v2348 = vpop.xlane.xlu0 %2347
    %v2349 = vrot.slane %v2348, 4
    %v2350 = vadd.f32 %v2348, %v2349
    %v2351 = vrot.slane %v2350, 2
    %v2352 = vadd.f32 %v2350, %v2351
    %v2353 = vrot.slane %v2352, 1
    %v2354 = vadd.f32 %v2352, %v2353
    %s2355 = vtos %v2354
    %v2356 = vstv %s2355
    %2357 = vst [vmem:[#allocation8] sm:$0xff] %v2356
    // Predicated region
    $region42: #{tpu_custom_call.1} parent=1 // pred_check
      _
    $region43: #{tpu_custom_call.1} parent=1 // pred_check_branch
      %2359 = sbr.rel (0) target = $region45
    $region44: #{tpu_custom_call.1} parent=1 // pred_region
      %s2361 = ssub.s32 128, 128
      %2362 = vsyncadd [#allocation3], %s2361
      %s2364 = sshll.u32 [#allocation8], 4
      %s2365 = int_to_ptr.vmem [resolvable:$true] %s2364
      %2367 = dma.vmem_to_hbm [thread:$0]  %s2365, 128, %s7, [#allocation3]
    $region45: #{tpu_custom_call.1} parent=1 // pred_fallthru
      _
    // Predicated region
    $region46: #{tpu_custom_call.1} parent=1 // pred_check
      _
    $region47: #{tpu_custom_call.1} parent=1 // pred_check_branch
      %2369 = sbr.rel (0) target = $region49
    $region48: #{tpu_custom_call.1} parent=1 // pred_region
      %2370 = dma.done [#allocation3], 128
    $region49: #{tpu_custom_call.1} parent=1 // pred_fallthru
      _
    %2371 = vsyncpa [#allocation3], 1
    %2372 = vsyncpa [#allocation4], 1
    %2373 = vsyncpa [#allocation6], 1

</llo_original>
